<compile_context>
chip_gen: v7x
topology: tpu7x:2x2x1
jax: 0.10.0
libtpu: 0.0.40
codegen_flags: <defaults>
</compile_context>

<pallas_src>
import numpy as np
import jax
import jax.numpy as jnp
from jax.experimental import pallas as pl
from jax.experimental.pallas import tpu as pltpu

# ---- Config (mirrors the PyTorch Config class) ----
NUM_LAYERS = 2
NUM_HEADS = 4
SEQ_LEN = 5              # cfg.max_len
HIDDEN = 128             # cfg.hidden_dim
HEAD_DIM = HIDDEN // NUM_HEADS
MOD = 97
VOCAB = MOD + 2          # 99
VOCAB_PAD = 128          # lane-dense classifier width (sliced to VOCAB outside)
BATCH = 2
LN_EPS = 1e-5

LAYER_KEYS = ('ln1_w', 'ln1_b', 'in_w_t', 'in_b', 'out_w_t', 'out_b',
              'ln2_w', 'ln2_b', 'w1_t', 'b1', 'w2_t', 'b2')
N_LAYER_TENSORS = len(LAYER_KEYS)


# ----------------------------------------------------------------------------
# Math shared by the Pallas kernel body and the pure-JAX reference.
# ----------------------------------------------------------------------------
def _layernorm(x, w, b):
    mu = jnp.mean(x, axis=-1, keepdims=True)
    var = jnp.mean(jnp.square(x - mu), axis=-1, keepdims=True)
    return (x - mu) * jax.lax.rsqrt(var + LN_EPS) * w + b


def _gelu_tanh(x):
    # tanh-approx GELU: one EUP transcendental instead of a long erf polynomial.
    # TODO(synk): nn.GELU() default is the exact erf GELU; tanh approx differs by ~1e-3.
    return 0.5 * x * (1.0 + jnp.tanh(0.7978845608028654 * (x + 0.044715 * x * x * x)))


def _causal_mask(seq_len):
    row = jax.lax.broadcasted_iota(jnp.int32, (seq_len, seq_len), 0)
    col = jax.lax.broadcasted_iota(jnp.int32, (seq_len, seq_len), 1)
    return col > row          # True => masked, matches torch.triu(..., diagonal=1)


def _block_math(x, causal, ln1_w, ln1_b, in_w, in_b, out_w, out_b,
                ln2_w, ln2_b, w1, b1, w2, b2, recip):
    """One decoder block for a single batch element.  x: (S, H) float32."""
    bf16 = jnp.bfloat16
    # --- LN1 + causal multi-head self-attention ---
    xn = _layernorm(x, ln1_w, ln1_b)
    qkv = jnp.dot(xn.astype(bf16), in_w,
                  preferred_element_type=jnp.float32) + in_b            # (S, 3H) f32
    q, k, v = qkv[:, :HIDDEN], qkv[:, HIDDEN:2 * HIDDEN], qkv[:, 2 * HIDDEN:]

    def heads(t):             # (S, H) -> (NUM_HEADS, S, HEAD_DIM) bf16
        parts = [t[:, h * HEAD_DIM:(h + 1) * HEAD_DIM] for h in range(NUM_HEADS)]
        return jnp.stack(parts, axis=0).astype(bf16)

    qh, kh, vh = heads(q), heads(k), heads(v)
    scale = 1.0 / np.sqrt(HEAD_DIM)
    s = jnp.einsum('hqd,hkd->hqk', qh, kh,
                   preferred_element_type=jnp.float32) * scale          # (NH,S,S) f32
    s = jnp.where(causal[None, :, :], -1e30, s)
    s = s - jnp.max(s, axis=-1, keepdims=True)
    p = jnp.exp(s)
    p = p * recip(jnp.sum(p, axis=-1, keepdims=True))
    o = jnp.einsum('hqk,hkd->hqd', p.astype(bf16), vh,
                   preferred_element_type=jnp.float32)                  # (NH,S,HD) f32
    attn = jnp.concatenate([o[h] for h in range(NUM_HEADS)], axis=-1)   # (S, H)
    attn = jnp.dot(attn.astype(bf16), out_w,
                   preferred_element_type=jnp.float32) + out_b
    res1 = x + attn
    # --- LN2 + FFN ---
    yn = _layernorm(res1, ln2_w, ln2_b)
    h1 = _gelu_tanh(jnp.dot(yn.astype(bf16), w1,
                            preferred_element_type=jnp.float32) + b1)
    ffn = jnp.dot(h1.astype(bf16), w2,
                  preferred_element_type=jnp.float32) + b2
    return res1 + ffn


def _head_math(x, ln_w, ln_b, fc_w, fc_b):
    xn = _layernorm(x, ln_w, ln_b)
    return jnp.dot(xn.astype(jnp.bfloat16), fc_w,
                   preferred_element_type=jnp.float32) + fc_b           # (S, VOCAB_PAD)


def _forward_tokens(x, layer_ws, head_ws, recip):
    causal = _causal_mask(SEQ_LEN)       # computed once, shared by both layers
    for lw in layer_ws:
        x = _block_math(x, causal, *lw, recip=recip)
    return _head_math(x, *head_ws)


# ----------------------------------------------------------------------------
# Fused Pallas kernel: embedding + 2 blocks + head, one batch element per step.
# ----------------------------------------------------------------------------
def fused_transformer_kernel(ids_ref, *refs):
    tok_ref, pos_ref = refs[0], refs[1]
    layer_refs = refs[2:2 + N_LAYER_TENSORS * NUM_LAYERS]
    head_refs = refs[2 + N_LAYER_TENSORS * NUM_LAYERS:-1]
    o_ref = refs[-1]

    b = pl.program_id(0)
    # Token + position embedding gather from the VMEM-resident tables.
    # TODO(synk): nn.Dropout(0.1) (embedding + attention dropout) is train-only;
    # this implements the deterministic eval forward (dropout == identity).
    rows = [tok_ref[pl.ds(ids_ref[b, s], 1), :] for s in range(SEQ_LEN)]
    x = jnp.concatenate(rows, axis=0) + pos_ref[...]                    # (S, H) f32

    layer_ws = [tuple(r[...] for r in
                      layer_refs[l * N_LAYER_TENSORS:(l + 1) * N_LAYER_TENSORS])
                for l in range(NUM_LAYERS)]
    head_ws = tuple(r[...] for r in head_refs)
    o_ref[...] = _forward_tokens(
        x, layer_ws, head_ws, recip=lambda t: pl.reciprocal(t, approx=True))


def _resident_spec(shape):
    # Full-array block, constant index map -> weight stays VMEM-resident.
    zero = (0,) * len(shape)
    return pl.BlockSpec(shape, lambda b, ids, _z=zero: _z)


def _build_fused_call(weights):
    grid_spec = pltpu.PrefetchScalarGridSpec(
        num_scalar_prefetch=1,                     # token ids -> SMEM
        grid=(BATCH,),
        in_specs=[_resident_spec(w.shape) for w in weights],
        out_specs=pl.BlockSpec((None, SEQ_LEN, VOCAB_PAD),
                               lambda b, ids: (b, 0, 0)),
    )
    return pl.pallas_call(
        fused_transformer_kernel,
        out_shape=jax.ShapeDtypeStruct((BATCH, SEQ_LEN, VOCAB_PAD), jnp.float32),
        grid_spec=grid_spec,
        compiler_params=pltpu.CompilerParams(
            dimension_semantics=("parallel",),     # both TCs on v7x; loop elsewhere
            vmem_limit_bytes=16 * 1024 * 1024),    # model is ~1 MiB, plenty of slack
    )


# ----------------------------------------------------------------------------
# Parameters (deterministic, synthetic) and the full forward pass.
# ----------------------------------------------------------------------------
def init_params(key):
    ks = iter(jax.random.split(key, 64))

    def nrm(shape, scale=0.05, dtype=jnp.float32):
        return (scale * jax.random.normal(next(ks), shape, jnp.float32)).astype(dtype)

    fc_w = nrm((HIDDEN, VOCAB))
    fc_b = nrm((1, VOCAB))
    params = {
        'token_emb': nrm((VOCAB, HIDDEN), 1.0),       # nn.Embedding ~ N(0, 1)
        'pos_emb': nrm((SEQ_LEN, HIDDEN), 1.0),
        'lnf_w': jnp.ones((1, HIDDEN), jnp.float32),
        'lnf_b': jnp.zeros((1, HIDDEN), jnp.float32),
        # classifier padded to 128 output lanes (bf16 weights, f32 bias)
        'fc_w_pad': jnp.zeros((HIDDEN, VOCAB_PAD), jnp.bfloat16)
                       .at[:, :VOCAB].set(fc_w.astype(jnp.bfloat16)),
        'fc_b_pad': jnp.zeros((1, VOCAB_PAD), jnp.float32).at[:, :VOCAB].set(fc_b),
        'layers': [],
    }
    for _ in range(NUM_LAYERS):
        params['layers'].append({
            'ln1_w': jnp.ones((1, HIDDEN), jnp.float32),
            'ln1_b': jnp.zeros((1, HIDDEN), jnp.float32),
            'in_w_t': nrm((HIDDEN, 3 * HIDDEN), dtype=jnp.bfloat16),   # MHA in_proj^T
            'in_b': nrm((1, 3 * HIDDEN)),
            'out_w_t': nrm((HIDDEN, HIDDEN), dtype=jnp.bfloat16),      # MHA out_proj^T
            'out_b': nrm((1, HIDDEN)),
            'ln2_w': jnp.ones((1, HIDDEN), jnp.float32),
            'ln2_b': jnp.zeros((1, HIDDEN), jnp.float32),
            'w1_t': nrm((HIDDEN, 4 * HIDDEN), dtype=jnp.bfloat16),     # FFN linear 1^T
            'b1': nrm((1, 4 * HIDDEN)),
            'w2_t': nrm((4 * HIDDEN, HIDDEN), dtype=jnp.bfloat16),     # FFN linear 2^T
            'b2': nrm((1, HIDDEN)),
        })
    return params


def _flat_weights(params):
    ws = [params['token_emb'], params['pos_emb']]
    for lp in params['layers']:
        ws += [lp[k] for k in LAYER_KEYS]
    ws += [params['lnf_w'], params['lnf_b'], params['fc_w_pad'], params['fc_b_pad']]
    return ws


@jax.jit
def transformer_forward(params, x_ids):
    ws = _flat_weights(params)
    padded = _build_fused_call(ws)(x_ids.astype(jnp.int32), *ws)   # (B, S, 128)
    return jnp.transpose(padded[:, :, :VOCAB], (1, 0, 2))          # (S, B, VOCAB)


@jax.jit
def reference_forward(params, x_ids):
    layer_ws = [tuple(lp[k] for k in LAYER_KEYS) for lp in params['layers']]
    head_ws = (params['lnf_w'], params['lnf_b'],
               params['fc_w_pad'], params['fc_b_pad'])
    outs = []
    for b in range(BATCH):
        x = jnp.take(params['token_emb'], x_ids[b], axis=0) + params['pos_emb']
        outs.append(_forward_tokens(x, layer_ws, head_ws, recip=lambda t: 1.0 / t))
    padded = jnp.stack(outs, axis=0)
    return jnp.transpose(padded[:, :, :VOCAB], (1, 0, 2))


if __name__ == "__main__":
    key = jax.random.PRNGKey(0)
    pkey, xkey = jax.random.split(key)
    params = init_params(pkey)
    x_ids = jax.random.randint(xkey, (BATCH, SEQ_LEN), 0, VOCAB, dtype=jnp.int32)

    out = jax.block_until_ready(transformer_forward(params, x_ids))
    assert out.shape == (SEQ_LEN, BATCH, VOCAB), out.shape

    ref = jax.block_until_ready(reference_forward(params, x_ids))
    np.testing.assert_allclose(np.asarray(out), np.asarray(ref),
                               rtol=2e-2, atol=2e-2)
    print("KERNEL_OK")
</pallas_src>

<mosaic_0001>
module attributes {stable_mosaic.version = 11 : i64} {
  func.func @fused_transformer_kernel(%arg0: i32, %arg1: memref<2x5xi32, #tpu.memory_space<smem>>, %arg2: memref<99x128xf32, #tpu.memory_space<vmem>>, %arg3: memref<5x128xf32, #tpu.memory_space<vmem>>, %arg4: memref<1x128xf32, #tpu.memory_space<vmem>>, %arg5: memref<1x128xf32, #tpu.memory_space<vmem>>, %arg6: memref<128x384xbf16, #tpu.memory_space<vmem>>, %arg7: memref<1x384xf32, #tpu.memory_space<vmem>>, %arg8: memref<128x128xbf16, #tpu.memory_space<vmem>>, %arg9: memref<1x128xf32, #tpu.memory_space<vmem>>, %arg10: memref<1x128xf32, #tpu.memory_space<vmem>>, %arg11: memref<1x128xf32, #tpu.memory_space<vmem>>, %arg12: memref<128x512xbf16, #tpu.memory_space<vmem>>, %arg13: memref<1x512xf32, #tpu.memory_space<vmem>>, %arg14: memref<512x128xbf16, #tpu.memory_space<vmem>>, %arg15: memref<1x128xf32, #tpu.memory_space<vmem>>, %arg16: memref<1x128xf32, #tpu.memory_space<vmem>>, %arg17: memref<1x128xf32, #tpu.memory_space<vmem>>, %arg18: memref<128x384xbf16, #tpu.memory_space<vmem>>, %arg19: memref<1x384xf32, #tpu.memory_space<vmem>>, %arg20: memref<128x128xbf16, #tpu.memory_space<vmem>>, %arg21: memref<1x128xf32, #tpu.memory_space<vmem>>, %arg22: memref<1x128xf32, #tpu.memory_space<vmem>>, %arg23: memref<1x128xf32, #tpu.memory_space<vmem>>, %arg24: memref<128x512xbf16, #tpu.memory_space<vmem>>, %arg25: memref<1x512xf32, #tpu.memory_space<vmem>>, %arg26: memref<512x128xbf16, #tpu.memory_space<vmem>>, %arg27: memref<1x128xf32, #tpu.memory_space<vmem>>, %arg28: memref<1x128xf32, #tpu.memory_space<vmem>>, %arg29: memref<1x128xf32, #tpu.memory_space<vmem>>, %arg30: memref<128x128xbf16, #tpu.memory_space<vmem>>, %arg31: memref<1x128xf32, #tpu.memory_space<vmem>>, %arg32: memref<1x5x128xf32, #tpu.memory_space<vmem>>) attributes {dimension_semantics = [#tpu.dimension_semantics<parallel>], iteration_bounds = array<i64: 2>, scalar_prefetch = 1 : i64, scratch_operands = 0 : i64, tpu.core_type = #tpu.core_type<tc>, window_params = [{pipeline_mode = #tpu.pipeline_mode<synchronous>, transform_indices = @transform_0, window_bounds = array<i64: 99, 128>}, {pipeline_mode = #tpu.pipeline_mode<synchronous>, transform_indices = @transform_1, window_bounds = array<i64: 5, 128>}, {pipeline_mode = #tpu.pipeline_mode<synchronous>, transform_indices = @transform_2, window_bounds = array<i64: 1, 128>}, {pipeline_mode = #tpu.pipeline_mode<synchronous>, transform_indices = @transform_3, window_bounds = array<i64: 1, 128>}, {pipeline_mode = #tpu.pipeline_mode<synchronous>, transform_indices = @transform_4, window_bounds = array<i64: 128, 384>}, {pipeline_mode = #tpu.pipeline_mode<synchronous>, transform_indices = @transform_5, window_bounds = array<i64: 1, 384>}, {pipeline_mode = #tpu.pipeline_mode<synchronous>, transform_indices = @transform_6, window_bounds = array<i64: 128, 128>}, {pipeline_mode = #tpu.pipeline_mode<synchronous>, transform_indices = @transform_7, window_bounds = array<i64: 1, 128>}, {pipeline_mode = #tpu.pipeline_mode<synchronous>, transform_indices = @transform_8, window_bounds = array<i64: 1, 128>}, {pipeline_mode = #tpu.pipeline_mode<synchronous>, transform_indices = @transform_9, window_bounds = array<i64: 1, 128>}, {pipeline_mode = #tpu.pipeline_mode<synchronous>, transform_indices = @transform_10, window_bounds = array<i64: 128, 512>}, {pipeline_mode = #tpu.pipeline_mode<synchronous>, transform_indices = @transform_11, window_bounds = array<i64: 1, 512>}, {pipeline_mode = #tpu.pipeline_mode<synchronous>, transform_indices = @transform_12, window_bounds = array<i64: 512, 128>}, {pipeline_mode = #tpu.pipeline_mode<synchronous>, transform_indices = @transform_13, window_bounds = array<i64: 1, 128>}, {pipeline_mode = #tpu.pipeline_mode<synchronous>, transform_indices = @transform_14, window_bounds = array<i64: 1, 128>}, {pipeline_mode = #tpu.pipeline_mode<synchronous>, transform_indices = @transform_15, window_bounds = array<i64: 1, 128>}, {pipeline_mode = #tpu.pipeline_mode<synchronous>, transform_indices = @transform_16, window_bounds = array<i64: 128, 384>}, {pipeline_mode = #tpu.pipeline_mode<synchronous>, transform_indices = @transform_17, window_bounds = array<i64: 1, 384>}, {pipeline_mode = #tpu.pipeline_mode<synchronous>, transform_indices = @transform_18, window_bounds = array<i64: 128, 128>}, {pipeline_mode = #tpu.pipeline_mode<synchronous>, transform_indices = @transform_19, window_bounds = array<i64: 1, 128>}, {pipeline_mode = #tpu.pipeline_mode<synchronous>, transform_indices = @transform_20, window_bounds = array<i64: 1, 128>}, {pipeline_mode = #tpu.pipeline_mode<synchronous>, transform_indices = @transform_21, window_bounds = array<i64: 1, 128>}, {pipeline_mode = #tpu.pipeline_mode<synchronous>, transform_indices = @transform_22, window_bounds = array<i64: 128, 512>}, {pipeline_mode = #tpu.pipeline_mode<synchronous>, transform_indices = @transform_23, window_bounds = array<i64: 1, 512>}, {pipeline_mode = #tpu.pipeline_mode<synchronous>, transform_indices = @transform_24, window_bounds = array<i64: 512, 128>}, {pipeline_mode = #tpu.pipeline_mode<synchronous>, transform_indices = @transform_25, window_bounds = array<i64: 1, 128>}, {pipeline_mode = #tpu.pipeline_mode<synchronous>, transform_indices = @transform_26, window_bounds = array<i64: 1, 128>}, {pipeline_mode = #tpu.pipeline_mode<synchronous>, transform_indices = @transform_27, window_bounds = array<i64: 1, 128>}, {pipeline_mode = #tpu.pipeline_mode<synchronous>, transform_indices = @transform_28, window_bounds = array<i64: 128, 128>}, {pipeline_mode = #tpu.pipeline_mode<synchronous>, transform_indices = @transform_29, window_bounds = array<i64: 1, 128>}, {transform_indices = @transform_30, window_bounds = array<i64: 1, 5, 128>}]} {
    %0 = arith.index_cast %arg0 : i32 to index
    %c0 = arith.constant 0 : index
    %1 = memref.load %arg1[%0, %c0] : memref<2x5xi32, #tpu.memory_space<smem>>
    %2 = arith.index_cast %1 : i32 to index
    %c0_0 = arith.constant 0 : index
    %3 = vector.load %arg2[%2, %c0_0] : memref<99x128xf32, #tpu.memory_space<vmem>>, vector<1x128xf32>
    %4 = arith.index_cast %arg0 : i32 to index
    %c1 = arith.constant 1 : index
    %5 = memref.load %arg1[%4, %c1] : memref<2x5xi32, #tpu.memory_space<smem>>
    %6 = arith.index_cast %5 : i32 to index
    %c0_1 = arith.constant 0 : index
    %7 = vector.load %arg2[%6, %c0_1] : memref<99x128xf32, #tpu.memory_space<vmem>>, vector<1x128xf32>
    %8 = arith.index_cast %arg0 : i32 to index
    %c2 = arith.constant 2 : index
    %9 = memref.load %arg1[%8, %c2] : memref<2x5xi32, #tpu.memory_space<smem>>
    %10 = arith.index_cast %9 : i32 to index
    %c0_2 = arith.constant 0 : index
    %11 = vector.load %arg2[%10, %c0_2] : memref<99x128xf32, #tpu.memory_space<vmem>>, vector<1x128xf32>
    %12 = arith.index_cast %arg0 : i32 to index
    %c3 = arith.constant 3 : index
    %13 = memref.load %arg1[%12, %c3] : memref<2x5xi32, #tpu.memory_space<smem>>
    %14 = arith.index_cast %13 : i32 to index
    %c0_3 = arith.constant 0 : index
    %15 = vector.load %arg2[%14, %c0_3] : memref<99x128xf32, #tpu.memory_space<vmem>>, vector<1x128xf32>
    %16 = arith.index_cast %arg0 : i32 to index
    %c4 = arith.constant 4 : index
    %17 = memref.load %arg1[%16, %c4] : memref<2x5xi32, #tpu.memory_space<smem>>
    %18 = arith.index_cast %17 : i32 to index
    %c0_4 = arith.constant 0 : index
    %19 = vector.load %arg2[%18, %c0_4] : memref<99x128xf32, #tpu.memory_space<vmem>>, vector<1x128xf32>
    %20 = tpu.concatenate %3, %7, %11, %15, %19 in 0 : vector<1x128xf32>, vector<1x128xf32>, vector<1x128xf32>, vector<1x128xf32>, vector<1x128xf32> -> vector<5x128xf32>
    %c0_5 = arith.constant 0 : index
    %c0_6 = arith.constant 0 : index
    %21 = vector.load %arg3[%c0_5, %c0_6] : memref<5x128xf32, #tpu.memory_space<vmem>>, vector<5x128xf32>
    %22 = arith.addf %20, %21 : vector<5x128xf32>
    %c0_7 = arith.constant 0 : index
    %c0_8 = arith.constant 0 : index
    %23 = vector.load %arg4[%c0_7, %c0_8] : memref<1x128xf32, #tpu.memory_space<vmem>>, vector<1x128xf32>
    %c0_9 = arith.constant 0 : index
    %c0_10 = arith.constant 0 : index
    %24 = vector.load %arg5[%c0_9, %c0_10] : memref<1x128xf32, #tpu.memory_space<vmem>>, vector<1x128xf32>
    %c0_11 = arith.constant 0 : index
    %c0_12 = arith.constant 0 : index
    %25 = vector.load %arg6[%c0_11, %c0_12] : memref<128x384xbf16, #tpu.memory_space<vmem>>, vector<128x384xbf16>
    %c0_13 = arith.constant 0 : index
    %c0_14 = arith.constant 0 : index
    %26 = vector.load %arg7[%c0_13, %c0_14] : memref<1x384xf32, #tpu.memory_space<vmem>>, vector<1x384xf32>
    %c0_15 = arith.constant 0 : index
    %c0_16 = arith.constant 0 : index
    %27 = vector.load %arg8[%c0_15, %c0_16] : memref<128x128xbf16, #tpu.memory_space<vmem>>, vector<128x128xbf16>
    %c0_17 = arith.constant 0 : index
    %c0_18 = arith.constant 0 : index
    %28 = vector.load %arg9[%c0_17, %c0_18] : memref<1x128xf32, #tpu.memory_space<vmem>>, vector<1x128xf32>
    %c0_19 = arith.constant 0 : index
    %c0_20 = arith.constant 0 : index
    %29 = vector.load %arg10[%c0_19, %c0_20] : memref<1x128xf32, #tpu.memory_space<vmem>>, vector<1x128xf32>
    %c0_21 = arith.constant 0 : index
    %c0_22 = arith.constant 0 : index
    %30 = vector.load %arg11[%c0_21, %c0_22] : memref<1x128xf32, #tpu.memory_space<vmem>>, vector<1x128xf32>
    %c0_23 = arith.constant 0 : index
    %c0_24 = arith.constant 0 : index
    %31 = vector.load %arg12[%c0_23, %c0_24] : memref<128x512xbf16, #tpu.memory_space<vmem>>, vector<128x512xbf16>
    %c0_25 = arith.constant 0 : index
    %c0_26 = arith.constant 0 : index
    %32 = vector.load %arg13[%c0_25, %c0_26] : memref<1x512xf32, #tpu.memory_space<vmem>>, vector<1x512xf32>
    %c0_27 = arith.constant 0 : index
    %c0_28 = arith.constant 0 : index
    %33 = vector.load %arg14[%c0_27, %c0_28] : memref<512x128xbf16, #tpu.memory_space<vmem>>, vector<512x128xbf16>
    %c0_29 = arith.constant 0 : index
    %c0_30 = arith.constant 0 : index
    %34 = vector.load %arg15[%c0_29, %c0_30] : memref<1x128xf32, #tpu.memory_space<vmem>>, vector<1x128xf32>
    %c0_31 = arith.constant 0 : index
    %c0_32 = arith.constant 0 : index
    %35 = vector.load %arg16[%c0_31, %c0_32] : memref<1x128xf32, #tpu.memory_space<vmem>>, vector<1x128xf32>
    %c0_33 = arith.constant 0 : index
    %c0_34 = arith.constant 0 : index
    %36 = vector.load %arg17[%c0_33, %c0_34] : memref<1x128xf32, #tpu.memory_space<vmem>>, vector<1x128xf32>
    %c0_35 = arith.constant 0 : index
    %c0_36 = arith.constant 0 : index
    %37 = vector.load %arg18[%c0_35, %c0_36] : memref<128x384xbf16, #tpu.memory_space<vmem>>, vector<128x384xbf16>
    %c0_37 = arith.constant 0 : index
    %c0_38 = arith.constant 0 : index
    %38 = vector.load %arg19[%c0_37, %c0_38] : memref<1x384xf32, #tpu.memory_space<vmem>>, vector<1x384xf32>
    %c0_39 = arith.constant 0 : index
    %c0_40 = arith.constant 0 : index
    %39 = vector.load %arg20[%c0_39, %c0_40] : memref<128x128xbf16, #tpu.memory_space<vmem>>, vector<128x128xbf16>
    %c0_41 = arith.constant 0 : index
    %c0_42 = arith.constant 0 : index
    %40 = vector.load %arg21[%c0_41, %c0_42] : memref<1x128xf32, #tpu.memory_space<vmem>>, vector<1x128xf32>
    %c0_43 = arith.constant 0 : index
    %c0_44 = arith.constant 0 : index
    %41 = vector.load %arg22[%c0_43, %c0_44] : memref<1x128xf32, #tpu.memory_space<vmem>>, vector<1x128xf32>
    %c0_45 = arith.constant 0 : index
    %c0_46 = arith.constant 0 : index
    %42 = vector.load %arg23[%c0_45, %c0_46] : memref<1x128xf32, #tpu.memory_space<vmem>>, vector<1x128xf32>
    %c0_47 = arith.constant 0 : index
    %c0_48 = arith.constant 0 : index
    %43 = vector.load %arg24[%c0_47, %c0_48] : memref<128x512xbf16, #tpu.memory_space<vmem>>, vector<128x512xbf16>
    %c0_49 = arith.constant 0 : index
    %c0_50 = arith.constant 0 : index
    %44 = vector.load %arg25[%c0_49, %c0_50] : memref<1x512xf32, #tpu.memory_space<vmem>>, vector<1x512xf32>
    %c0_51 = arith.constant 0 : index
    %c0_52 = arith.constant 0 : index
    %45 = vector.load %arg26[%c0_51, %c0_52] : memref<512x128xbf16, #tpu.memory_space<vmem>>, vector<512x128xbf16>
    %c0_53 = arith.constant 0 : index
    %c0_54 = arith.constant 0 : index
    %46 = vector.load %arg27[%c0_53, %c0_54] : memref<1x128xf32, #tpu.memory_space<vmem>>, vector<1x128xf32>
    %c0_55 = arith.constant 0 : index
    %c0_56 = arith.constant 0 : index
    %47 = vector.load %arg28[%c0_55, %c0_56] : memref<1x128xf32, #tpu.memory_space<vmem>>, vector<1x128xf32>
    %c0_57 = arith.constant 0 : index
    %c0_58 = arith.constant 0 : index
    %48 = vector.load %arg29[%c0_57, %c0_58] : memref<1x128xf32, #tpu.memory_space<vmem>>, vector<1x128xf32>
    %c0_59 = arith.constant 0 : index
    %c0_60 = arith.constant 0 : index
    %49 = vector.load %arg30[%c0_59, %c0_60] : memref<128x128xbf16, #tpu.memory_space<vmem>>, vector<128x128xbf16>
    %c0_61 = arith.constant 0 : index
    %c0_62 = arith.constant 0 : index
    %50 = vector.load %arg31[%c0_61, %c0_62] : memref<1x128xf32, #tpu.memory_space<vmem>>, vector<1x128xf32>
    %51 = tpu.iota {dimensions = array<i32: 0>} : vector<5x5xi32>
    %52 = tpu.iota {dimensions = array<i32: 1>} : vector<5x5xi32>
    %53 = arith.cmpi sgt, %52, %51 : vector<5x5xi32>
    %cst = arith.constant dense<0.000000e+00> : vector<5xf32>
    %54 = vector.multi_reduction <add>, %22, %cst [1] : vector<5x128xf32> to vector<5xf32>
    %55 = vector.shape_cast %54 : vector<5xf32> to vector<5x1xf32>
    %cst_63 = arith.constant 1.280000e+02 : f32
    %56 = vector.broadcast %cst_63 : f32 to vector<5x1xf32>
    %57 = arith.divf %55, %56 : vector<5x1xf32>
    %58 = vector.broadcast %57 : vector<5x1xf32> to vector<5x128xf32>
    %59 = arith.subf %22, %58 : vector<5x128xf32>
    %60 = arith.mulf %59, %59 : vector<5x128xf32>
    %cst_64 = arith.constant dense<0.000000e+00> : vector<5xf32>
    %61 = vector.multi_reduction <add>, %60, %cst_64 [1] : vector<5x128xf32> to vector<5xf32>
    %62 = vector.shape_cast %61 : vector<5xf32> to vector<5x1xf32>
    %cst_65 = arith.constant 1.280000e+02 : f32
    %63 = vector.broadcast %cst_65 : f32 to vector<5x1xf32>
    %64 = arith.divf %62, %63 : vector<5x1xf32>
    %65 = vector.broadcast %57 : vector<5x1xf32> to vector<5x128xf32>
    %66 = arith.subf %22, %65 : vector<5x128xf32>
    %cst_66 = arith.constant 9.99999974E-6 : f32
    %67 = vector.broadcast %cst_66 : f32 to vector<5x1xf32>
    %68 = arith.addf %64, %67 : vector<5x1xf32>
    %69 = math.rsqrt %68 : vector<5x1xf32>
    %70 = vector.broadcast %69 : vector<5x1xf32> to vector<5x128xf32>
    %71 = arith.mulf %66, %70 : vector<5x128xf32>
    %72 = vector.broadcast %23 : vector<1x128xf32> to vector<5x128xf32>
    %73 = arith.mulf %71, %72 : vector<5x128xf32>
    %74 = vector.broadcast %24 : vector<1x128xf32> to vector<5x128xf32>
    %75 = arith.addf %73, %74 : vector<5x128xf32>
    %76 = arith.truncf %75 : vector<5x128xf32> to vector<5x128xbf16>
    %cst_67 = arith.constant dense<0.000000e+00> : vector<5x384xf32>
    %77 = tpu.matmul %76, %25, %cst_67 {dimension_numbers = #tpu.dot_dimension_numbers<[1], [0], [0], [1], [0, 0, 1, 1], [], []>} : vector<5x128xbf16>, vector<128x384xbf16>, vector<5x384xf32> -> vector<5x384xf32>
    %78 = vector.broadcast %26 : vector<1x384xf32> to vector<5x384xf32>
    %79 = arith.addf %77, %78 : vector<5x384xf32>
    %80 = vector.extract_strided_slice %79 {offsets = [0, 0], sizes = [5, 128], strides = [1, 1]} : vector<5x384xf32> to vector<5x128xf32>
    %81 = vector.extract_strided_slice %79 {offsets = [0, 128], sizes = [5, 128], strides = [1, 1]} : vector<5x384xf32> to vector<5x128xf32>
    %82 = vector.extract_strided_slice %79 {offsets = [0, 256], sizes = [5, 128], strides = [1, 1]} : vector<5x384xf32> to vector<5x128xf32>
    %83 = vector.extract_strided_slice %80 {offsets = [0, 0], sizes = [5, 32], strides = [1, 1]} : vector<5x128xf32> to vector<5x32xf32>
    %84 = vector.extract_strided_slice %80 {offsets = [0, 32], sizes = [5, 32], strides = [1, 1]} : vector<5x128xf32> to vector<5x32xf32>
    %85 = vector.extract_strided_slice %80 {offsets = [0, 64], sizes = [5, 32], strides = [1, 1]} : vector<5x128xf32> to vector<5x32xf32>
    %86 = vector.extract_strided_slice %80 {offsets = [0, 96], sizes = [5, 32], strides = [1, 1]} : vector<5x128xf32> to vector<5x32xf32>
    %87 = vector.shape_cast %83 : vector<5x32xf32> to vector<1x5x32xf32>
    %88 = vector.shape_cast %84 : vector<5x32xf32> to vector<1x5x32xf32>
    %89 = vector.shape_cast %85 : vector<5x32xf32> to vector<1x5x32xf32>
    %90 = vector.shape_cast %86 : vector<5x32xf32> to vector<1x5x32xf32>
    %91 = tpu.concatenate %87, %88, %89, %90 in 0 : vector<1x5x32xf32>, vector<1x5x32xf32>, vector<1x5x32xf32>, vector<1x5x32xf32> -> vector<4x5x32xf32>
    %92 = arith.truncf %91 : vector<4x5x32xf32> to vector<4x5x32xbf16>
    %93 = vector.extract_strided_slice %81 {offsets = [0, 0], sizes = [5, 32], strides = [1, 1]} : vector<5x128xf32> to vector<5x32xf32>
    %94 = vector.extract_strided_slice %81 {offsets = [0, 32], sizes = [5, 32], strides = [1, 1]} : vector<5x128xf32> to vector<5x32xf32>
    %95 = vector.extract_strided_slice %81 {offsets = [0, 64], sizes = [5, 32], strides = [1, 1]} : vector<5x128xf32> to vector<5x32xf32>
    %96 = vector.extract_strided_slice %81 {offsets = [0, 96], sizes = [5, 32], strides = [1, 1]} : vector<5x128xf32> to vector<5x32xf32>
    %97 = vector.shape_cast %93 : vector<5x32xf32> to vector<1x5x32xf32>
    %98 = vector.shape_cast %94 : vector<5x32xf32> to vector<1x5x32xf32>
    %99 = vector.shape_cast %95 : vector<5x32xf32> to vector<1x5x32xf32>
    %100 = vector.shape_cast %96 : vector<5x32xf32> to vector<1x5x32xf32>
    %101 = tpu.concatenate %97, %98, %99, %100 in 0 : vector<1x5x32xf32>, vector<1x5x32xf32>, vector<1x5x32xf32>, vector<1x5x32xf32> -> vector<4x5x32xf32>
    %102 = arith.truncf %101 : vector<4x5x32xf32> to vector<4x5x32xbf16>
    %103 = vector.extract_strided_slice %82 {offsets = [0, 0], sizes = [5, 32], strides = [1, 1]} : vector<5x128xf32> to vector<5x32xf32>
    %104 = vector.extract_strided_slice %82 {offsets = [0, 32], sizes = [5, 32], strides = [1, 1]} : vector<5x128xf32> to vector<5x32xf32>
    %105 = vector.extract_strided_slice %82 {offsets = [0, 64], sizes = [5, 32], strides = [1, 1]} : vector<5x128xf32> to vector<5x32xf32>
    %106 = vector.extract_strided_slice %82 {offsets = [0, 96], sizes = [5, 32], strides = [1, 1]} : vector<5x128xf32> to vector<5x32xf32>
    %107 = vector.shape_cast %103 : vector<5x32xf32> to vector<1x5x32xf32>
    %108 = vector.shape_cast %104 : vector<5x32xf32> to vector<1x5x32xf32>
    %109 = vector.shape_cast %105 : vector<5x32xf32> to vector<1x5x32xf32>
    %110 = vector.shape_cast %106 : vector<5x32xf32> to vector<1x5x32xf32>
    %111 = tpu.concatenate %107, %108, %109, %110 in 0 : vector<1x5x32xf32>, vector<1x5x32xf32>, vector<1x5x32xf32>, vector<1x5x32xf32> -> vector<4x5x32xf32>
    %112 = arith.truncf %111 : vector<4x5x32xf32> to vector<4x5x32xbf16>
    "tpu.trace_start"() <{level = 10 : i32, message = "hqd,hkd->hqk"}> : () -> ()
    %cst_68 = arith.constant dense<0.000000e+00> : vector<4x5x5xf32>
    %113 = tpu.matmul %92, %102, %cst_68 {dimension_numbers = #tpu.dot_dimension_numbers<[2], [2], [1], [1], [0, 0, 0, 1, 1, 1], [0], [0]>} : vector<4x5x32xbf16>, vector<4x5x32xbf16>, vector<4x5x5xf32> -> vector<4x5x5xf32>
    "tpu.trace_stop"() : () -> ()
    %cst_69 = arith.constant 0.176776692 : f32
    %114 = vector.broadcast %cst_69 : f32 to vector<4x5x5xf32>
    %115 = arith.mulf %113, %114 : vector<4x5x5xf32>
    %116 = vector.shape_cast %53 : vector<5x5xi1> to vector<1x5x5xi1>
    %cst_70 = arith.constant -1.000000e+30 : f32
    %117 = vector.shape_cast %116 : vector<1x5x5xi1> to vector<1x5x5xi1>
    %118 = vector.broadcast %117 : vector<1x5x5xi1> to vector<4x5x5xi1>
    %119 = vector.broadcast %cst_70 : f32 to vector<4x5x5xf32>
    %120 = arith.select %118, %119, %115 : vector<4x5x5xi1>, vector<4x5x5xf32>
    %cst_71 = arith.constant dense<0xFF800000> : vector<4x5xf32>
    %121 = vector.multi_reduction <maximumf>, %120, %cst_71 [2] : vector<4x5x5xf32> to vector<4x5xf32>
    %122 = vector.shape_cast %121 : vector<4x5xf32> to vector<4x5x1xf32>
    %123 = vector.broadcast %122 : vector<4x5x1xf32> to vector<4x5x5xf32>
    %124 = arith.subf %120, %123 : vector<4x5x5xf32>
    %125 = math.exp %124 : vector<4x5x5xf32>
    %cst_72 = arith.constant dense<0.000000e+00> : vector<4x5xf32>
    %126 = vector.multi_reduction <add>, %125, %cst_72 [2] : vector<4x5x5xf32> to vector<4x5xf32>
    %127 = vector.shape_cast %126 : vector<4x5xf32> to vector<4x5x1xf32>
    %128 = tpu.reciprocal %127 {approx = true} : vector<4x5x1xf32> -> vector<4x5x1xf32>
    %129 = vector.broadcast %128 : vector<4x5x1xf32> to vector<4x5x5xf32>
    %130 = arith.mulf %125, %129 : vector<4x5x5xf32>
    %131 = arith.truncf %130 : vector<4x5x5xf32> to vector<4x5x5xbf16>
    "tpu.trace_start"() <{level = 10 : i32, message = "hqk,hkd->hqd"}> : () -> ()
    %cst_73 = arith.constant dense<0.000000e+00> : vector<4x5x32xf32>
    %132 = tpu.matmul %131, %112, %cst_73 {dimension_numbers = #tpu.dot_dimension_numbers<[2], [1], [1], [2], [0, 0, 0, 1, 1, 2], [0], [0]>} : vector<4x5x5xbf16>, vector<4x5x32xbf16>, vector<4x5x32xf32> -> vector<4x5x32xf32>
    "tpu.trace_stop"() : () -> ()
    %133 = vector.extract_strided_slice %132 {offsets = [0, 0, 0], sizes = [1, 5, 32], strides = [1, 1, 1]} : vector<4x5x32xf32> to vector<1x5x32xf32>
    %134 = vector.shape_cast %133 : vector<1x5x32xf32> to vector<5x32xf32>
    %135 = vector.extract_strided_slice %132 {offsets = [1, 0, 0], sizes = [1, 5, 32], strides = [1, 1, 1]} : vector<4x5x32xf32> to vector<1x5x32xf32>
    %136 = vector.shape_cast %135 : vector<1x5x32xf32> to vector<5x32xf32>
    %137 = vector.extract_strided_slice %132 {offsets = [2, 0, 0], sizes = [1, 5, 32], strides = [1, 1, 1]} : vector<4x5x32xf32> to vector<1x5x32xf32>
    %138 = vector.shape_cast %137 : vector<1x5x32xf32> to vector<5x32xf32>
    %139 = vector.extract_strided_slice %132 {offsets = [3, 0, 0], sizes = [1, 5, 32], strides = [1, 1, 1]} : vector<4x5x32xf32> to vector<1x5x32xf32>
    %140 = vector.shape_cast %139 : vector<1x5x32xf32> to vector<5x32xf32>
    %141 = tpu.concatenate %134, %136, %138, %140 in 1 : vector<5x32xf32>, vector<5x32xf32>, vector<5x32xf32>, vector<5x32xf32> -> vector<5x128xf32>
    %142 = arith.truncf %141 : vector<5x128xf32> to vector<5x128xbf16>
    %cst_74 = arith.constant dense<0.000000e+00> : vector<5x128xf32>
    %143 = tpu.matmul %142, %27, %cst_74 {dimension_numbers = #tpu.dot_dimension_numbers<[1], [0], [0], [1], [0, 0, 1, 1], [], []>} : vector<5x128xbf16>, vector<128x128xbf16>, vector<5x128xf32> -> vector<5x128xf32>
    %144 = vector.broadcast %28 : vector<1x128xf32> to vector<5x128xf32>
    %145 = arith.addf %143, %144 : vector<5x128xf32>
    %146 = arith.addf %22, %145 : vector<5x128xf32>
    %cst_75 = arith.constant dense<0.000000e+00> : vector<5xf32>
    %147 = vector.multi_reduction <add>, %146, %cst_75 [1] : vector<5x128xf32> to vector<5xf32>
    %148 = vector.shape_cast %147 : vector<5xf32> to vector<5x1xf32>
    %cst_76 = arith.constant 1.280000e+02 : f32
    %149 = vector.broadcast %cst_76 : f32 to vector<5x1xf32>
    %150 = arith.divf %148, %149 : vector<5x1xf32>
    %151 = vector.broadcast %150 : vector<5x1xf32> to vector<5x128xf32>
    %152 = arith.subf %146, %151 : vector<5x128xf32>
    %153 = arith.mulf %152, %152 : vector<5x128xf32>
    %cst_77 = arith.constant dense<0.000000e+00> : vector<5xf32>
    %154 = vector.multi_reduction <add>, %153, %cst_77 [1] : vector<5x128xf32> to vector<5xf32>
    %155 = vector.shape_cast %154 : vector<5xf32> to vector<5x1xf32>
    %cst_78 = arith.constant 1.280000e+02 : f32
    %156 = vector.broadcast %cst_78 : f32 to vector<5x1xf32>
    %157 = arith.divf %155, %156 : vector<5x1xf32>
    %158 = vector.broadcast %150 : vector<5x1xf32> to vector<5x128xf32>
    %159 = arith.subf %146, %158 : vector<5x128xf32>
    %cst_79 = arith.constant 9.99999974E-6 : f32
    %160 = vector.broadcast %cst_79 : f32 to vector<5x1xf32>
    %161 = arith.addf %157, %160 : vector<5x1xf32>
    %162 = math.rsqrt %161 : vector<5x1xf32>
    %163 = vector.broadcast %162 : vector<5x1xf32> to vector<5x128xf32>
    %164 = arith.mulf %159, %163 : vector<5x128xf32>
    %165 = vector.broadcast %29 : vector<1x128xf32> to vector<5x128xf32>
    %166 = arith.mulf %164, %165 : vector<5x128xf32>
    %167 = vector.broadcast %30 : vector<1x128xf32> to vector<5x128xf32>
    %168 = arith.addf %166, %167 : vector<5x128xf32>
    %169 = arith.truncf %168 : vector<5x128xf32> to vector<5x128xbf16>
    %cst_80 = arith.constant dense<0.000000e+00> : vector<5x512xf32>
    %170 = tpu.matmul %169, %31, %cst_80 {dimension_numbers = #tpu.dot_dimension_numbers<[1], [0], [0], [1], [0, 0, 1, 1], [], []>} : vector<5x128xbf16>, vector<128x512xbf16>, vector<5x512xf32> -> vector<5x512xf32>
    %171 = vector.broadcast %32 : vector<1x512xf32> to vector<5x512xf32>
    %172 = arith.addf %170, %171 : vector<5x512xf32>
    %cst_81 = arith.constant 5.000000e-01 : f32
    %173 = vector.broadcast %cst_81 : f32 to vector<5x512xf32>
    %174 = arith.mulf %173, %172 : vector<5x512xf32>
    %cst_82 = arith.constant 4.471500e-02 : f32
    %175 = vector.broadcast %cst_82 : f32 to vector<5x512xf32>
    %176 = arith.mulf %175, %172 : vector<5x512xf32>
    %177 = arith.mulf %176, %172 : vector<5x512xf32>
    %178 = arith.mulf %177, %172 : vector<5x512xf32>
    %179 = arith.addf %172, %178 : vector<5x512xf32>
    %cst_83 = arith.constant 0.797884583 : f32
    %180 = vector.broadcast %cst_83 : f32 to vector<5x512xf32>
    %181 = arith.mulf %180, %179 : vector<5x512xf32>
    %182 = math.tanh %181 : vector<5x512xf32>
    %cst_84 = arith.constant 1.000000e+00 : f32
    %183 = vector.broadcast %cst_84 : f32 to vector<5x512xf32>
    %184 = arith.addf %183, %182 : vector<5x512xf32>
    %185 = arith.mulf %174, %184 : vector<5x512xf32>
    %186 = arith.truncf %185 : vector<5x512xf32> to vector<5x512xbf16>
    %cst_85 = arith.constant dense<0.000000e+00> : vector<5x128xf32>
    %187 = tpu.matmul %186, %33, %cst_85 {dimension_numbers = #tpu.dot_dimension_numbers<[1], [0], [0], [1], [0, 0, 1, 1], [], []>} : vector<5x512xbf16>, vector<512x128xbf16>, vector<5x128xf32> -> vector<5x128xf32>
    %188 = vector.broadcast %34 : vector<1x128xf32> to vector<5x128xf32>
    %189 = arith.addf %187, %188 : vector<5x128xf32>
    %190 = arith.addf %146, %189 : vector<5x128xf32>
    %cst_86 = arith.constant dense<0.000000e+00> : vector<5xf32>
    %191 = vector.multi_reduction <add>, %190, %cst_86 [1] : vector<5x128xf32> to vector<5xf32>
    %192 = vector.shape_cast %191 : vector<5xf32> to vector<5x1xf32>
    %cst_87 = arith.constant 1.280000e+02 : f32
    %193 = vector.broadcast %cst_87 : f32 to vector<5x1xf32>
    %194 = arith.divf %192, %193 : vector<5x1xf32>
    %195 = vector.broadcast %194 : vector<5x1xf32> to vector<5x128xf32>
    %196 = arith.subf %190, %195 : vector<5x128xf32>
    %197 = arith.mulf %196, %196 : vector<5x128xf32>
    %cst_88 = arith.constant dense<0.000000e+00> : vector<5xf32>
    %198 = vector.multi_reduction <add>, %197, %cst_88 [1] : vector<5x128xf32> to vector<5xf32>
    %199 = vector.shape_cast %198 : vector<5xf32> to vector<5x1xf32>
    %cst_89 = arith.constant 1.280000e+02 : f32
    %200 = vector.broadcast %cst_89 : f32 to vector<5x1xf32>
    %201 = arith.divf %199, %200 : vector<5x1xf32>
    %202 = vector.broadcast %194 : vector<5x1xf32> to vector<5x128xf32>
    %203 = arith.subf %190, %202 : vector<5x128xf32>
    %cst_90 = arith.constant 9.99999974E-6 : f32
    %204 = vector.broadcast %cst_90 : f32 to vector<5x1xf32>
    %205 = arith.addf %201, %204 : vector<5x1xf32>
    %206 = math.rsqrt %205 : vector<5x1xf32>
    %207 = vector.broadcast %206 : vector<5x1xf32> to vector<5x128xf32>
    %208 = arith.mulf %203, %207 : vector<5x128xf32>
    %209 = vector.broadcast %35 : vector<1x128xf32> to vector<5x128xf32>
    %210 = arith.mulf %208, %209 : vector<5x128xf32>
    %211 = vector.broadcast %36 : vector<1x128xf32> to vector<5x128xf32>
    %212 = arith.addf %210, %211 : vector<5x128xf32>
    %213 = arith.truncf %212 : vector<5x128xf32> to vector<5x128xbf16>
    %cst_91 = arith.constant dense<0.000000e+00> : vector<5x384xf32>
    %214 = tpu.matmul %213, %37, %cst_91 {dimension_numbers = #tpu.dot_dimension_numbers<[1], [0], [0], [1], [0, 0, 1, 1], [], []>} : vector<5x128xbf16>, vector<128x384xbf16>, vector<5x384xf32> -> vector<5x384xf32>
    %215 = vector.broadcast %38 : vector<1x384xf32> to vector<5x384xf32>
    %216 = arith.addf %214, %215 : vector<5x384xf32>
    %217 = vector.extract_strided_slice %216 {offsets = [0, 0], sizes = [5, 128], strides = [1, 1]} : vector<5x384xf32> to vector<5x128xf32>
    %218 = vector.extract_strided_slice %216 {offsets = [0, 128], sizes = [5, 128], strides = [1, 1]} : vector<5x384xf32> to vector<5x128xf32>
    %219 = vector.extract_strided_slice %216 {offsets = [0, 256], sizes = [5, 128], strides = [1, 1]} : vector<5x384xf32> to vector<5x128xf32>
    %220 = vector.extract_strided_slice %217 {offsets = [0, 0], sizes = [5, 32], strides = [1, 1]} : vector<5x128xf32> to vector<5x32xf32>
    %221 = vector.extract_strided_slice %217 {offsets = [0, 32], sizes = [5, 32], strides = [1, 1]} : vector<5x128xf32> to vector<5x32xf32>
    %222 = vector.extract_strided_slice %217 {offsets = [0, 64], sizes = [5, 32], strides = [1, 1]} : vector<5x128xf32> to vector<5x32xf32>
    %223 = vector.extract_strided_slice %217 {offsets = [0, 96], sizes = [5, 32], strides = [1, 1]} : vector<5x128xf32> to vector<5x32xf32>
    %224 = vector.shape_cast %220 : vector<5x32xf32> to vector<1x5x32xf32>
    %225 = vector.shape_cast %221 : vector<5x32xf32> to vector<1x5x32xf32>
    %226 = vector.shape_cast %222 : vector<5x32xf32> to vector<1x5x32xf32>
    %227 = vector.shape_cast %223 : vector<5x32xf32> to vector<1x5x32xf32>
    %228 = tpu.concatenate %224, %225, %226, %227 in 0 : vector<1x5x32xf32>, vector<1x5x32xf32>, vector<1x5x32xf32>, vector<1x5x32xf32> -> vector<4x5x32xf32>
    %229 = arith.truncf %228 : vector<4x5x32xf32> to vector<4x5x32xbf16>
    %230 = vector.extract_strided_slice %218 {offsets = [0, 0], sizes = [5, 32], strides = [1, 1]} : vector<5x128xf32> to vector<5x32xf32>
    %231 = vector.extract_strided_slice %218 {offsets = [0, 32], sizes = [5, 32], strides = [1, 1]} : vector<5x128xf32> to vector<5x32xf32>
    %232 = vector.extract_strided_slice %218 {offsets = [0, 64], sizes = [5, 32], strides = [1, 1]} : vector<5x128xf32> to vector<5x32xf32>
    %233 = vector.extract_strided_slice %218 {offsets = [0, 96], sizes = [5, 32], strides = [1, 1]} : vector<5x128xf32> to vector<5x32xf32>
    %234 = vector.shape_cast %230 : vector<5x32xf32> to vector<1x5x32xf32>
    %235 = vector.shape_cast %231 : vector<5x32xf32> to vector<1x5x32xf32>
    %236 = vector.shape_cast %232 : vector<5x32xf32> to vector<1x5x32xf32>
    %237 = vector.shape_cast %233 : vector<5x32xf32> to vector<1x5x32xf32>
    %238 = tpu.concatenate %234, %235, %236, %237 in 0 : vector<1x5x32xf32>, vector<1x5x32xf32>, vector<1x5x32xf32>, vector<1x5x32xf32> -> vector<4x5x32xf32>
    %239 = arith.truncf %238 : vector<4x5x32xf32> to vector<4x5x32xbf16>
    %240 = vector.extract_strided_slice %219 {offsets = [0, 0], sizes = [5, 32], strides = [1, 1]} : vector<5x128xf32> to vector<5x32xf32>
    %241 = vector.extract_strided_slice %219 {offsets = [0, 32], sizes = [5, 32], strides = [1, 1]} : vector<5x128xf32> to vector<5x32xf32>
    %242 = vector.extract_strided_slice %219 {offsets = [0, 64], sizes = [5, 32], strides = [1, 1]} : vector<5x128xf32> to vector<5x32xf32>
    %243 = vector.extract_strided_slice %219 {offsets = [0, 96], sizes = [5, 32], strides = [1, 1]} : vector<5x128xf32> to vector<5x32xf32>
    %244 = vector.shape_cast %240 : vector<5x32xf32> to vector<1x5x32xf32>
    %245 = vector.shape_cast %241 : vector<5x32xf32> to vector<1x5x32xf32>
    %246 = vector.shape_cast %242 : vector<5x32xf32> to vector<1x5x32xf32>
    %247 = vector.shape_cast %243 : vector<5x32xf32> to vector<1x5x32xf32>
    %248 = tpu.concatenate %244, %245, %246, %247 in 0 : vector<1x5x32xf32>, vector<1x5x32xf32>, vector<1x5x32xf32>, vector<1x5x32xf32> -> vector<4x5x32xf32>
    %249 = arith.truncf %248 : vector<4x5x32xf32> to vector<4x5x32xbf16>
    "tpu.trace_start"() <{level = 10 : i32, message = "hqd,hkd->hqk"}> : () -> ()
    %cst_92 = arith.constant dense<0.000000e+00> : vector<4x5x5xf32>
    %250 = tpu.matmul %229, %239, %cst_92 {dimension_numbers = #tpu.dot_dimension_numbers<[2], [2], [1], [1], [0, 0, 0, 1, 1, 1], [0], [0]>} : vector<4x5x32xbf16>, vector<4x5x32xbf16>, vector<4x5x5xf32> -> vector<4x5x5xf32>
    "tpu.trace_stop"() : () -> ()
    %cst_93 = arith.constant 0.176776692 : f32
    %251 = vector.broadcast %cst_93 : f32 to vector<4x5x5xf32>
    %252 = arith.mulf %250, %251 : vector<4x5x5xf32>
    %253 = vector.shape_cast %53 : vector<5x5xi1> to vector<1x5x5xi1>
    %cst_94 = arith.constant -1.000000e+30 : f32
    %254 = vector.shape_cast %253 : vector<1x5x5xi1> to vector<1x5x5xi1>
    %255 = vector.broadcast %254 : vector<1x5x5xi1> to vector<4x5x5xi1>
    %256 = vector.broadcast %cst_94 : f32 to vector<4x5x5xf32>
    %257 = arith.select %255, %256, %252 : vector<4x5x5xi1>, vector<4x5x5xf32>
    %cst_95 = arith.constant dense<0xFF800000> : vector<4x5xf32>
    %258 = vector.multi_reduction <maximumf>, %257, %cst_95 [2] : vector<4x5x5xf32> to vector<4x5xf32>
    %259 = vector.shape_cast %258 : vector<4x5xf32> to vector<4x5x1xf32>
    %260 = vector.broadcast %259 : vector<4x5x1xf32> to vector<4x5x5xf32>
    %261 = arith.subf %257, %260 : vector<4x5x5xf32>
    %262 = math.exp %261 : vector<4x5x5xf32>
    %cst_96 = arith.constant dense<0.000000e+00> : vector<4x5xf32>
    %263 = vector.multi_reduction <add>, %262, %cst_96 [2] : vector<4x5x5xf32> to vector<4x5xf32>
    %264 = vector.shape_cast %263 : vector<4x5xf32> to vector<4x5x1xf32>
    %265 = tpu.reciprocal %264 {approx = true} : vector<4x5x1xf32> -> vector<4x5x1xf32>
    %266 = vector.broadcast %265 : vector<4x5x1xf32> to vector<4x5x5xf32>
    %267 = arith.mulf %262, %266 : vector<4x5x5xf32>
    %268 = arith.truncf %267 : vector<4x5x5xf32> to vector<4x5x5xbf16>
    "tpu.trace_start"() <{level = 10 : i32, message = "hqk,hkd->hqd"}> : () -> ()
    %cst_97 = arith.constant dense<0.000000e+00> : vector<4x5x32xf32>
    %269 = tpu.matmul %268, %249, %cst_97 {dimension_numbers = #tpu.dot_dimension_numbers<[2], [1], [1], [2], [0, 0, 0, 1, 1, 2], [0], [0]>} : vector<4x5x5xbf16>, vector<4x5x32xbf16>, vector<4x5x32xf32> -> vector<4x5x32xf32>
    "tpu.trace_stop"() : () -> ()
    %270 = vector.extract_strided_slice %269 {offsets = [0, 0, 0], sizes = [1, 5, 32], strides = [1, 1, 1]} : vector<4x5x32xf32> to vector<1x5x32xf32>
    %271 = vector.shape_cast %270 : vector<1x5x32xf32> to vector<5x32xf32>
    %272 = vector.extract_strided_slice %269 {offsets = [1, 0, 0], sizes = [1, 5, 32], strides = [1, 1, 1]} : vector<4x5x32xf32> to vector<1x5x32xf32>
    %273 = vector.shape_cast %272 : vector<1x5x32xf32> to vector<5x32xf32>
    %274 = vector.extract_strided_slice %269 {offsets = [2, 0, 0], sizes = [1, 5, 32], strides = [1, 1, 1]} : vector<4x5x32xf32> to vector<1x5x32xf32>
    %275 = vector.shape_cast %274 : vector<1x5x32xf32> to vector<5x32xf32>
    %276 = vector.extract_strided_slice %269 {offsets = [3, 0, 0], sizes = [1, 5, 32], strides = [1, 1, 1]} : vector<4x5x32xf32> to vector<1x5x32xf32>
    %277 = vector.shape_cast %276 : vector<1x5x32xf32> to vector<5x32xf32>
    %278 = tpu.concatenate %271, %273, %275, %277 in 1 : vector<5x32xf32>, vector<5x32xf32>, vector<5x32xf32>, vector<5x32xf32> -> vector<5x128xf32>
    %279 = arith.truncf %278 : vector<5x128xf32> to vector<5x128xbf16>
    %cst_98 = arith.constant dense<0.000000e+00> : vector<5x128xf32>
    %280 = tpu.matmul %279, %39, %cst_98 {dimension_numbers = #tpu.dot_dimension_numbers<[1], [0], [0], [1], [0, 0, 1, 1], [], []>} : vector<5x128xbf16>, vector<128x128xbf16>, vector<5x128xf32> -> vector<5x128xf32>
    %281 = vector.broadcast %40 : vector<1x128xf32> to vector<5x128xf32>
    %282 = arith.addf %280, %281 : vector<5x128xf32>
    %283 = arith.addf %190, %282 : vector<5x128xf32>
    %cst_99 = arith.constant dense<0.000000e+00> : vector<5xf32>
    %284 = vector.multi_reduction <add>, %283, %cst_99 [1] : vector<5x128xf32> to vector<5xf32>
    %285 = vector.shape_cast %284 : vector<5xf32> to vector<5x1xf32>
    %cst_100 = arith.constant 1.280000e+02 : f32
    %286 = vector.broadcast %cst_100 : f32 to vector<5x1xf32>
    %287 = arith.divf %285, %286 : vector<5x1xf32>
    %288 = vector.broadcast %287 : vector<5x1xf32> to vector<5x128xf32>
    %289 = arith.subf %283, %288 : vector<5x128xf32>
    %290 = arith.mulf %289, %289 : vector<5x128xf32>
    %cst_101 = arith.constant dense<0.000000e+00> : vector<5xf32>
    %291 = vector.multi_reduction <add>, %290, %cst_101 [1] : vector<5x128xf32> to vector<5xf32>
    %292 = vector.shape_cast %291 : vector<5xf32> to vector<5x1xf32>
    %cst_102 = arith.constant 1.280000e+02 : f32
    %293 = vector.broadcast %cst_102 : f32 to vector<5x1xf32>
    %294 = arith.divf %292, %293 : vector<5x1xf32>
    %295 = vector.broadcast %287 : vector<5x1xf32> to vector<5x128xf32>
    %296 = arith.subf %283, %295 : vector<5x128xf32>
    %cst_103 = arith.constant 9.99999974E-6 : f32
    %297 = vector.broadcast %cst_103 : f32 to vector<5x1xf32>
    %298 = arith.addf %294, %297 : vector<5x1xf32>
    %299 = math.rsqrt %298 : vector<5x1xf32>
    %300 = vector.broadcast %299 : vector<5x1xf32> to vector<5x128xf32>
    %301 = arith.mulf %296, %300 : vector<5x128xf32>
    %302 = vector.broadcast %41 : vector<1x128xf32> to vector<5x128xf32>
    %303 = arith.mulf %301, %302 : vector<5x128xf32>
    %304 = vector.broadcast %42 : vector<1x128xf32> to vector<5x128xf32>
    %305 = arith.addf %303, %304 : vector<5x128xf32>
    %306 = arith.truncf %305 : vector<5x128xf32> to vector<5x128xbf16>
    %cst_104 = arith.constant dense<0.000000e+00> : vector<5x512xf32>
    %307 = tpu.matmul %306, %43, %cst_104 {dimension_numbers = #tpu.dot_dimension_numbers<[1], [0], [0], [1], [0, 0, 1, 1], [], []>} : vector<5x128xbf16>, vector<128x512xbf16>, vector<5x512xf32> -> vector<5x512xf32>
    %308 = vector.broadcast %44 : vector<1x512xf32> to vector<5x512xf32>
    %309 = arith.addf %307, %308 : vector<5x512xf32>
    %cst_105 = arith.constant 5.000000e-01 : f32
    %310 = vector.broadcast %cst_105 : f32 to vector<5x512xf32>
    %311 = arith.mulf %310, %309 : vector<5x512xf32>
    %cst_106 = arith.constant 4.471500e-02 : f32
    %312 = vector.broadcast %cst_106 : f32 to vector<5x512xf32>
    %313 = arith.mulf %312, %309 : vector<5x512xf32>
    %314 = arith.mulf %313, %309 : vector<5x512xf32>
    %315 = arith.mulf %314, %309 : vector<5x512xf32>
    %316 = arith.addf %309, %315 : vector<5x512xf32>
    %cst_107 = arith.constant 0.797884583 : f32
    %317 = vector.broadcast %cst_107 : f32 to vector<5x512xf32>
    %318 = arith.mulf %317, %316 : vector<5x512xf32>
    %319 = math.tanh %318 : vector<5x512xf32>
    %cst_108 = arith.constant 1.000000e+00 : f32
    %320 = vector.broadcast %cst_108 : f32 to vector<5x512xf32>
    %321 = arith.addf %320, %319 : vector<5x512xf32>
    %322 = arith.mulf %311, %321 : vector<5x512xf32>
    %323 = arith.truncf %322 : vector<5x512xf32> to vector<5x512xbf16>
    %cst_109 = arith.constant dense<0.000000e+00> : vector<5x128xf32>
    %324 = tpu.matmul %323, %45, %cst_109 {dimension_numbers = #tpu.dot_dimension_numbers<[1], [0], [0], [1], [0, 0, 1, 1], [], []>} : vector<5x512xbf16>, vector<512x128xbf16>, vector<5x128xf32> -> vector<5x128xf32>
    %325 = vector.broadcast %46 : vector<1x128xf32> to vector<5x128xf32>
    %326 = arith.addf %324, %325 : vector<5x128xf32>
    %327 = arith.addf %283, %326 : vector<5x128xf32>
    %cst_110 = arith.constant dense<0.000000e+00> : vector<5xf32>
    %328 = vector.multi_reduction <add>, %327, %cst_110 [1] : vector<5x128xf32> to vector<5xf32>
    %329 = vector.shape_cast %328 : vector<5xf32> to vector<5x1xf32>
    %cst_111 = arith.constant 1.280000e+02 : f32
    %330 = vector.broadcast %cst_111 : f32 to vector<5x1xf32>
    %331 = arith.divf %329, %330 : vector<5x1xf32>
    %332 = vector.broadcast %331 : vector<5x1xf32> to vector<5x128xf32>
    %333 = arith.subf %327, %332 : vector<5x128xf32>
    %334 = arith.mulf %333, %333 : vector<5x128xf32>
    %cst_112 = arith.constant dense<0.000000e+00> : vector<5xf32>
    %335 = vector.multi_reduction <add>, %334, %cst_112 [1] : vector<5x128xf32> to vector<5xf32>
    %336 = vector.shape_cast %335 : vector<5xf32> to vector<5x1xf32>
    %cst_113 = arith.constant 1.280000e+02 : f32
    %337 = vector.broadcast %cst_113 : f32 to vector<5x1xf32>
    %338 = arith.divf %336, %337 : vector<5x1xf32>
    %339 = vector.broadcast %331 : vector<5x1xf32> to vector<5x128xf32>
    %340 = arith.subf %327, %339 : vector<5x128xf32>
    %cst_114 = arith.constant 9.99999974E-6 : f32
    %341 = vector.broadcast %cst_114 : f32 to vector<5x1xf32>
    %342 = arith.addf %338, %341 : vector<5x1xf32>
    %343 = math.rsqrt %342 : vector<5x1xf32>
    %344 = vector.broadcast %343 : vector<5x1xf32> to vector<5x128xf32>
    %345 = arith.mulf %340, %344 : vector<5x128xf32>
    %346 = vector.broadcast %47 : vector<1x128xf32> to vector<5x128xf32>
    %347 = arith.mulf %345, %346 : vector<5x128xf32>
    %348 = vector.broadcast %48 : vector<1x128xf32> to vector<5x128xf32>
    %349 = arith.addf %347, %348 : vector<5x128xf32>
    %350 = arith.truncf %349 : vector<5x128xf32> to vector<5x128xbf16>
    %cst_115 = arith.constant dense<0.000000e+00> : vector<5x128xf32>
    %351 = tpu.matmul %350, %49, %cst_115 {dimension_numbers = #tpu.dot_dimension_numbers<[1], [0], [0], [1], [0, 0, 1, 1], [], []>} : vector<5x128xbf16>, vector<128x128xbf16>, vector<5x128xf32> -> vector<5x128xf32>
    %352 = vector.broadcast %50 : vector<1x128xf32> to vector<5x128xf32>
    %353 = arith.addf %351, %352 : vector<5x128xf32>
    %c0_116 = arith.constant 0 : index
    %c0_117 = arith.constant 0 : index
    %c0_118 = arith.constant 0 : index
    %354 = vector.load %arg32[%c0_116, %c0_117, %c0_118] : memref<1x5x128xf32, #tpu.memory_space<vmem>>, vector<1x5x128xf32>
    %355 = vector.shape_cast %354 : vector<1x5x128xf32> to vector<5x128xf32>
    %356 = vector.shape_cast %353 : vector<5x128xf32> to vector<1x5x128xf32>
    tpu.vector_store %arg32[%c0_116, %c0_117, %c0_118], %356 {strides = array<i32>} : memref<1x5x128xf32, #tpu.memory_space<vmem>>, vector<1x5x128xf32>,
    return
  }
  func.func @transform_0(%arg0: i32, %arg1: memref<2x5xi32, #tpu.memory_space<smem>>) -> (i32, i32) {
    %c0_i32 = arith.constant 0 : i32
    %c0_i32_0 = arith.constant 0 : i32
    %c0_i32_1 = arith.constant 0 : i32
    return %c0_i32, %c0_i32_0 : i32, i32
  }
  func.func @transform_1(%arg0: i32, %arg1: memref<2x5xi32, #tpu.memory_space<smem>>) -> (i32, i32) {
    %c0_i32 = arith.constant 0 : i32
    %c0_i32_0 = arith.constant 0 : i32
    %c0_i32_1 = arith.constant 0 : i32
    return %c0_i32, %c0_i32_0 : i32, i32
  }
  func.func @transform_2(%arg0: i32, %arg1: memref<2x5xi32, #tpu.memory_space<smem>>) -> (i32, i32) {
    %c0_i32 = arith.constant 0 : i32
    %c0_i32_0 = arith.constant 0 : i32
    %c0_i32_1 = arith.constant 0 : i32
    return %c0_i32, %c0_i32_0 : i32, i32
  }
  func.func @transform_3(%arg0: i32, %arg1: memref<2x5xi32, #tpu.memory_space<smem>>) -> (i32, i32) {
    %c0_i32 = arith.constant 0 : i32
    %c0_i32_0 = arith.constant 0 : i32
    %c0_i32_1 = arith.constant 0 : i32
    return %c0_i32, %c0_i32_0 : i32, i32
  }
  func.func @transform_4(%arg0: i32, %arg1: memref<2x5xi32, #tpu.memory_space<smem>>) -> (i32, i32) {
    %c0_i32 = arith.constant 0 : i32
    %c0_i32_0 = arith.constant 0 : i32
    %c0_i32_1 = arith.constant 0 : i32
    return %c0_i32, %c0_i32_0 : i32, i32
  }
  func.func @transform_5(%arg0: i32, %arg1: memref<2x5xi32, #tpu.memory_space<smem>>) -> (i32, i32) {
    %c0_i32 = arith.constant 0 : i32
    %c0_i32_0 = arith.constant 0 : i32
    %c0_i32_1 = arith.constant 0 : i32
    return %c0_i32, %c0_i32_0 : i32, i32
  }
  func.func @transform_6(%arg0: i32, %arg1: memref<2x5xi32, #tpu.memory_space<smem>>) -> (i32, i32) {
    %c0_i32 = arith.constant 0 : i32
    %c0_i32_0 = arith.constant 0 : i32
    %c0_i32_1 = arith.constant 0 : i32
    return %c0_i32, %c0_i32_0 : i32, i32
  }
  func.func @transform_7(%arg0: i32, %arg1: memref<2x5xi32, #tpu.memory_space<smem>>) -> (i32, i32) {
    %c0_i32 = arith.constant 0 : i32
    %c0_i32_0 = arith.constant 0 : i32
    %c0_i32_1 = arith.constant 0 : i32
    return %c0_i32, %c0_i32_0 : i32, i32
  }
  func.func @transform_8(%arg0: i32, %arg1: memref<2x5xi32, #tpu.memory_space<smem>>) -> (i32, i32) {
    %c0_i32 = arith.constant 0 : i32
    %c0_i32_0 = arith.constant 0 : i32
    %c0_i32_1 = arith.constant 0 : i32
    return %c0_i32, %c0_i32_0 : i32, i32
  }
  func.func @transform_9(%arg0: i32, %arg1: memref<2x5xi32, #tpu.memory_space<smem>>) -> (i32, i32) {
    %c0_i32 = arith.constant 0 : i32
    %c0_i32_0 = arith.constant 0 : i32
    %c0_i32_1 = arith.constant 0 : i32
    return %c0_i32, %c0_i32_0 : i32, i32
  }
  func.func @transform_10(%arg0: i32, %arg1: memref<2x5xi32, #tpu.memory_space<smem>>) -> (i32, i32) {
    %c0_i32 = arith.constant 0 : i32
    %c0_i32_0 = arith.constant 0 : i32
    %c0_i32_1 = arith.constant 0 : i32
    return %c0_i32, %c0_i32_0 : i32, i32
  }
  func.func @transform_11(%arg0: i32, %arg1: memref<2x5xi32, #tpu.memory_space<smem>>) -> (i32, i32) {
    %c0_i32 = arith.constant 0 : i32
    %c0_i32_0 = arith.constant 0 : i32
    %c0_i32_1 = arith.constant 0 : i32
    return %c0_i32, %c0_i32_0 : i32, i32
  }
  func.func @transform_12(%arg0: i32, %arg1: memref<2x5xi32, #tpu.memory_space<smem>>) -> (i32, i32) {
    %c0_i32 = arith.constant 0 : i32
    %c0_i32_0 = arith.constant 0 : i32
    %c0_i32_1 = arith.constant 0 : i32
    return %c0_i32, %c0_i32_0 : i32, i32
  }
  func.func @transform_13(%arg0: i32, %arg1: memref<2x5xi32, #tpu.memory_space<smem>>) -> (i32, i32) {
    %c0_i32 = arith.constant 0 : i32
    %c0_i32_0 = arith.constant 0 : i32
    %c0_i32_1 = arith.constant 0 : i32
    return %c0_i32, %c0_i32_0 : i32, i32
  }
  func.func @transform_14(%arg0: i32, %arg1: memref<2x5xi32, #tpu.memory_space<smem>>) -> (i32, i32) {
    %c0_i32 = arith.constant 0 : i32
    %c0_i32_0 = arith.constant 0 : i32
    %c0_i32_1 = arith.constant 0 : i32
    return %c0_i32, %c0_i32_0 : i32, i32
  }
  func.func @transform_15(%arg0: i32, %arg1: memref<2x5xi32, #tpu.memory_space<smem>>) -> (i32, i32) {
    %c0_i32 = arith.constant 0 : i32
    %c0_i32_0 = arith.constant 0 : i32
    %c0_i32_1 = arith.constant 0 : i32
    return %c0_i32, %c0_i32_0 : i32, i32
  }
  func.func @transform_16(%arg0: i32, %arg1: memref<2x5xi32, #tpu.memory_space<smem>>) -> (i32, i32) {
    %c0_i32 = arith.constant 0 : i32
    %c0_i32_0 = arith.constant 0 : i32
    %c0_i32_1 = arith.constant 0 : i32
    return %c0_i32, %c0_i32_0 : i32, i32
  }
  func.func @transform_17(%arg0: i32, %arg1: memref<2x5xi32, #tpu.memory_space<smem>>) -> (i32, i32) {
    %c0_i32 = arith.constant 0 : i32
    %c0_i32_0 = arith.constant 0 : i32
    %c0_i32_1 = arith.constant 0 : i32
    return %c0_i32, %c0_i32_0 : i32, i32
  }
  func.func @transform_18(%arg0: i32, %arg1: memref<2x5xi32, #tpu.memory_space<smem>>) -> (i32, i32) {
    %c0_i32 = arith.constant 0 : i32
    %c0_i32_0 = arith.constant 0 : i32
    %c0_i32_1 = arith.constant 0 : i32
    return %c0_i32, %c0_i32_0 : i32, i32
  }
  func.func @transform_19(%arg0: i32, %arg1: memref<2x5xi32, #tpu.memory_space<smem>>) -> (i32, i32) {
    %c0_i32 = arith.constant 0 : i32
    %c0_i32_0 = arith.constant 0 : i32
    %c0_i32_1 = arith.constant 0 : i32
    return %c0_i32, %c0_i32_0 : i32, i32
  }
  func.func @transform_20(%arg0: i32, %arg1: memref<2x5xi32, #tpu.memory_space<smem>>) -> (i32, i32) {
    %c0_i32 = arith.constant 0 : i32
    %c0_i32_0 = arith.constant 0 : i32
    %c0_i32_1 = arith.constant 0 : i32
    return %c0_i32, %c0_i32_0 : i32, i32
  }
  func.func @transform_21(%arg0: i32, %arg1: memref<2x5xi32, #tpu.memory_space<smem>>) -> (i32, i32) {
    %c0_i32 = arith.constant 0 : i32
    %c0_i32_0 = arith.constant 0 : i32
    %c0_i32_1 = arith.constant 0 : i32
    return %c0_i32, %c0_i32_0 : i32, i32
  }
  func.func @transform_22(%arg0: i32, %arg1: memref<2x5xi32, #tpu.memory_space<smem>>) -> (i32, i32) {
    %c0_i32 = arith.constant 0 : i32
    %c0_i32_0 = arith.constant 0 : i32
    %c0_i32_1 = arith.constant 0 : i32
    return %c0_i32, %c0_i32_0 : i32, i32
  }
  func.func @transform_23(%arg0: i32, %arg1: memref<2x5xi32, #tpu.memory_space<smem>>) -> (i32, i32) {
    %c0_i32 = arith.constant 0 : i32
    %c0_i32_0 = arith.constant 0 : i32
    %c0_i32_1 = arith.constant 0 : i32
    return %c0_i32, %c0_i32_0 : i32, i32
  }
  func.func @transform_24(%arg0: i32, %arg1: memref<2x5xi32, #tpu.memory_space<smem>>) -> (i32, i32) {
    %c0_i32 = arith.constant 0 : i32
    %c0_i32_0 = arith.constant 0 : i32
    %c0_i32_1 = arith.constant 0 : i32
    return %c0_i32, %c0_i32_0 : i32, i32
  }
  func.func @transform_25(%arg0: i32, %arg1: memref<2x5xi32, #tpu.memory_space<smem>>) -> (i32, i32) {
    %c0_i32 = arith.constant 0 : i32
    %c0_i32_0 = arith.constant 0 : i32
    %c0_i32_1 = arith.constant 0 : i32
    return %c0_i32, %c0_i32_0 : i32, i32
  }
  func.func @transform_26(%arg0: i32, %arg1: memref<2x5xi32, #tpu.memory_space<smem>>) -> (i32, i32) {
    %c0_i32 = arith.constant 0 : i32
    %c0_i32_0 = arith.constant 0 : i32
    %c0_i32_1 = arith.constant 0 : i32
    return %c0_i32, %c0_i32_0 : i32, i32
  }
  func.func @transform_27(%arg0: i32, %arg1: memref<2x5xi32, #tpu.memory_space<smem>>) -> (i32, i32) {
    %c0_i32 = arith.constant 0 : i32
    %c0_i32_0 = arith.constant 0 : i32
    %c0_i32_1 = arith.constant 0 : i32
    return %c0_i32, %c0_i32_0 : i32, i32
  }
  func.func @transform_28(%arg0: i32, %arg1: memref<2x5xi32, #tpu.memory_space<smem>>) -> (i32, i32) {
    %c0_i32 = arith.constant 0 : i32
    %c0_i32_0 = arith.constant 0 : i32
    %c0_i32_1 = arith.constant 0 : i32
    return %c0_i32, %c0_i32_0 : i32, i32
  }
  func.func @transform_29(%arg0: i32, %arg1: memref<2x5xi32, #tpu.memory_space<smem>>) -> (i32, i32) {
    %c0_i32 = arith.constant 0 : i32
    %c0_i32_0 = arith.constant 0 : i32
    %c0_i32_1 = arith.constant 0 : i32
    return %c0_i32, %c0_i32_0 : i32, i32
  }
  func.func @transform_30(%arg0: i32, %arg1: memref<2x5xi32, #tpu.memory_space<smem>>) -> (i32, i32, i32) {
    %c0_i32 = arith.constant 0 : i32
    %c0_i32_0 = arith.constant 0 : i32
    %c0_i32_1 = arith.constant 0 : i32
    return %arg0, %c0_i32, %c0_i32_0 : i32, i32, i32
  }
}

</mosaic_0001>

<llo_original>
// kernel: transformer_forward.1
$region0: #{transformer_forward.1}
  #allocation0 [shape = 'u32[]', space=smem, size = 0x4, offset = 0x4, fixed_abs, tag = 'smem constant byte address 0x4 - core index']
  #allocation1 [shape = 'u32[144,128]{1,0:T(1,128)}', space=vmem, size = 0x12000, scoped, tag = 'internal scratch']
  #allocation2 [shape = 's32[1]{0}', space=sflag, size = 0x4, scoped, tag = 'scoped memory for transformer_forward.1']
  #allocation3 [shape = 'u8[1024]{0}', space=smem, size = 0x400, scoped, tag = 'prefetched SMEM operand 0']
  %s0 = inlined_call_operand.smem [shape: u32[32], index: -1, kind: input, shape index: {}]
  %s1 = sld [smem:[%s0]]
  %s2 = scalar_lea.smem %s0, 1
  %s3 = sld [smem:[%s2]]
  %s4 = scalar_lea.smem %s0, 2
  %s5 = sld [smem:[%s4]]
  %s6 = scalar_lea.smem %s0, 3
  %s7 = sld [smem:[%s6]]
  %s8 = scalar_lea.smem %s0, 4
  %s9 = sld [smem:[%s8]]
  %s10 = scalar_lea.smem %s0, 5
  %s11 = sld [smem:[%s10]]
  %s12 = scalar_lea.smem %s0, 6
  %s13 = sld [smem:[%s12]]
  %s14 = scalar_lea.smem %s0, 7
  %s15 = sld [smem:[%s14]]
  %s16 = scalar_lea.smem %s0, 8
  %s17 = sld [smem:[%s16]]
  %s18 = scalar_lea.smem %s0, 9
  %s19 = sld [smem:[%s18]]
  %s20 = scalar_lea.smem %s0, 10
  %s21 = sld [smem:[%s20]]
  %s22 = scalar_lea.smem %s0, 11
  %s23 = sld [smem:[%s22]]
  %s24 = scalar_lea.smem %s0, 12
  %s25 = sld [smem:[%s24]]
  %s26 = scalar_lea.smem %s0, 13
  %s27 = sld [smem:[%s26]]
  %s28 = scalar_lea.smem %s0, 14
  %s29 = sld [smem:[%s28]]
  %s30 = scalar_lea.smem %s0, 15
  %s31 = sld [smem:[%s30]]
  %s32 = scalar_lea.smem %s0, 16
  %s33 = sld [smem:[%s32]]
  %s34 = scalar_lea.smem %s0, 17
  %s35 = sld [smem:[%s34]]
  %s36 = scalar_lea.smem %s0, 18
  %s37 = sld [smem:[%s36]]
  %s38 = scalar_lea.smem %s0, 19
  %s39 = sld [smem:[%s38]]
  %s40 = scalar_lea.smem %s0, 20
  %s41 = sld [smem:[%s40]]
  %s42 = scalar_lea.smem %s0, 21
  %s43 = sld [smem:[%s42]]
  %s44 = scalar_lea.smem %s0, 22
  %s45 = sld [smem:[%s44]]
  %s46 = scalar_lea.smem %s0, 23
  %s47 = sld [smem:[%s46]]
  %s48 = scalar_lea.smem %s0, 24
  %s49 = sld [smem:[%s48]]
  %s50 = scalar_lea.smem %s0, 25
  %s51 = sld [smem:[%s50]]
  %s52 = scalar_lea.smem %s0, 26
  %s53 = sld [smem:[%s52]]
  %s54 = scalar_lea.smem %s0, 27
  %s55 = sld [smem:[%s54]]
  %s56 = scalar_lea.smem %s0, 28
  %s57 = sld [smem:[%s56]]
  %s58 = scalar_lea.smem %s0, 29
  %s59 = sld [smem:[%s58]]
  %s60 = scalar_lea.smem %s0, 30
  %s61 = sld [smem:[%s60]]
  %s62 = scalar_lea.smem %s0, 31
  %s63 = sld [smem:[%s62]]
  %s64 = sld [smem:[#allocation0]]
  $region261: #{transformer_forward.1} parent=0
    _
  %s66 = ssub.s32 1, %s64
  %s67 = scalar_select 0, %s66, %s64
  %s68 = sshll.u32 %s1, 4
  %s69 = int_to_ptr.vmem [resolvable:$true] %s68
  %71 = dma.vmem_to_smem %s69, 32, [#allocation3], [#allocation2]
  %72 = dma.done [#allocation2], 32
  %73 = sfence
  $region1: #{transformer_forward.1} parent=0
    #allocation4 [shape = 'u8[4096]{0}', space=vmem, size = 0x1000, scoped, tag = 'input window, operand 2, single buffered']
    #allocation5 [shape = 's32[2]{0}', space=sflag, size = 0x8, scoped, tag = 'scoped memory for transformer_forward.1']
    #allocation6 [shape = 'u8[512]{0}', space=vmem, size = 0x400, scoped, tag = 'input window, operand 4, single buffered']
    #allocation7 [shape = 's32[1]{0}', space=sflag, size = 0x4, scoped, tag = 'scoped memory for transformer_forward.1']
    #allocation8 [shape = 'u8[98304]{0}', space=vmem, size = 0x18000, scoped, tag = 'input window, operand 5, single buffered']
    #allocation9 [shape = 'u8[1536]{0}', space=vmem, size = 0x800, scoped, tag = 'input window, operand 6, single buffered']
    #allocation10 [shape = 's32[1]{0}', space=sflag, size = 0x4, scoped, tag = 'scoped memory for transformer_forward.1']
    #allocation11 [shape = 'u8[32768]{0}', space=vmem, size = 0x8000, scoped, tag = 'input window, operand 7, single buffered']
    #allocation12 [shape = 'u8[512]{0}', space=vmem, size = 0x400, scoped, tag = 'input window, operand 8, single buffered']
    #allocation13 [shape = 's32[1]{0}', space=sflag, size = 0x4, scoped, tag = 'scoped memory for transformer_forward.1']
    #allocation14 [shape = 'u8[512]{0}', space=vmem, size = 0x400, scoped, tag = 'input window, operand 9, single buffered']
    #allocation15 [shape = 'u8[512]{0}', space=vmem, size = 0x400, scoped, tag = 'input window, operand 10, single buffered']
    #allocation16 [shape = 's32[1]{0}', space=sflag, size = 0x4, scoped, tag = 'scoped memory for transformer_forward.1']
    #allocation17 [shape = 'u8[131072]{0}', space=vmem, size = 0x20000, scoped, tag = 'input window, operand 11, single buffered']
    #allocation18 [shape = 'u8[131072]{0}', space=vmem, size = 0x20000, scoped, tag = 'input window, operand 13, single buffered']
    #allocation19 [shape = 's32[1]{0}', space=sflag, size = 0x4, scoped, tag = 'scoped memory for transformer_forward.1']
    #allocation20 [shape = 'u8[512]{0}', space=vmem, size = 0x400, scoped, tag = 'input window, operand 14, single buffered']
    #allocation21 [shape = 'u8[512]{0}', space=vmem, size = 0x400, scoped, tag = 'input window, operand 15, single buffered']
    #allocation22 [shape = 's32[1]{0}', space=sflag, size = 0x4, scoped, tag = 'scoped memory for transformer_forward.1']
    #allocation23 [shape = 'u8[512]{0}', space=vmem, size = 0x400, scoped, tag = 'input window, operand 16, single buffered']
    #allocation24 [shape = 'u8[98304]{0}', space=vmem, size = 0x18000, scoped, tag = 'input window, operand 17, single buffered']
    #allocation25 [shape = 's32[1]{0}', space=sflag, size = 0x4, scoped, tag = 'scoped memory for transformer_forward.1']
    #allocation26 [shape = 'u8[1536]{0}', space=vmem, size = 0x800, scoped, tag = 'input window, operand 18, single buffered']
    #allocation27 [shape = 'u8[32768]{0}', space=vmem, size = 0x8000, scoped, tag = 'input window, operand 19, single buffered']
    #allocation28 [shape = 's32[1]{0}', space=sflag, size = 0x4, scoped, tag = 'scoped memory for transformer_forward.1']
    #allocation29 [shape = 'u8[512]{0}', space=vmem, size = 0x400, scoped, tag = 'input window, operand 20, single buffered']
    #allocation30 [shape = 'u8[512]{0}', space=vmem, size = 0x400, scoped, tag = 'input window, operand 21, single buffered']
    #allocation31 [shape = 's32[1]{0}', space=sflag, size = 0x4, scoped, tag = 'scoped memory for transformer_forward.1']
    #allocation32 [shape = 'u8[512]{0}', space=vmem, size = 0x400, scoped, tag = 'input window, operand 22, single buffered']
    #allocation33 [shape = 'u8[131072]{0}', space=vmem, size = 0x20000, scoped, tag = 'input window, operand 23, single buffered']
    #allocation34 [shape = 's32[1]{0}', space=sflag, size = 0x4, scoped, tag = 'scoped memory for transformer_forward.1']
    #allocation35 [shape = 'u8[2048]{0}', space=vmem, size = 0x800, scoped, tag = 'input window, operand 24, single buffered']
    #allocation36 [shape = 'u8[131072]{0}', space=vmem, size = 0x20000, scoped, tag = 'input window, operand 25, single buffered']
    #allocation37 [shape = 's32[1]{0}', space=sflag, size = 0x4, scoped, tag = 'scoped memory for transformer_forward.1']
    #allocation38 [shape = 'u8[512]{0}', space=vmem, size = 0x400, scoped, tag = 'input window, operand 26, single buffered']
    #allocation39 [shape = 'u8[512]{0}', space=vmem, size = 0x400, scoped, tag = 'input window, operand 27, single buffered']
    #allocation40 [shape = 's32[1]{0}', space=sflag, size = 0x4, scoped, tag = 'scoped memory for transformer_forward.1']
    #allocation41 [shape = 'u8[512]{0}', space=vmem, size = 0x400, scoped, tag = 'input window, operand 28, single buffered']
    #allocation42 [shape = 'u8[32768]{0}', space=vmem, size = 0x8000, scoped, tag = 'input window, operand 29, single buffered']
    #allocation43 [shape = 's32[1]{0}', space=sflag, size = 0x4, scoped, tag = 'scoped memory for transformer_forward.1']
    #allocation44 [shape = 'u8[512]{0}', space=vmem, size = 0x400, scoped, tag = 'input window, operand 30, single buffered']
    %74 = vsyncpa [#allocation5], 0
    %75 = vsyncpa [#allocation7], 0
    %76 = vsyncpa [#allocation10], 0
    %77 = vsyncpa [#allocation13], 0
    %78 = vsyncpa [#allocation16], 0
    %79 = vsyncpa [#allocation19], 0
    %80 = vsyncpa [#allocation22], 0
    %81 = vsyncpa [#allocation25], 0
    %82 = vsyncpa [#allocation28], 0
    %83 = vsyncpa [#allocation31], 0
    %84 = vsyncpa [#allocation34], 0
    %85 = vsyncpa [#allocation37], 0
    %86 = vsyncpa [#allocation40], 0
    %87 = vsyncpa [#allocation43], 0
    loop: start=0, step=1, limit=4
    $region2: #{transformer_forward.1} parent=1 // loop_pre_header
      _
    $region3: #{transformer_forward.1} parent=1 // loop_header
      %s89 = sphi 0, %s93
      %p90 = scmp.ge.s32.totalorder %s89, 4
      %s97 = sphi 0, %s97
      %s99 = sphi 0, %s97
      %s100 = sphi 0, %s99
      %s114 = sphi 0, %s100
      %s118 = sphi 0, %s118
      %s120 = sphi 0, %s118
      %s121 = sphi 0, %s120
      %s135 = sphi 0, %s121
      %s139 = sphi 0, %s139
      %s141 = sphi 0, %s139
      %s142 = sphi 0, %s141
      %s156 = sphi 0, %s142
      %s160 = sphi 0, %s160
      %s162 = sphi 0, %s160
      %s163 = sphi 0, %s162
      %s177 = sphi 0, %s163
      %s181 = sphi 0, %s181
      %s183 = sphi 0, %s181
      %s184 = sphi 0, %s183
      %s198 = sphi 0, %s184
      %s202 = sphi 0, %s202
      %s204 = sphi 0, %s202
      %s205 = sphi 0, %s204
      %s219 = sphi 0, %s205
      %s223 = sphi 0, %s223
      %s225 = sphi 0, %s223
      %s226 = sphi 0, %s225
      %s240 = sphi 0, %s226
      %s244 = sphi 0, %s244
      %s246 = sphi 0, %s244
      %s247 = sphi 0, %s246
      %s261 = sphi 0, %s247
      %s265 = sphi 0, %s265
      %s267 = sphi 0, %s265
      %s268 = sphi 0, %s267
      %s282 = sphi 0, %s268
      %s286 = sphi 0, %s286
      %s288 = sphi 0, %s286
      %s289 = sphi 0, %s288
      %s303 = sphi 0, %s289
      %s307 = sphi 0, %s307
      %s309 = sphi 0, %s307
      %s310 = sphi 0, %s309
      %s324 = sphi 0, %s310
      %s328 = sphi 0, %s328
      %s330 = sphi 0, %s328
      %s331 = sphi 0, %s330
      %s345 = sphi 0, %s331
      %s349 = sphi 0, %s349
      %s351 = sphi 0, %s349
      %s352 = sphi 0, %s351
      %s366 = sphi 0, %s352
      %s370 = sphi 0, %s370
      %s372 = sphi 0, %s370
      %s373 = sphi 0, %s372
      %s387 = sphi 0, %s373
      %s391 = sphi 0, %s391
      %s393 = sphi 0, %s391
      %s394 = sphi 0, %s393
      %s408 = sphi 0, %s394
      %s412 = sphi 0, %s412
      %s414 = sphi 0, %s412
      %s415 = sphi 0, %s414
      %s429 = sphi 0, %s415
      %s433 = sphi 0, %s433
      %s435 = sphi 0, %s433
      %s436 = sphi 0, %s435
      %s450 = sphi 0, %s436
      %s454 = sphi 0, %s454
      %s456 = sphi 0, %s454
      %s457 = sphi 0, %s456
      %s471 = sphi 0, %s457
      %s475 = sphi 0, %s475
      %s477 = sphi 0, %s475
      %s478 = sphi 0, %s477
      %s492 = sphi 0, %s478
      %s496 = sphi 0, %s496
      %s498 = sphi 0, %s496
      %s499 = sphi 0, %s498
      %s513 = sphi 0, %s499
      %s517 = sphi 0, %s517
      %s519 = sphi 0, %s517
      %s520 = sphi 0, %s519
      %s534 = sphi 0, %s520
      %s538 = sphi 0, %s538
      %s540 = sphi 0, %s538
      %s541 = sphi 0, %s540
      %s555 = sphi 0, %s541
      %s559 = sphi 0, %s559
      %s561 = sphi 0, %s559
      %s562 = sphi 0, %s561
      %s576 = sphi 0, %s562
      %s580 = sphi 0, %s580
      %s582 = sphi 0, %s580
      %s583 = sphi 0, %s582
      %s597 = sphi 0, %s583
      %s601 = sphi 0, %s601
      %s603 = sphi 0, %s601
      %s604 = sphi 0, %s603
      %s618 = sphi 0, %s604
      %s622 = sphi 0, %s622
      %s624 = sphi 0, %s622
      %s625 = sphi 0, %s624
      %s639 = sphi 0, %s625
      %s643 = sphi 0, %s643
      %s645 = sphi 0, %s643
      %s646 = sphi 0, %s645
      %s660 = sphi 0, %s646
      %s664 = sphi 0, %s664
      %s666 = sphi 0, %s664
      %s667 = sphi 0, %s666
      %s681 = sphi 0, %s667
      %s685 = sphi 0, %s685
      %s687 = sphi 0, %s685
      %s688 = sphi 0, %s687
      %s702 = sphi 0, %s688
      %s706 = sphi 0, %s706
      %s708 = sphi 0, %s706
      %s709 = sphi 0, %s708
      %s723 = sphi 0, %s709
      %s729 = sphi 0, %s731
      %s732 = sphi 0, %s729
      %s733 = sphi 0, %s732
      %s749 = sphi 0, %s733
    $region4: #{transformer_forward.1} parent=1 // loop_header_branch
      %92 = sbr.rel (%p90) target = $region8
    $region5: #{transformer_forward.1} parent=1 // loop_body
      %s94 = ssub.s32 %s89, 1
      %s95 = ssub.s32 %s89, 2
      %s96 = sadd.s32 %s89, 1
      %s98 = sadd.s32 %s97, 1
      %p101 = scmp.eq.s32.totalorder %s89, 1
      %p102 = scmp.ne.s32.totalorder %s97, %s99
      %p103 = scmp.eq.s32.totalorder %s89, 0
      %p104 = por %p102, %p103
      %p105 = scmp.ne.s32.totalorder %s97, %s99
      %p106 = scmp.eq.s32.totalorder %s94, 1
      %p107 = por %p105, %p106
      %p108 = scmp.ne.s32.totalorder %s99, %s100
      %p109 = scmp.eq.s32.totalorder %s94, 0
      %p110 = por %p108, %p109
      %p111 = scmp.ne.s32.totalorder %s99, %s100
      %p112 = scmp.eq.s32.totalorder %s95, 1
      %p113 = por %p111, %p112
      %p115 = scmp.ne.s32.totalorder %s100, %s114
      %p116 = scmp.eq.s32.totalorder %s95, 0
      %p117 = por %p115, %p116
      %s119 = sadd.s32 %s118, 1
      %p122 = scmp.eq.s32.totalorder %s89, 1
      %p123 = scmp.ne.s32.totalorder %s118, %s120
      %p124 = scmp.eq.s32.totalorder %s89, 0
      %p125 = por %p123, %p124
      %p126 = scmp.ne.s32.totalorder %s118, %s120
      %p127 = scmp.eq.s32.totalorder %s94, 1
      %p128 = por %p126, %p127
      %p129 = scmp.ne.s32.totalorder %s120, %s121
      %p130 = scmp.eq.s32.totalorder %s94, 0
      %p131 = por %p129, %p130
      %p132 = scmp.ne.s32.totalorder %s120, %s121
      %p133 = scmp.eq.s32.totalorder %s95, 1
      %p134 = por %p132, %p133
      %p136 = scmp.ne.s32.totalorder %s121, %s135
      %p137 = scmp.eq.s32.totalorder %s95, 0
      %p138 = por %p136, %p137
      %s140 = sadd.s32 %s139, 1
      %p143 = scmp.eq.s32.totalorder %s89, 1
      %p144 = scmp.ne.s32.totalorder %s139, %s141
      %p145 = scmp.eq.s32.totalorder %s89, 0
      %p146 = por %p144, %p145
      %p147 = scmp.ne.s32.totalorder %s139, %s141
      %p148 = scmp.eq.s32.totalorder %s94, 1
      %p149 = por %p147, %p148
      %p150 = scmp.ne.s32.totalorder %s141, %s142
      %p151 = scmp.eq.s32.totalorder %s94, 0
      %p152 = por %p150, %p151
      %p153 = scmp.ne.s32.totalorder %s141, %s142
      %p154 = scmp.eq.s32.totalorder %s95, 1
      %p155 = por %p153, %p154
      %p157 = scmp.ne.s32.totalorder %s142, %s156
      %p158 = scmp.eq.s32.totalorder %s95, 0
      %p159 = por %p157, %p158
      %s161 = sadd.s32 %s160, 1
      %p164 = scmp.eq.s32.totalorder %s89, 1
      %p165 = scmp.ne.s32.totalorder %s160, %s162
      %p166 = scmp.eq.s32.totalorder %s89, 0
      %p167 = por %p165, %p166
      %p168 = scmp.ne.s32.totalorder %s160, %s162
      %p169 = scmp.eq.s32.totalorder %s94, 1
      %p170 = por %p168, %p169
      %p171 = scmp.ne.s32.totalorder %s162, %s163
      %p172 = scmp.eq.s32.totalorder %s94, 0
      %p173 = por %p171, %p172
      %p174 = scmp.ne.s32.totalorder %s162, %s163
      %p175 = scmp.eq.s32.totalorder %s95, 1
      %p176 = por %p174, %p175
      %p178 = scmp.ne.s32.totalorder %s163, %s177
      %p179 = scmp.eq.s32.totalorder %s95, 0
      %p180 = por %p178, %p179
      %s182 = sadd.s32 %s181, 1
      %p185 = scmp.eq.s32.totalorder %s89, 1
      %p186 = scmp.ne.s32.totalorder %s181, %s183
      %p187 = scmp.eq.s32.totalorder %s89, 0
      %p188 = por %p186, %p187
      %p189 = scmp.ne.s32.totalorder %s181, %s183
      %p190 = scmp.eq.s32.totalorder %s94, 1
      %p191 = por %p189, %p190
      %p192 = scmp.ne.s32.totalorder %s183, %s184
      %p193 = scmp.eq.s32.totalorder %s94, 0
      %p194 = por %p192, %p193
      %p195 = scmp.ne.s32.totalorder %s183, %s184
      %p196 = scmp.eq.s32.totalorder %s95, 1
      %p197 = por %p195, %p196
      %p199 = scmp.ne.s32.totalorder %s184, %s198
      %p200 = scmp.eq.s32.totalorder %s95, 0
      %p201 = por %p199, %p200
      %s203 = sadd.s32 %s202, 1
      %p206 = scmp.eq.s32.totalorder %s89, 1
      %p207 = scmp.ne.s32.totalorder %s202, %s204
      %p208 = scmp.eq.s32.totalorder %s89, 0
      %p209 = por %p207, %p208
      %p210 = scmp.ne.s32.totalorder %s202, %s204
      %p211 = scmp.eq.s32.totalorder %s94, 1
      %p212 = por %p210, %p211
      %p213 = scmp.ne.s32.totalorder %s204, %s205
      %p214 = scmp.eq.s32.totalorder %s94, 0
      %p215 = por %p213, %p214
      %p216 = scmp.ne.s32.totalorder %s204, %s205
      %p217 = scmp.eq.s32.totalorder %s95, 1
      %p218 = por %p216, %p217
      %p220 = scmp.ne.s32.totalorder %s205, %s219
      %p221 = scmp.eq.s32.totalorder %s95, 0
      %p222 = por %p220, %p221
      %s224 = sadd.s32 %s223, 1
      %p227 = scmp.eq.s32.totalorder %s89, 1
      %p228 = scmp.ne.s32.totalorder %s223, %s225
      %p229 = scmp.eq.s32.totalorder %s89, 0
      %p230 = por %p228, %p229
      %p231 = scmp.ne.s32.totalorder %s223, %s225
      %p232 = scmp.eq.s32.totalorder %s94, 1
      %p233 = por %p231, %p232
      %p234 = scmp.ne.s32.totalorder %s225, %s226
      %p235 = scmp.eq.s32.totalorder %s94, 0
      %p236 = por %p234, %p235
      %p237 = scmp.ne.s32.totalorder %s225, %s226
      %p238 = scmp.eq.s32.totalorder %s95, 1
      %p239 = por %p237, %p238
      %p241 = scmp.ne.s32.totalorder %s226, %s240
      %p242 = scmp.eq.s32.totalorder %s95, 0
      %p243 = por %p241, %p242
      %s245 = sadd.s32 %s244, 1
      %p248 = scmp.eq.s32.totalorder %s89, 1
      %p249 = scmp.ne.s32.totalorder %s244, %s246
      %p250 = scmp.eq.s32.totalorder %s89, 0
      %p251 = por %p249, %p250
      %p252 = scmp.ne.s32.totalorder %s244, %s246
      %p253 = scmp.eq.s32.totalorder %s94, 1
      %p254 = por %p252, %p253
      %p255 = scmp.ne.s32.totalorder %s246, %s247
      %p256 = scmp.eq.s32.totalorder %s94, 0
      %p257 = por %p255, %p256
      %p258 = scmp.ne.s32.totalorder %s246, %s247
      %p259 = scmp.eq.s32.totalorder %s95, 1
      %p260 = por %p258, %p259
      %p262 = scmp.ne.s32.totalorder %s247, %s261
      %p263 = scmp.eq.s32.totalorder %s95, 0
      %p264 = por %p262, %p263
      %s266 = sadd.s32 %s265, 1
      %p269 = scmp.eq.s32.totalorder %s89, 1
      %p270 = scmp.ne.s32.totalorder %s265, %s267
      %p271 = scmp.eq.s32.totalorder %s89, 0
      %p272 = por %p270, %p271
      %p273 = scmp.ne.s32.totalorder %s265, %s267
      %p274 = scmp.eq.s32.totalorder %s94, 1
      %p275 = por %p273, %p274
      %p276 = scmp.ne.s32.totalorder %s267, %s268
      %p277 = scmp.eq.s32.totalorder %s94, 0
      %p278 = por %p276, %p277
      %p279 = scmp.ne.s32.totalorder %s267, %s268
      %p280 = scmp.eq.s32.totalorder %s95, 1
      %p281 = por %p279, %p280
      %p283 = scmp.ne.s32.totalorder %s268, %s282
      %p284 = scmp.eq.s32.totalorder %s95, 0
      %p285 = por %p283, %p284
      %s287 = sadd.s32 %s286, 1
      %p290 = scmp.eq.s32.totalorder %s89, 1
      %p291 = scmp.ne.s32.totalorder %s286, %s288
      %p292 = scmp.eq.s32.totalorder %s89, 0
      %p293 = por %p291, %p292
      %p294 = scmp.ne.s32.totalorder %s286, %s288
      %p295 = scmp.eq.s32.totalorder %s94, 1
      %p296 = por %p294, %p295
      %p297 = scmp.ne.s32.totalorder %s288, %s289
      %p298 = scmp.eq.s32.totalorder %s94, 0
      %p299 = por %p297, %p298
      %p300 = scmp.ne.s32.totalorder %s288, %s289
      %p301 = scmp.eq.s32.totalorder %s95, 1
      %p302 = por %p300, %p301
      %p304 = scmp.ne.s32.totalorder %s289, %s303
      %p305 = scmp.eq.s32.totalorder %s95, 0
      %p306 = por %p304, %p305
      %s308 = sadd.s32 %s307, 1
      %p311 = scmp.eq.s32.totalorder %s89, 1
      %p312 = scmp.ne.s32.totalorder %s307, %s309
      %p313 = scmp.eq.s32.totalorder %s89, 0
      %p314 = por %p312, %p313
      %p315 = scmp.ne.s32.totalorder %s307, %s309
      %p316 = scmp.eq.s32.totalorder %s94, 1
      %p317 = por %p315, %p316
      %p318 = scmp.ne.s32.totalorder %s309, %s310
      %p319 = scmp.eq.s32.totalorder %s94, 0
      %p320 = por %p318, %p319
      %p321 = scmp.ne.s32.totalorder %s309, %s310
      %p322 = scmp.eq.s32.totalorder %s95, 1
      %p323 = por %p321, %p322
      %p325 = scmp.ne.s32.totalorder %s310, %s324
      %p326 = scmp.eq.s32.totalorder %s95, 0
      %p327 = por %p325, %p326
      %s329 = sadd.s32 %s328, 1
      %p332 = scmp.eq.s32.totalorder %s89, 1
      %p333 = scmp.ne.s32.totalorder %s328, %s330
      %p334 = scmp.eq.s32.totalorder %s89, 0
      %p335 = por %p333, %p334
      %p336 = scmp.ne.s32.totalorder %s328, %s330
      %p337 = scmp.eq.s32.totalorder %s94, 1
      %p338 = por %p336, %p337
      %p339 = scmp.ne.s32.totalorder %s330, %s331
      %p340 = scmp.eq.s32.totalorder %s94, 0
      %p341 = por %p339, %p340
      %p342 = scmp.ne.s32.totalorder %s330, %s331
      %p343 = scmp.eq.s32.totalorder %s95, 1
      %p344 = por %p342, %p343
      %p346 = scmp.ne.s32.totalorder %s331, %s345
      %p347 = scmp.eq.s32.totalorder %s95, 0
      %p348 = por %p346, %p347
      %s350 = sadd.s32 %s349, 1
      %p353 = scmp.eq.s32.totalorder %s89, 1
      %p354 = scmp.ne.s32.totalorder %s349, %s351
      %p355 = scmp.eq.s32.totalorder %s89, 0
      %p356 = por %p354, %p355
      %p357 = scmp.ne.s32.totalorder %s349, %s351
      %p358 = scmp.eq.s32.totalorder %s94, 1
      %p359 = por %p357, %p358
      %p360 = scmp.ne.s32.totalorder %s351, %s352
      %p361 = scmp.eq.s32.totalorder %s94, 0
      %p362 = por %p360, %p361
      %p363 = scmp.ne.s32.totalorder %s351, %s352
      %p364 = scmp.eq.s32.totalorder %s95, 1
      %p365 = por %p363, %p364
      %p367 = scmp.ne.s32.totalorder %s352, %s366
      %p368 = scmp.eq.s32.totalorder %s95, 0
      %p369 = por %p367, %p368
      %s371 = sadd.s32 %s370, 1
      %p374 = scmp.eq.s32.totalorder %s89, 1
      %p375 = scmp.ne.s32.totalorder %s370, %s372
      %p376 = scmp.eq.s32.totalorder %s89, 0
      %p377 = por %p375, %p376
      %p378 = scmp.ne.s32.totalorder %s370, %s372
      %p379 = scmp.eq.s32.totalorder %s94, 1
      %p380 = por %p378, %p379
      %p381 = scmp.ne.s32.totalorder %s372, %s373
      %p382 = scmp.eq.s32.totalorder %s94, 0
      %p383 = por %p381, %p382
      %p384 = scmp.ne.s32.totalorder %s372, %s373
      %p385 = scmp.eq.s32.totalorder %s95, 1
      %p386 = por %p384, %p385
      %p388 = scmp.ne.s32.totalorder %s373, %s387
      %p389 = scmp.eq.s32.totalorder %s95, 0
      %p390 = por %p388, %p389
      %s392 = sadd.s32 %s391, 1
      %p395 = scmp.eq.s32.totalorder %s89, 1
      %p396 = scmp.ne.s32.totalorder %s391, %s393
      %p397 = scmp.eq.s32.totalorder %s89, 0
      %p398 = por %p396, %p397
      %p399 = scmp.ne.s32.totalorder %s391, %s393
      %p400 = scmp.eq.s32.totalorder %s94, 1
      %p401 = por %p399, %p400
      %p402 = scmp.ne.s32.totalorder %s393, %s394
      %p403 = scmp.eq.s32.totalorder %s94, 0
      %p404 = por %p402, %p403
      %p405 = scmp.ne.s32.totalorder %s393, %s394
      %p406 = scmp.eq.s32.totalorder %s95, 1
      %p407 = por %p405, %p406
      %p409 = scmp.ne.s32.totalorder %s394, %s408
      %p410 = scmp.eq.s32.totalorder %s95, 0
      %p411 = por %p409, %p410
      %s413 = sadd.s32 %s412, 1
      %p416 = scmp.eq.s32.totalorder %s89, 1
      %p417 = scmp.ne.s32.totalorder %s412, %s414
      %p418 = scmp.eq.s32.totalorder %s89, 0
      %p419 = por %p417, %p418
      %p420 = scmp.ne.s32.totalorder %s412, %s414
      %p421 = scmp.eq.s32.totalorder %s94, 1
      %p422 = por %p420, %p421
      %p423 = scmp.ne.s32.totalorder %s414, %s415
      %p424 = scmp.eq.s32.totalorder %s94, 0
      %p425 = por %p423, %p424
      %p426 = scmp.ne.s32.totalorder %s414, %s415
      %p427 = scmp.eq.s32.totalorder %s95, 1
      %p428 = por %p426, %p427
      %p430 = scmp.ne.s32.totalorder %s415, %s429
      %p431 = scmp.eq.s32.totalorder %s95, 0
      %p432 = por %p430, %p431
      %s434 = sadd.s32 %s433, 1
      %p437 = scmp.eq.s32.totalorder %s89, 1
      %p438 = scmp.ne.s32.totalorder %s433, %s435
      %p439 = scmp.eq.s32.totalorder %s89, 0
      %p440 = por %p438, %p439
      %p441 = scmp.ne.s32.totalorder %s433, %s435
      %p442 = scmp.eq.s32.totalorder %s94, 1
      %p443 = por %p441, %p442
      %p444 = scmp.ne.s32.totalorder %s435, %s436
      %p445 = scmp.eq.s32.totalorder %s94, 0
      %p446 = por %p444, %p445
      %p447 = scmp.ne.s32.totalorder %s435, %s436
      %p448 = scmp.eq.s32.totalorder %s95, 1
      %p449 = por %p447, %p448
      %p451 = scmp.ne.s32.totalorder %s436, %s450
      %p452 = scmp.eq.s32.totalorder %s95, 0
      %p453 = por %p451, %p452
      %s455 = sadd.s32 %s454, 1
      %p458 = scmp.eq.s32.totalorder %s89, 1
      %p459 = scmp.ne.s32.totalorder %s454, %s456
      %p460 = scmp.eq.s32.totalorder %s89, 0
      %p461 = por %p459, %p460
      %p462 = scmp.ne.s32.totalorder %s454, %s456
      %p463 = scmp.eq.s32.totalorder %s94, 1
      %p464 = por %p462, %p463
      %p465 = scmp.ne.s32.totalorder %s456, %s457
      %p466 = scmp.eq.s32.totalorder %s94, 0
      %p467 = por %p465, %p466
      %p468 = scmp.ne.s32.totalorder %s456, %s457
      %p469 = scmp.eq.s32.totalorder %s95, 1
      %p470 = por %p468, %p469
      %p472 = scmp.ne.s32.totalorder %s457, %s471
      %p473 = scmp.eq.s32.totalorder %s95, 0
      %p474 = por %p472, %p473
      %s476 = sadd.s32 %s475, 1
      %p479 = scmp.eq.s32.totalorder %s89, 1
      %p480 = scmp.ne.s32.totalorder %s475, %s477
      %p481 = scmp.eq.s32.totalorder %s89, 0
      %p482 = por %p480, %p481
      %p483 = scmp.ne.s32.totalorder %s475, %s477
      %p484 = scmp.eq.s32.totalorder %s94, 1
      %p485 = por %p483, %p484
      %p486 = scmp.ne.s32.totalorder %s477, %s478
      %p487 = scmp.eq.s32.totalorder %s94, 0
      %p488 = por %p486, %p487
      %p489 = scmp.ne.s32.totalorder %s477, %s478
      %p490 = scmp.eq.s32.totalorder %s95, 1
      %p491 = por %p489, %p490
      %p493 = scmp.ne.s32.totalorder %s478, %s492
      %p494 = scmp.eq.s32.totalorder %s95, 0
      %p495 = por %p493, %p494
      %s497 = sadd.s32 %s496, 1
      %p500 = scmp.eq.s32.totalorder %s89, 1
      %p501 = scmp.ne.s32.totalorder %s496, %s498
      %p502 = scmp.eq.s32.totalorder %s89, 0
      %p503 = por %p501, %p502
      %p504 = scmp.ne.s32.totalorder %s496, %s498
      %p505 = scmp.eq.s32.totalorder %s94, 1
      %p506 = por %p504, %p505
      %p507 = scmp.ne.s32.totalorder %s498, %s499
      %p508 = scmp.eq.s32.totalorder %s94, 0
      %p509 = por %p507, %p508
      %p510 = scmp.ne.s32.totalorder %s498, %s499
      %p511 = scmp.eq.s32.totalorder %s95, 1
      %p512 = por %p510, %p511
      %p514 = scmp.ne.s32.totalorder %s499, %s513
      %p515 = scmp.eq.s32.totalorder %s95, 0
      %p516 = por %p514, %p515
      %s518 = sadd.s32 %s517, 1
      %p521 = scmp.eq.s32.totalorder %s89, 1
      %p522 = scmp.ne.s32.totalorder %s517, %s519
      %p523 = scmp.eq.s32.totalorder %s89, 0
      %p524 = por %p522, %p523
      %p525 = scmp.ne.s32.totalorder %s517, %s519
      %p526 = scmp.eq.s32.totalorder %s94, 1
      %p527 = por %p525, %p526
      %p528 = scmp.ne.s32.totalorder %s519, %s520
      %p529 = scmp.eq.s32.totalorder %s94, 0
      %p530 = por %p528, %p529
      %p531 = scmp.ne.s32.totalorder %s519, %s520
      %p532 = scmp.eq.s32.totalorder %s95, 1
      %p533 = por %p531, %p532
      %p535 = scmp.ne.s32.totalorder %s520, %s534
      %p536 = scmp.eq.s32.totalorder %s95, 0
      %p537 = por %p535, %p536
      %s539 = sadd.s32 %s538, 1
      %p542 = scmp.eq.s32.totalorder %s89, 1
      %p543 = scmp.ne.s32.totalorder %s538, %s540
      %p544 = scmp.eq.s32.totalorder %s89, 0
      %p545 = por %p543, %p544
      %p546 = scmp.ne.s32.totalorder %s538, %s540
      %p547 = scmp.eq.s32.totalorder %s94, 1
      %p548 = por %p546, %p547
      %p549 = scmp.ne.s32.totalorder %s540, %s541
      %p550 = scmp.eq.s32.totalorder %s94, 0
      %p551 = por %p549, %p550
      %p552 = scmp.ne.s32.totalorder %s540, %s541
      %p553 = scmp.eq.s32.totalorder %s95, 1
      %p554 = por %p552, %p553
      %p556 = scmp.ne.s32.totalorder %s541, %s555
      %p557 = scmp.eq.s32.totalorder %s95, 0
      %p558 = por %p556, %p557
      %s560 = sadd.s32 %s559, 1
      %p563 = scmp.eq.s32.totalorder %s89, 1
      %p564 = scmp.ne.s32.totalorder %s559, %s561
      %p565 = scmp.eq.s32.totalorder %s89, 0
      %p566 = por %p564, %p565
      %p567 = scmp.ne.s32.totalorder %s559, %s561
      %p568 = scmp.eq.s32.totalorder %s94, 1
      %p569 = por %p567, %p568
      %p570 = scmp.ne.s32.totalorder %s561, %s562
      %p571 = scmp.eq.s32.totalorder %s94, 0
      %p572 = por %p570, %p571
      %p573 = scmp.ne.s32.totalorder %s561, %s562
      %p574 = scmp.eq.s32.totalorder %s95, 1
      %p575 = por %p573, %p574
      %p577 = scmp.ne.s32.totalorder %s562, %s576
      %p578 = scmp.eq.s32.totalorder %s95, 0
      %p579 = por %p577, %p578
      %s581 = sadd.s32 %s580, 1
      %p584 = scmp.eq.s32.totalorder %s89, 1
      %p585 = scmp.ne.s32.totalorder %s580, %s582
      %p586 = scmp.eq.s32.totalorder %s89, 0
      %p587 = por %p585, %p586
      %p588 = scmp.ne.s32.totalorder %s580, %s582
      %p589 = scmp.eq.s32.totalorder %s94, 1
      %p590 = por %p588, %p589
      %p591 = scmp.ne.s32.totalorder %s582, %s583
      %p592 = scmp.eq.s32.totalorder %s94, 0
      %p593 = por %p591, %p592
      %p594 = scmp.ne.s32.totalorder %s582, %s583
      %p595 = scmp.eq.s32.totalorder %s95, 1
      %p596 = por %p594, %p595
      %p598 = scmp.ne.s32.totalorder %s583, %s597
      %p599 = scmp.eq.s32.totalorder %s95, 0
      %p600 = por %p598, %p599
      %s602 = sadd.s32 %s601, 1
      %p605 = scmp.eq.s32.totalorder %s89, 1
      %p606 = scmp.ne.s32.totalorder %s601, %s603
      %p607 = scmp.eq.s32.totalorder %s89, 0
      %p608 = por %p606, %p607
      %p609 = scmp.ne.s32.totalorder %s601, %s603
      %p610 = scmp.eq.s32.totalorder %s94, 1
      %p611 = por %p609, %p610
      %p612 = scmp.ne.s32.totalorder %s603, %s604
      %p613 = scmp.eq.s32.totalorder %s94, 0
      %p614 = por %p612, %p613
      %p615 = scmp.ne.s32.totalorder %s603, %s604
      %p616 = scmp.eq.s32.totalorder %s95, 1
      %p617 = por %p615, %p616
      %p619 = scmp.ne.s32.totalorder %s604, %s618
      %p620 = scmp.eq.s32.totalorder %s95, 0
      %p621 = por %p619, %p620
      %s623 = sadd.s32 %s622, 1
      %p626 = scmp.eq.s32.totalorder %s89, 1
      %p627 = scmp.ne.s32.totalorder %s622, %s624
      %p628 = scmp.eq.s32.totalorder %s89, 0
      %p629 = por %p627, %p628
      %p630 = scmp.ne.s32.totalorder %s622, %s624
      %p631 = scmp.eq.s32.totalorder %s94, 1
      %p632 = por %p630, %p631
      %p633 = scmp.ne.s32.totalorder %s624, %s625
      %p634 = scmp.eq.s32.totalorder %s94, 0
      %p635 = por %p633, %p634
      %p636 = scmp.ne.s32.totalorder %s624, %s625
      %p637 = scmp.eq.s32.totalorder %s95, 1
      %p638 = por %p636, %p637
      %p640 = scmp.ne.s32.totalorder %s625, %s639
      %p641 = scmp.eq.s32.totalorder %s95, 0
      %p642 = por %p640, %p641
      %s644 = sadd.s32 %s643, 1
      %p647 = scmp.eq.s32.totalorder %s89, 1
      %p648 = scmp.ne.s32.totalorder %s643, %s645
      %p649 = scmp.eq.s32.totalorder %s89, 0
      %p650 = por %p648, %p649
      %p651 = scmp.ne.s32.totalorder %s643, %s645
      %p652 = scmp.eq.s32.totalorder %s94, 1
      %p653 = por %p651, %p652
      %p654 = scmp.ne.s32.totalorder %s645, %s646
      %p655 = scmp.eq.s32.totalorder %s94, 0
      %p656 = por %p654, %p655
      %p657 = scmp.ne.s32.totalorder %s645, %s646
      %p658 = scmp.eq.s32.totalorder %s95, 1
      %p659 = por %p657, %p658
      %p661 = scmp.ne.s32.totalorder %s646, %s660
      %p662 = scmp.eq.s32.totalorder %s95, 0
      %p663 = por %p661, %p662
      %s665 = sadd.s32 %s664, 1
      %p668 = scmp.eq.s32.totalorder %s89, 1
      %p669 = scmp.ne.s32.totalorder %s664, %s666
      %p670 = scmp.eq.s32.totalorder %s89, 0
      %p671 = por %p669, %p670
      %p672 = scmp.ne.s32.totalorder %s664, %s666
      %p673 = scmp.eq.s32.totalorder %s94, 1
      %p674 = por %p672, %p673
      %p675 = scmp.ne.s32.totalorder %s666, %s667
      %p676 = scmp.eq.s32.totalorder %s94, 0
      %p677 = por %p675, %p676
      %p678 = scmp.ne.s32.totalorder %s666, %s667
      %p679 = scmp.eq.s32.totalorder %s95, 1
      %p680 = por %p678, %p679
      %p682 = scmp.ne.s32.totalorder %s667, %s681
      %p683 = scmp.eq.s32.totalorder %s95, 0
      %p684 = por %p682, %p683
      %s686 = sadd.s32 %s685, 1
      %p689 = scmp.eq.s32.totalorder %s89, 1
      %p690 = scmp.ne.s32.totalorder %s685, %s687
      %p691 = scmp.eq.s32.totalorder %s89, 0
      %p692 = por %p690, %p691
      %p693 = scmp.ne.s32.totalorder %s685, %s687
      %p694 = scmp.eq.s32.totalorder %s94, 1
      %p695 = por %p693, %p694
      %p696 = scmp.ne.s32.totalorder %s687, %s688
      %p697 = scmp.eq.s32.totalorder %s94, 0
      %p698 = por %p696, %p697
      %p699 = scmp.ne.s32.totalorder %s687, %s688
      %p700 = scmp.eq.s32.totalorder %s95, 1
      %p701 = por %p699, %p700
      %p703 = scmp.ne.s32.totalorder %s688, %s702
      %p704 = scmp.eq.s32.totalorder %s95, 0
      %p705 = por %p703, %p704
      %s707 = sadd.s32 %s706, 1
      %p710 = scmp.eq.s32.totalorder %s89, 1
      %p711 = scmp.ne.s32.totalorder %s706, %s708
      %p712 = scmp.eq.s32.totalorder %s89, 0
      %p713 = por %p711, %p712
      %p714 = scmp.ne.s32.totalorder %s706, %s708
      %p715 = scmp.eq.s32.totalorder %s94, 1
      %p716 = por %p714, %p715
      %p717 = scmp.ne.s32.totalorder %s708, %s709
      %p718 = scmp.eq.s32.totalorder %s94, 0
      %p719 = por %p717, %p718
      %p720 = scmp.ne.s32.totalorder %s708, %s709
      %p721 = scmp.eq.s32.totalorder %s95, 1
      %p722 = por %p720, %p721
      %p724 = scmp.ne.s32.totalorder %s709, %s723
      %p725 = scmp.eq.s32.totalorder %s95, 0
      %p726 = por %p724, %p725
      %s727 = ssub.s32 %s89, %s96
      %p728 = scmp.eq.s32.totalorder %s727, 0
      %s730 = sadd.s32 %s729, 1
      %s731 = scalar_select %p728, %s729, %s730
      %p734 = pneg %p728
      %p735 = scmp.eq.s32.totalorder %s89, 1
      %p736 = por %p734, %p735
      %p737 = scmp.ne.s32.totalorder %s729, %s732
      %p738 = scmp.eq.s32.totalorder %s89, 0
      %p739 = por %p737, %p738
      %p740 = scmp.ne.s32.totalorder %s729, %s732
      %p741 = scmp.eq.s32.totalorder %s94, 1
      %p742 = por %p740, %p741
      %p743 = scmp.ne.s32.totalorder %s732, %s733
      %p744 = scmp.eq.s32.totalorder %s94, 0
      %p745 = por %p743, %p744
      %p746 = scmp.ne.s32.totalorder %s732, %s733
      %p747 = scmp.eq.s32.totalorder %s95, 1
      %p748 = por %p746, %p747
      %p750 = scmp.ne.s32.totalorder %s733, %s749
      %p751 = scmp.eq.s32.totalorder %s95, 0
      %p752 = por %p750, %p751
      %p753 = scmp.le.s32.totalorder 1, %s89
      %p754 = scmp.lt.s32.totalorder %s89, 3
      %p755 = pnand %p753, %p754
      %p756 = pneg %p755
      // Predicated region
      $region9: #{transformer_forward.1} parent=5 // pred_check
        _
      $region10: #{transformer_forward.1} parent=5 // pred_check_branch
        %758 = sbr.rel (%p755) target = $region12
      $region11: #{transformer_forward.1} parent=5 // pred_region
        %s759 = ssub.s32 %s89, 1
        // Predicated region
        $region13: #{transformer_forward.1} parent=11 // pred_check
          %p760 = pneg %p110
        $region14: #{transformer_forward.1} parent=11 // pred_check_branch
          %762 = sbr.rel (%p760) target = $region16
        $region15: #{transformer_forward.1} parent=11 // pred_region
          _
        $region16: #{transformer_forward.1} parent=11 // pred_fallthru
          _
        // Predicated region
        $region17: #{transformer_forward.1} parent=11 // pred_check
          %p763 = pneg %p131
        $region18: #{transformer_forward.1} parent=11 // pred_check_branch
          %765 = sbr.rel (%p763) target = $region20
        $region19: #{transformer_forward.1} parent=11 // pred_region
          %s767 = ssub.s32 128, 128
          %768 = vsyncadd [#allocation5], %s767
          %s770 = sshll.u32 [#allocation4], 4
          %s771 = int_to_ptr.vmem [resolvable:$true] %s770
          %773 = dma.hbm_to_vmem [thread:$0]  %s5, 128, %s771, [#allocation5]
        $region20: #{transformer_forward.1} parent=11 // pred_fallthru
          _
        // Predicated region
        $region21: #{transformer_forward.1} parent=11 // pred_check
          %p774 = pneg %p152
        $region22: #{transformer_forward.1} parent=11 // pred_check_branch
          %776 = sbr.rel (%p774) target = $region24
        $region23: #{transformer_forward.1} parent=11 // pred_region
          _
        $region24: #{transformer_forward.1} parent=11 // pred_fallthru
          _
        // Predicated region
        $region25: #{transformer_forward.1} parent=11 // pred_check
          %p777 = pneg %p173
        $region26: #{transformer_forward.1} parent=11 // pred_check_branch
          %779 = sbr.rel (%p777) target = $region28
        $region27: #{transformer_forward.1} parent=11 // pred_region
          %s781 = ssub.s32 16, 16
          %782 = vsyncadd [#allocation7], %s781
          %s784 = sshll.u32 [#allocation6], 4
          %s785 = int_to_ptr.vmem [resolvable:$true] %s784
          %787 = dma.hbm_to_vmem [thread:$0]  %s9, 16, %s785, [#allocation7]
        $region28: #{transformer_forward.1} parent=11 // pred_fallthru
          _
        // Predicated region
        $region29: #{transformer_forward.1} parent=11 // pred_check
          %p788 = pneg %p194
        $region30: #{transformer_forward.1} parent=11 // pred_check_branch
          %790 = sbr.rel (%p788) target = $region32
        $region31: #{transformer_forward.1} parent=11 // pred_region
          %s792 = ssub.s32 3072, 3072
          %793 = vsyncadd [#allocation7], %s792
          %s794 = sshll.u32 [#allocation8], 4
          %s795 = int_to_ptr.vmem [resolvable:$true] %s794
          %800 = dma.hbm_to_vmem [thread:$0]  %s11, 3072, %s795, [#allocation7], 192, 192, 12
        $region32: #{transformer_forward.1} parent=11 // pred_fallthru
          _
        // Predicated region
        $region33: #{transformer_forward.1} parent=11 // pred_check
          %p801 = pneg %p215
        $region34: #{transformer_forward.1} parent=11 // pred_check_branch
          %803 = sbr.rel (%p801) target = $region36
        $region35: #{transformer_forward.1} parent=11 // pred_region
          %s805 = ssub.s32 48, 48
          %806 = vsyncadd [#allocation10], %s805
          %s808 = sshll.u32 [#allocation9], 4
          %s809 = int_to_ptr.vmem [resolvable:$true] %s808
          %811 = dma.hbm_to_vmem [thread:$0]  %s13, 48, %s809, [#allocation10]
        $region36: #{transformer_forward.1} parent=11 // pred_fallthru
          _
        // Predicated region
        $region37: #{transformer_forward.1} parent=11 // pred_check
          %p812 = pneg %p236
        $region38: #{transformer_forward.1} parent=11 // pred_check_branch
          %814 = sbr.rel (%p812) target = $region40
        $region39: #{transformer_forward.1} parent=11 // pred_region
          %s816 = ssub.s32 1024, 1024
          %817 = vsyncadd [#allocation10], %s816
          %s818 = sshll.u32 [#allocation11], 4
          %s819 = int_to_ptr.vmem [resolvable:$true] %s818
          %824 = dma.hbm_to_vmem [thread:$0]  %s15, 1024, %s819, [#allocation10], 64, 64, 4
        $region40: #{transformer_forward.1} parent=11 // pred_fallthru
          _
        // Predicated region
        $region41: #{transformer_forward.1} parent=11 // pred_check
          %p825 = pneg %p257
        $region42: #{transformer_forward.1} parent=11 // pred_check_branch
          %827 = sbr.rel (%p825) target = $region44
        $region43: #{transformer_forward.1} parent=11 // pred_region
          %s829 = ssub.s32 16, 16
          %830 = vsyncadd [#allocation13], %s829
          %s832 = sshll.u32 [#allocation12], 4
          %s833 = int_to_ptr.vmem [resolvable:$true] %s832
          %835 = dma.hbm_to_vmem [thread:$0]  %s17, 16, %s833, [#allocation13]
        $region44: #{transformer_forward.1} parent=11 // pred_fallthru
          _
        // Predicated region
        $region45: #{transformer_forward.1} parent=11 // pred_check
          %p836 = pneg %p278
        $region46: #{transformer_forward.1} parent=11 // pred_check_branch
          %838 = sbr.rel (%p836) target = $region48
        $region47: #{transformer_forward.1} parent=11 // pred_region
          %s840 = ssub.s32 16, 16
          %841 = vsyncadd [#allocation13], %s840
          %s843 = sshll.u32 [#allocation14], 4
          %s844 = int_to_ptr.vmem [resolvable:$true] %s843
          %846 = dma.hbm_to_vmem [thread:$0]  %s19, 16, %s844, [#allocation13]
        $region48: #{transformer_forward.1} parent=11 // pred_fallthru
          _
        // Predicated region
        $region49: #{transformer_forward.1} parent=11 // pred_check
          %p847 = pneg %p299
        $region50: #{transformer_forward.1} parent=11 // pred_check_branch
          %849 = sbr.rel (%p847) target = $region52
        $region51: #{transformer_forward.1} parent=11 // pred_region
          %s851 = ssub.s32 16, 16
          %852 = vsyncadd [#allocation16], %s851
          %s854 = sshll.u32 [#allocation15], 4
          %s855 = int_to_ptr.vmem [resolvable:$true] %s854
          %857 = dma.hbm_to_vmem [thread:$0]  %s21, 16, %s855, [#allocation16]
        $region52: #{transformer_forward.1} parent=11 // pred_fallthru
          _
        // Predicated region
        $region53: #{transformer_forward.1} parent=11 // pred_check
          %p858 = pneg %p320
        $region54: #{transformer_forward.1} parent=11 // pred_check_branch
          %860 = sbr.rel (%p858) target = $region56
        $region55: #{transformer_forward.1} parent=11 // pred_region
          %s862 = ssub.s32 4096, 4096
          %863 = vsyncadd [#allocation16], %s862
          %s864 = sshll.u32 [#allocation17], 4
          %s865 = int_to_ptr.vmem [resolvable:$true] %s864
          %870 = dma.hbm_to_vmem [thread:$0]  %s23, 4096, %s865, [#allocation16], 256, 256, 16
        $region56: #{transformer_forward.1} parent=11 // pred_fallthru
          _
        // Predicated region
        $region57: #{transformer_forward.1} parent=11 // pred_check
          %p871 = pneg %p341
        $region58: #{transformer_forward.1} parent=11 // pred_check_branch
          %873 = sbr.rel (%p871) target = $region60
        $region59: #{transformer_forward.1} parent=11 // pred_region
          _
        $region60: #{transformer_forward.1} parent=11 // pred_fallthru
          _
        // Predicated region
        $region61: #{transformer_forward.1} parent=11 // pred_check
          %p874 = pneg %p362
        $region62: #{transformer_forward.1} parent=11 // pred_check_branch
          %876 = sbr.rel (%p874) target = $region64
        $region63: #{transformer_forward.1} parent=11 // pred_region
          %s878 = ssub.s32 4096, 4096
          %879 = vsyncadd [#allocation19], %s878
          %s880 = sshll.u32 [#allocation18], 4
          %s881 = int_to_ptr.vmem [resolvable:$true] %s880
          %886 = dma.hbm_to_vmem [thread:$0]  %s27, 4096, %s881, [#allocation19], 64, 64, 4
        $region64: #{transformer_forward.1} parent=11 // pred_fallthru
          _
        // Predicated region
        $region65: #{transformer_forward.1} parent=11 // pred_check
          %p887 = pneg %p383
        $region66: #{transformer_forward.1} parent=11 // pred_check_branch
          %889 = sbr.rel (%p887) target = $region68
        $region67: #{transformer_forward.1} parent=11 // pred_region
          %s891 = ssub.s32 16, 16
          %892 = vsyncadd [#allocation19], %s891
          %s894 = sshll.u32 [#allocation20], 4
          %s895 = int_to_ptr.vmem [resolvable:$true] %s894
          %897 = dma.hbm_to_vmem [thread:$0]  %s29, 16, %s895, [#allocation19]
        $region68: #{transformer_forward.1} parent=11 // pred_fallthru
          _
        // Predicated region
        $region69: #{transformer_forward.1} parent=11 // pred_check
          %p898 = pneg %p404
        $region70: #{transformer_forward.1} parent=11 // pred_check_branch
          %900 = sbr.rel (%p898) target = $region72
        $region71: #{transformer_forward.1} parent=11 // pred_region
          %s902 = ssub.s32 16, 16
          %903 = vsyncadd [#allocation22], %s902
          %s905 = sshll.u32 [#allocation21], 4
          %s906 = int_to_ptr.vmem [resolvable:$true] %s905
          %908 = dma.hbm_to_vmem [thread:$0]  %s31, 16, %s906, [#allocation22]
        $region72: #{transformer_forward.1} parent=11 // pred_fallthru
          _
        // Predicated region
        $region73: #{transformer_forward.1} parent=11 // pred_check
          %p909 = pneg %p425
        $region74: #{transformer_forward.1} parent=11 // pred_check_branch
          %911 = sbr.rel (%p909) target = $region76
        $region75: #{transformer_forward.1} parent=11 // pred_region
          %s913 = ssub.s32 16, 16
          %914 = vsyncadd [#allocation22], %s913
          %s916 = sshll.u32 [#allocation23], 4
          %s917 = int_to_ptr.vmem [resolvable:$true] %s916
          %919 = dma.hbm_to_vmem [thread:$0]  %s33, 16, %s917, [#allocation22]
        $region76: #{transformer_forward.1} parent=11 // pred_fallthru
          _
        // Predicated region
        $region77: #{transformer_forward.1} parent=11 // pred_check
          %p920 = pneg %p446
        $region78: #{transformer_forward.1} parent=11 // pred_check_branch
          %922 = sbr.rel (%p920) target = $region80
        $region79: #{transformer_forward.1} parent=11 // pred_region
          %s924 = ssub.s32 3072, 3072
          %925 = vsyncadd [#allocation25], %s924
          %s926 = sshll.u32 [#allocation24], 4
          %s927 = int_to_ptr.vmem [resolvable:$true] %s926
          %932 = dma.hbm_to_vmem [thread:$0]  %s35, 3072, %s927, [#allocation25], 192, 192, 12
        $region80: #{transformer_forward.1} parent=11 // pred_fallthru
          _
        // Predicated region
        $region81: #{transformer_forward.1} parent=11 // pred_check
          %p933 = pneg %p467
        $region82: #{transformer_forward.1} parent=11 // pred_check_branch
          %935 = sbr.rel (%p933) target = $region84
        $region83: #{transformer_forward.1} parent=11 // pred_region
          %s937 = ssub.s32 48, 48
          %938 = vsyncadd [#allocation25], %s937
          %s940 = sshll.u32 [#allocation26], 4
          %s941 = int_to_ptr.vmem [resolvable:$true] %s940
          %943 = dma.hbm_to_vmem [thread:$0]  %s37, 48, %s941, [#allocation25]
        $region84: #{transformer_forward.1} parent=11 // pred_fallthru
          _
        // Predicated region
        $region85: #{transformer_forward.1} parent=11 // pred_check
          %p944 = pneg %p488
        $region86: #{transformer_forward.1} parent=11 // pred_check_branch
          %946 = sbr.rel (%p944) target = $region88
        $region87: #{transformer_forward.1} parent=11 // pred_region
          %s948 = ssub.s32 1024, 1024
          %949 = vsyncadd [#allocation28], %s948
          %s950 = sshll.u32 [#allocation27], 4
          %s951 = int_to_ptr.vmem [resolvable:$true] %s950
          %956 = dma.hbm_to_vmem [thread:$0]  %s39, 1024, %s951, [#allocation28], 64, 64, 4
        $region88: #{transformer_forward.1} parent=11 // pred_fallthru
          _
        // Predicated region
        $region89: #{transformer_forward.1} parent=11 // pred_check
          %p957 = pneg %p509
        $region90: #{transformer_forward.1} parent=11 // pred_check_branch
          %959 = sbr.rel (%p957) target = $region92
        $region91: #{transformer_forward.1} parent=11 // pred_region
          %s961 = ssub.s32 16, 16
          %962 = vsyncadd [#allocation28], %s961
          %s964 = sshll.u32 [#allocation29], 4
          %s965 = int_to_ptr.vmem [resolvable:$true] %s964
          %967 = dma.hbm_to_vmem [thread:$0]  %s41, 16, %s965, [#allocation28]
        $region92: #{transformer_forward.1} parent=11 // pred_fallthru
          _
        // Predicated region
        $region93: #{transformer_forward.1} parent=11 // pred_check
          %p968 = pneg %p530
        $region94: #{transformer_forward.1} parent=11 // pred_check_branch
          %970 = sbr.rel (%p968) target = $region96
        $region95: #{transformer_forward.1} parent=11 // pred_region
          %s972 = ssub.s32 16, 16
          %973 = vsyncadd [#allocation31], %s972
          %s975 = sshll.u32 [#allocation30], 4
          %s976 = int_to_ptr.vmem [resolvable:$true] %s975
          %978 = dma.hbm_to_vmem [thread:$0]  %s43, 16, %s976, [#allocation31]
        $region96: #{transformer_forward.1} parent=11 // pred_fallthru
          _
        // Predicated region
        $region97: #{transformer_forward.1} parent=11 // pred_check
          %p979 = pneg %p551
        $region98: #{transformer_forward.1} parent=11 // pred_check_branch
          %981 = sbr.rel (%p979) target = $region100
        $region99: #{transformer_forward.1} parent=11 // pred_region
          %s983 = ssub.s32 16, 16
          %984 = vsyncadd [#allocation31], %s983
          %s986 = sshll.u32 [#allocation32], 4
          %s987 = int_to_ptr.vmem [resolvable:$true] %s986
          %989 = dma.hbm_to_vmem [thread:$0]  %s45, 16, %s987, [#allocation31]
        $region100: #{transformer_forward.1} parent=11 // pred_fallthru
          _
        // Predicated region
        $region101: #{transformer_forward.1} parent=11 // pred_check
          %p990 = pneg %p572
        $region102: #{transformer_forward.1} parent=11 // pred_check_branch
          %992 = sbr.rel (%p990) target = $region104
        $region103: #{transformer_forward.1} parent=11 // pred_region
          %s994 = ssub.s32 4096, 4096
          %995 = vsyncadd [#allocation34], %s994
          %s996 = sshll.u32 [#allocation33], 4
          %s997 = int_to_ptr.vmem [resolvable:$true] %s996
          %1002 = dma.hbm_to_vmem [thread:$0]  %s47, 4096, %s997, [#allocation34], 256, 256, 16
        $region104: #{transformer_forward.1} parent=11 // pred_fallthru
          _
        // Predicated region
        $region105: #{transformer_forward.1} parent=11 // pred_check
          %p1003 = pneg %p593
        $region106: #{transformer_forward.1} parent=11 // pred_check_branch
          %1005 = sbr.rel (%p1003) target = $region108
        $region107: #{transformer_forward.1} parent=11 // pred_region
          %s1007 = ssub.s32 64, 64
          %1008 = vsyncadd [#allocation34], %s1007
          %s1010 = sshll.u32 [#allocation35], 4
          %s1011 = int_to_ptr.vmem [resolvable:$true] %s1010
          %1013 = dma.hbm_to_vmem [thread:$0]  %s49, 64, %s1011, [#allocation34]
        $region108: #{transformer_forward.1} parent=11 // pred_fallthru
          _
        // Predicated region
        $region109: #{transformer_forward.1} parent=11 // pred_check
          %p1014 = pneg %p614
        $region110: #{transformer_forward.1} parent=11 // pred_check_branch
          %1016 = sbr.rel (%p1014) target = $region112
        $region111: #{transformer_forward.1} parent=11 // pred_region
          %s1018 = ssub.s32 4096, 4096
          %1019 = vsyncadd [#allocation37], %s1018
          %s1020 = sshll.u32 [#allocation36], 4
          %s1021 = int_to_ptr.vmem [resolvable:$true] %s1020
          %1026 = dma.hbm_to_vmem [thread:$0]  %s51, 4096, %s1021, [#allocation37], 64, 64, 4
        $region112: #{transformer_forward.1} parent=11 // pred_fallthru
          _
        // Predicated region
        $region113: #{transformer_forward.1} parent=11 // pred_check
          %p1027 = pneg %p635
        $region114: #{transformer_forward.1} parent=11 // pred_check_branch
          %1029 = sbr.rel (%p1027) target = $region116
        $region115: #{transformer_forward.1} parent=11 // pred_region
          %s1031 = ssub.s32 16, 16
          %1032 = vsyncadd [#allocation37], %s1031
          %s1034 = sshll.u32 [#allocation38], 4
          %s1035 = int_to_ptr.vmem [resolvable:$true] %s1034
          %1037 = dma.hbm_to_vmem [thread:$0]  %s53, 16, %s1035, [#allocation37]
        $region116: #{transformer_forward.1} parent=11 // pred_fallthru
          _
        // Predicated region
        $region117: #{transformer_forward.1} parent=11 // pred_check
          %p1038 = pneg %p656
        $region118: #{transformer_forward.1} parent=11 // pred_check_branch
          %1040 = sbr.rel (%p1038) target = $region120
        $region119: #{transformer_forward.1} parent=11 // pred_region
          %s1042 = ssub.s32 16, 16
          %1043 = vsyncadd [#allocation40], %s1042
          %s1045 = sshll.u32 [#allocation39], 4
          %s1046 = int_to_ptr.vmem [resolvable:$true] %s1045
          %1048 = dma.hbm_to_vmem [thread:$0]  %s55, 16, %s1046, [#allocation40]
        $region120: #{transformer_forward.1} parent=11 // pred_fallthru
          _
        // Predicated region
        $region121: #{transformer_forward.1} parent=11 // pred_check
          %p1049 = pneg %p677
        $region122: #{transformer_forward.1} parent=11 // pred_check_branch
          %1051 = sbr.rel (%p1049) target = $region124
        $region123: #{transformer_forward.1} parent=11 // pred_region
          %s1053 = ssub.s32 16, 16
          %1054 = vsyncadd [#allocation40], %s1053
          %s1056 = sshll.u32 [#allocation41], 4
          %s1057 = int_to_ptr.vmem [resolvable:$true] %s1056
          %1059 = dma.hbm_to_vmem [thread:$0]  %s57, 16, %s1057, [#allocation40]
        $region124: #{transformer_forward.1} parent=11 // pred_fallthru
          _
        // Predicated region
        $region125: #{transformer_forward.1} parent=11 // pred_check
          %p1060 = pneg %p698
        $region126: #{transformer_forward.1} parent=11 // pred_check_branch
          %1062 = sbr.rel (%p1060) target = $region128
        $region127: #{transformer_forward.1} parent=11 // pred_region
          %s1064 = ssub.s32 1024, 1024
          %1065 = vsyncadd [#allocation43], %s1064
          %s1066 = sshll.u32 [#allocation42], 4
          %s1067 = int_to_ptr.vmem [resolvable:$true] %s1066
          %1072 = dma.hbm_to_vmem [thread:$0]  %s59, 1024, %s1067, [#allocation43], 64, 64, 4
        $region128: #{transformer_forward.1} parent=11 // pred_fallthru
          _
        // Predicated region
        $region129: #{transformer_forward.1} parent=11 // pred_check
          %p1073 = pneg %p719
        $region130: #{transformer_forward.1} parent=11 // pred_check_branch
          %1075 = sbr.rel (%p1073) target = $region132
        $region131: #{transformer_forward.1} parent=11 // pred_region
          %s1077 = ssub.s32 16, 16
          %1078 = vsyncadd [#allocation43], %s1077
          %s1080 = sshll.u32 [#allocation44], 4
          %s1081 = int_to_ptr.vmem [resolvable:$true] %s1080
          %1083 = dma.hbm_to_vmem [thread:$0]  %s61, 16, %s1081, [#allocation43]
        $region132: #{transformer_forward.1} parent=11 // pred_fallthru
          _
      $region12: #{transformer_forward.1} parent=5 // pred_fallthru
        _
      %p1084 = scmp.lt.s32.totalorder %s89, 2
      // Predicated region
      $region133: #{transformer_forward.1} parent=5 // pred_check
        %p1085 = pneg %p1084
      $region134: #{transformer_forward.1} parent=5 // pred_check_branch
        %1087 = sbr.rel (%p1085) target = $region136
      $region135: #{transformer_forward.1} parent=5 // pred_region
        _
      $region136: #{transformer_forward.1} parent=5 // pred_fallthru
        _
      %p1088 = scmp.le.s32.totalorder 1, %s89
      %p1089 = scmp.lt.s32.totalorder %s89, 3
      %p1090 = pnand %p1088, %p1089
      %p1091 = pneg %p1090
      // Predicated region
      $region137: #{transformer_forward.1} parent=5 // pred_check
        _
      $region138: #{transformer_forward.1} parent=5 // pred_check_branch
        %1093 = sbr.rel (%p1090) target = $region140
      $region139: #{transformer_forward.1} parent=5 // pred_region
        %s1094 = ssub.s32 %s89, 1
        // Predicated region
        $region141: #{transformer_forward.1} parent=139 // pred_check
          %p1095 = pneg %p131
        $region142: #{transformer_forward.1} parent=139 // pred_check_branch
          %1097 = sbr.rel (%p1095) target = $region144
        $region143: #{transformer_forward.1} parent=139 // pred_region
          %1098 = dma.done [#allocation5], 128
        $region144: #{transformer_forward.1} parent=139 // pred_fallthru
          _
        // Predicated region
        $region145: #{transformer_forward.1} parent=139 // pred_check
          %p1099 = pneg %p173
        $region146: #{transformer_forward.1} parent=139 // pred_check_branch
          %1101 = sbr.rel (%p1099) target = $region148
        $region147: #{transformer_forward.1} parent=139 // pred_region
          %1102 = dma.done [#allocation7], 16
        $region148: #{transformer_forward.1} parent=139 // pred_fallthru
          _
        // Predicated region
        $region149: #{transformer_forward.1} parent=139 // pred_check
          %p1103 = pneg %p194
        $region150: #{transformer_forward.1} parent=139 // pred_check_branch
          %1105 = sbr.rel (%p1103) target = $region152
        $region151: #{transformer_forward.1} parent=139 // pred_region
          %1106 = dma.done [#allocation7], 3072
        $region152: #{transformer_forward.1} parent=139 // pred_fallthru
          _
        // Predicated region
        $region153: #{transformer_forward.1} parent=139 // pred_check
          %p1107 = pneg %p215
        $region154: #{transformer_forward.1} parent=139 // pred_check_branch
          %1109 = sbr.rel (%p1107) target = $region156
        $region155: #{transformer_forward.1} parent=139 // pred_region
          %1110 = dma.done [#allocation10], 48
        $region156: #{transformer_forward.1} parent=139 // pred_fallthru
          _
        // Predicated region
        $region157: #{transformer_forward.1} parent=139 // pred_check
          %p1111 = pneg %p236
        $region158: #{transformer_forward.1} parent=139 // pred_check_branch
          %1113 = sbr.rel (%p1111) target = $region160
        $region159: #{transformer_forward.1} parent=139 // pred_region
          %1114 = dma.done [#allocation10], 1024
        $region160: #{transformer_forward.1} parent=139 // pred_fallthru
          _
        // Predicated region
        $region161: #{transformer_forward.1} parent=139 // pred_check
          %p1115 = pneg %p257
        $region162: #{transformer_forward.1} parent=139 // pred_check_branch
          %1117 = sbr.rel (%p1115) target = $region164
        $region163: #{transformer_forward.1} parent=139 // pred_region
          %1118 = dma.done [#allocation13], 16
        $region164: #{transformer_forward.1} parent=139 // pred_fallthru
          _
        // Predicated region
        $region165: #{transformer_forward.1} parent=139 // pred_check
          %p1119 = pneg %p278
        $region166: #{transformer_forward.1} parent=139 // pred_check_branch
          %1121 = sbr.rel (%p1119) target = $region168
        $region167: #{transformer_forward.1} parent=139 // pred_region
          %1122 = dma.done [#allocation13], 16
        $region168: #{transformer_forward.1} parent=139 // pred_fallthru
          _
        // Predicated region
        $region169: #{transformer_forward.1} parent=139 // pred_check
          %p1123 = pneg %p299
        $region170: #{transformer_forward.1} parent=139 // pred_check_branch
          %1125 = sbr.rel (%p1123) target = $region172
        $region171: #{transformer_forward.1} parent=139 // pred_region
          %1126 = dma.done [#allocation16], 16
        $region172: #{transformer_forward.1} parent=139 // pred_fallthru
          _
        // Predicated region
        $region173: #{transformer_forward.1} parent=139 // pred_check
          %p1127 = pneg %p320
        $region174: #{transformer_forward.1} parent=139 // pred_check_branch
          %1129 = sbr.rel (%p1127) target = $region176
        $region175: #{transformer_forward.1} parent=139 // pred_region
          %1130 = dma.done [#allocation16], 4096
        $region176: #{transformer_forward.1} parent=139 // pred_fallthru
          _
        // Predicated region
        $region177: #{transformer_forward.1} parent=139 // pred_check
          %p1131 = pneg %p362
        $region178: #{transformer_forward.1} parent=139 // pred_check_branch
          %1133 = sbr.rel (%p1131) target = $region180
        $region179: #{transformer_forward.1} parent=139 // pred_region
          %1134 = dma.done [#allocation19], 4096
        $region180: #{transformer_forward.1} parent=139 // pred_fallthru
          _
        // Predicated region
        $region181: #{transformer_forward.1} parent=139 // pred_check
          %p1135 = pneg %p383
        $region182: #{transformer_forward.1} parent=139 // pred_check_branch
          %1137 = sbr.rel (%p1135) target = $region184
        $region183: #{transformer_forward.1} parent=139 // pred_region
          %1138 = dma.done [#allocation19], 16
        $region184: #{transformer_forward.1} parent=139 // pred_fallthru
          _
        // Predicated region
        $region185: #{transformer_forward.1} parent=139 // pred_check
          %p1139 = pneg %p404
        $region186: #{transformer_forward.1} parent=139 // pred_check_branch
          %1141 = sbr.rel (%p1139) target = $region188
        $region187: #{transformer_forward.1} parent=139 // pred_region
          %1142 = dma.done [#allocation22], 16
        $region188: #{transformer_forward.1} parent=139 // pred_fallthru
          _
        // Predicated region
        $region189: #{transformer_forward.1} parent=139 // pred_check
          %p1143 = pneg %p425
        $region190: #{transformer_forward.1} parent=139 // pred_check_branch
          %1145 = sbr.rel (%p1143) target = $region192
        $region191: #{transformer_forward.1} parent=139 // pred_region
          %1146 = dma.done [#allocation22], 16
        $region192: #{transformer_forward.1} parent=139 // pred_fallthru
          _
        // Predicated region
        $region193: #{transformer_forward.1} parent=139 // pred_check
          %p1147 = pneg %p446
        $region194: #{transformer_forward.1} parent=139 // pred_check_branch
          %1149 = sbr.rel (%p1147) target = $region196
        $region195: #{transformer_forward.1} parent=139 // pred_region
          %1150 = dma.done [#allocation25], 3072
        $region196: #{transformer_forward.1} parent=139 // pred_fallthru
          _
        // Predicated region
        $region197: #{transformer_forward.1} parent=139 // pred_check
          %p1151 = pneg %p467
        $region198: #{transformer_forward.1} parent=139 // pred_check_branch
          %1153 = sbr.rel (%p1151) target = $region200
        $region199: #{transformer_forward.1} parent=139 // pred_region
          %1154 = dma.done [#allocation25], 48
        $region200: #{transformer_forward.1} parent=139 // pred_fallthru
          _
        // Predicated region
        $region201: #{transformer_forward.1} parent=139 // pred_check
          %p1155 = pneg %p488
        $region202: #{transformer_forward.1} parent=139 // pred_check_branch
          %1157 = sbr.rel (%p1155) target = $region204
        $region203: #{transformer_forward.1} parent=139 // pred_region
          %1158 = dma.done [#allocation28], 1024
        $region204: #{transformer_forward.1} parent=139 // pred_fallthru
          _
        // Predicated region
        $region205: #{transformer_forward.1} parent=139 // pred_check
          %p1159 = pneg %p509
        $region206: #{transformer_forward.1} parent=139 // pred_check_branch
          %1161 = sbr.rel (%p1159) target = $region208
        $region207: #{transformer_forward.1} parent=139 // pred_region
          %1162 = dma.done [#allocation28], 16
        $region208: #{transformer_forward.1} parent=139 // pred_fallthru
          _
        // Predicated region
        $region209: #{transformer_forward.1} parent=139 // pred_check
          %p1163 = pneg %p530
        $region210: #{transformer_forward.1} parent=139 // pred_check_branch
          %1165 = sbr.rel (%p1163) target = $region212
        $region211: #{transformer_forward.1} parent=139 // pred_region
          %1166 = dma.done [#allocation31], 16
        $region212: #{transformer_forward.1} parent=139 // pred_fallthru
          _
        // Predicated region
        $region213: #{transformer_forward.1} parent=139 // pred_check
          %p1167 = pneg %p551
        $region214: #{transformer_forward.1} parent=139 // pred_check_branch
          %1169 = sbr.rel (%p1167) target = $region216
        $region215: #{transformer_forward.1} parent=139 // pred_region
          %1170 = dma.done [#allocation31], 16
        $region216: #{transformer_forward.1} parent=139 // pred_fallthru
          _
        // Predicated region
        $region217: #{transformer_forward.1} parent=139 // pred_check
          %p1171 = pneg %p572
        $region218: #{transformer_forward.1} parent=139 // pred_check_branch
          %1173 = sbr.rel (%p1171) target = $region220
        $region219: #{transformer_forward.1} parent=139 // pred_region
          %1174 = dma.done [#allocation34], 4096
        $region220: #{transformer_forward.1} parent=139 // pred_fallthru
          _
        // Predicated region
        $region221: #{transformer_forward.1} parent=139 // pred_check
          %p1175 = pneg %p593
        $region222: #{transformer_forward.1} parent=139 // pred_check_branch
          %1177 = sbr.rel (%p1175) target = $region224
        $region223: #{transformer_forward.1} parent=139 // pred_region
          %1178 = dma.done [#allocation34], 64
        $region224: #{transformer_forward.1} parent=139 // pred_fallthru
          _
        // Predicated region
        $region225: #{transformer_forward.1} parent=139 // pred_check
          %p1179 = pneg %p614
        $region226: #{transformer_forward.1} parent=139 // pred_check_branch
          %1181 = sbr.rel (%p1179) target = $region228
        $region227: #{transformer_forward.1} parent=139 // pred_region
          %1182 = dma.done [#allocation37], 4096
        $region228: #{transformer_forward.1} parent=139 // pred_fallthru
          _
        // Predicated region
        $region229: #{transformer_forward.1} parent=139 // pred_check
          %p1183 = pneg %p635
        $region230: #{transformer_forward.1} parent=139 // pred_check_branch
          %1185 = sbr.rel (%p1183) target = $region232
        $region231: #{transformer_forward.1} parent=139 // pred_region
          %1186 = dma.done [#allocation37], 16
        $region232: #{transformer_forward.1} parent=139 // pred_fallthru
          _
        // Predicated region
        $region233: #{transformer_forward.1} parent=139 // pred_check
          %p1187 = pneg %p656
        $region234: #{transformer_forward.1} parent=139 // pred_check_branch
          %1189 = sbr.rel (%p1187) target = $region236
        $region235: #{transformer_forward.1} parent=139 // pred_region
          %1190 = dma.done [#allocation40], 16
        $region236: #{transformer_forward.1} parent=139 // pred_fallthru
          _
        // Predicated region
        $region237: #{transformer_forward.1} parent=139 // pred_check
          %p1191 = pneg %p677
        $region238: #{transformer_forward.1} parent=139 // pred_check_branch
          %1193 = sbr.rel (%p1191) target = $region240
        $region239: #{transformer_forward.1} parent=139 // pred_region
          %1194 = dma.done [#allocation40], 16
        $region240: #{transformer_forward.1} parent=139 // pred_fallthru
          _
        // Predicated region
        $region241: #{transformer_forward.1} parent=139 // pred_check
          %p1195 = pneg %p698
        $region242: #{transformer_forward.1} parent=139 // pred_check_branch
          %1197 = sbr.rel (%p1195) target = $region244
        $region243: #{transformer_forward.1} parent=139 // pred_region
          %1198 = dma.done [#allocation43], 1024
        $region244: #{transformer_forward.1} parent=139 // pred_fallthru
          _
        // Predicated region
        $region245: #{transformer_forward.1} parent=139 // pred_check
          %p1199 = pneg %p719
        $region246: #{transformer_forward.1} parent=139 // pred_check_branch
          %1201 = sbr.rel (%p1199) target = $region248
        $region247: #{transformer_forward.1} parent=139 // pred_region
          %1202 = dma.done [#allocation43], 16
        $region248: #{transformer_forward.1} parent=139 // pred_fallthru
          _
        %p1203 = pneg %p110
        %p1204 = pneg %p107
        %p1205 = pneg %p131
        %p1206 = pneg %p128
        %p1207 = pneg %p152
        %p1208 = pneg %p149
        %p1209 = pneg %p173
        %p1210 = pneg %p170
        %p1211 = pneg %p194
        %p1212 = pneg %p191
        %p1213 = pneg %p215
        %p1214 = pneg %p212
        %p1215 = pneg %p236
        %p1216 = pneg %p233
        %p1217 = pneg %p257
        %p1218 = pneg %p254
        %p1219 = pneg %p278
        %p1220 = pneg %p275
        %p1221 = pneg %p299
        %p1222 = pneg %p296
        %p1223 = pneg %p320
        %p1224 = pneg %p317
        %p1225 = pneg %p341
        %p1226 = pneg %p338
        %p1227 = pneg %p362
        %p1228 = pneg %p359
        %p1229 = pneg %p383
        %p1230 = pneg %p380
        %p1231 = pneg %p404
        %p1232 = pneg %p401
        %p1233 = pneg %p425
        %p1234 = pneg %p422
        %p1235 = pneg %p446
        %p1236 = pneg %p443
        %p1237 = pneg %p467
        %p1238 = pneg %p464
        %p1239 = pneg %p488
        %p1240 = pneg %p485
        %p1241 = pneg %p509
        %p1242 = pneg %p506
        %p1243 = pneg %p530
        %p1244 = pneg %p527
        %p1245 = pneg %p551
        %p1246 = pneg %p548
        %p1247 = pneg %p572
        %p1248 = pneg %p569
        %p1249 = pneg %p593
        %p1250 = pneg %p590
        %p1251 = pneg %p614
        %p1252 = pneg %p611
        %p1253 = pneg %p635
        %p1254 = pneg %p632
        %p1255 = pneg %p656
        %p1256 = pneg %p653
        %p1257 = pneg %p677
        %p1258 = pneg %p674
        %p1259 = pneg %p698
        %p1260 = pneg %p695
        %p1261 = pneg %p719
        %p1262 = pneg %p716
        %p1263 = pneg %p745
        %p1264 = pneg %p742
        %p1265 = scmp.lt.s32.totalorder %s94, 1
        %s1266 = scalar_select %p1265, %s94, 1
        %s1267 = smul.addr %s1266, 8
        %s1268 = scalar_lea.vmem %s63, %s1267
        %p1269 = scmp.lt.s32.totalorder %s94, 1
        %s1270 = scalar_select %p1269, %s94, 1
        %s1271 = smul.addr %s1270, 8
        %s1272 = scalar_lea.vmem %s63, %s1271
        %s1274 = smul.u32 %s94, 128
        %s1275 = sld [smem:[#allocation3 + %s1274]]
        %s1276 = scalar_lea.vmem %s3, %s1275
        %v1277 = vld [vmem:[%s1276] sm:$0x1]
        %s1278 = sadd.s32 %s1274, 1
        %s1279 = sld [smem:[#allocation3 + %s1278]]
        %s1280 = scalar_lea.vmem %s3, %s1279
        %v1281 = vld [vmem:[%s1280] sm:$0x1]
        %s1282 = sadd.s32 %s1274, 2
        %s1283 = sld [smem:[#allocation3 + %s1282]]
        %s1284 = scalar_lea.vmem %s3, %s1283
        %v1285 = vld [vmem:[%s1284] sm:$0x1]
        %s1286 = sadd.s32 %s1274, 3
        %s1287 = sld [smem:[#allocation3 + %s1286]]
        %s1288 = scalar_lea.vmem %s3, %s1287
        %v1289 = vld [vmem:[%s1288] sm:$0x1]
        %s1290 = sadd.s32 %s1274, 4
        %s1291 = sld [smem:[#allocation3 + %s1290]]
        %s1292 = scalar_lea.vmem %s3, %s1291
        %v1293 = vld [vmem:[%s1292] sm:$0x1]
        %v1295 = vrot.slane %v1281, 7
        %v1298 = vrot.slane %v1285, 6
        %v1301 = vrot.slane %v1289, 5
        %v1304 = vrot.slane %v1293, 4
        %vm1306 = vcmask 1040384
        %v1307 = vsel %vm1306, %v1277, %v1295
        %vm1308 = vcmask 1041408
        %v1309 = vsel %vm1308, %v1307, %v1298
        %vm1310 = vcmask 1042432
        %v1311 = vsel %vm1310, %v1309, %v1301
        %vm1312 = vcmask 1043456
        %v1313 = vsel %vm1312, %v1311, %v1304
        %v1314 = vld [vmem:[#allocation4] sm:$0x1f]
        %v1315 = vadd.f32 %v1313, %v1314
        %v1316 = vld [vmem:[%s7] sm:$0x1]
        %v1317 = vld [vmem:[#allocation6] sm:$0x1]
        %v1318 = vld [vmem:[#allocation8] sm:$0xff]
        %v1319 = vld [vmem:[#allocation8 + $0x8] sm:$0xf]
        %v1320 = vld [vmem:[#allocation8 + $0xc] sm:$0xff]
        %v1321 = vld [vmem:[#allocation8 + $0x14] sm:$0xf]
        %v1322 = vld [vmem:[#allocation8 + $0x18] sm:$0xff]
        %v1323 = vld [vmem:[#allocation8 + $0x20] sm:$0xf]
        %v1324 = vld [vmem:[#allocation8 + $0x24] sm:$0xff]
        %v1325 = vld [vmem:[#allocation8 + $0x2c] sm:$0xf]
        %v1326 = vld [vmem:[#allocation8 + $0x30] sm:$0xff]
        %v1327 = vld [vmem:[#allocation8 + $0x38] sm:$0xf]
        %v1328 = vld [vmem:[#allocation8 + $0x3c] sm:$0xff]
        %v1329 = vld [vmem:[#allocation8 + $0x44] sm:$0xf]
        %v1330 = vld [vmem:[#allocation8 + $0x48] sm:$0xff]
        %v1331 = vld [vmem:[#allocation8 + $0x50] sm:$0xf]
        %v1332 = vld [vmem:[#allocation8 + $0x54] sm:$0xff]
        %v1333 = vld [vmem:[#allocation8 + $0x5c] sm:$0xf]
        %v1334 = vld [vmem:[#allocation8 + $0x60] sm:$0xff]
        %v1335 = vld [vmem:[#allocation8 + $0x68] sm:$0xf]
        %v1336 = vld [vmem:[#allocation8 + $0x6c] sm:$0xff]
        %v1337 = vld [vmem:[#allocation8 + $0x74] sm:$0xf]
        %v1338 = vld [vmem:[#allocation8 + $0x78] sm:$0xff]
        %v1339 = vld [vmem:[#allocation8 + $0x80] sm:$0xf]
        %v1340 = vld [vmem:[#allocation8 + $0x84] sm:$0xff]
        %v1341 = vld [vmem:[#allocation8 + $0x8c] sm:$0xf]
        %v1342 = vld [vmem:[#allocation8 + $0x90] sm:$0xff]
        %v1343 = vld [vmem:[#allocation8 + $0x98] sm:$0xf]
        %v1344 = vld [vmem:[#allocation8 + $0x9c] sm:$0xff]
        %v1345 = vld [vmem:[#allocation8 + $0xa4] sm:$0xf]
        %v1346 = vld [vmem:[#allocation8 + $0xa8] sm:$0xff]
        %v1347 = vld [vmem:[#allocation8 + $0xb0] sm:$0xf]
        %v1348 = vld [vmem:[#allocation8 + $0xb4] sm:$0xff]
        %v1349 = vld [vmem:[#allocation8 + $0xbc] sm:$0xf]
        %v1350 = vld [vmem:[#allocation9] sm:$0x7]
        %v1351 = vld [vmem:[#allocation11] sm:$0xf]
        %v1352 = vld [vmem:[#allocation11 + $0x4] sm:$0xf]
        %v1353 = vld [vmem:[#allocation11 + $0x8] sm:$0xf]
        %v1354 = vld [vmem:[#allocation11 + $0xc] sm:$0xf]
        %v1355 = vld [vmem:[#allocation11 + $0x10] sm:$0xf]
        %v1356 = vld [vmem:[#allocation11 + $0x14] sm:$0xf]
        %v1357 = vld [vmem:[#allocation11 + $0x18] sm:$0xf]
        %v1358 = vld [vmem:[#allocation11 + $0x1c] sm:$0xf]
        %v1359 = vld [vmem:[#allocation11 + $0x20] sm:$0xf]
        %v1360 = vld [vmem:[#allocation11 + $0x24] sm:$0xf]
        %v1361 = vld [vmem:[#allocation11 + $0x28] sm:$0xf]
        %v1362 = vld [vmem:[#allocation11 + $0x2c] sm:$0xf]
        %v1363 = vld [vmem:[#allocation11 + $0x30] sm:$0xf]
        %v1364 = vld [vmem:[#allocation11 + $0x34] sm:$0xf]
        %v1365 = vld [vmem:[#allocation11 + $0x38] sm:$0xf]
        %v1366 = vld [vmem:[#allocation11 + $0x3c] sm:$0xf]
        %v1367 = vld [vmem:[#allocation12] sm:$0x1]
        %v1368 = vld [vmem:[#allocation14] sm:$0x1]
        %v1369 = vld [vmem:[#allocation15] sm:$0x1]
        %v1370 = vld [vmem:[#allocation17] sm:$0xff]
        %v1371 = vld [vmem:[#allocation17 + $0x8] sm:$0xff]
        %v1372 = vld [vmem:[#allocation17 + $0x10] sm:$0xff]
        %v1373 = vld [vmem:[#allocation17 + $0x18] sm:$0xff]
        %v1374 = vld [vmem:[#allocation17 + $0x20] sm:$0xff]
        %v1375 = vld [vmem:[#allocation17 + $0x28] sm:$0xff]
        %v1376 = vld [vmem:[#allocation17 + $0x30] sm:$0xff]
        %v1377 = vld [vmem:[#allocation17 + $0x38] sm:$0xff]
        %v1378 = vld [vmem:[#allocation17 + $0x40] sm:$0xff]
        %v1379 = vld [vmem:[#allocation17 + $0x48] sm:$0xff]
        %v1380 = vld [vmem:[#allocation17 + $0x50] sm:$0xff]
        %v1381 = vld [vmem:[#allocation17 + $0x58] sm:$0xff]
        %v1382 = vld [vmem:[#allocation17 + $0x60] sm:$0xff]
        %v1383 = vld [vmem:[#allocation17 + $0x68] sm:$0xff]
        %v1384 = vld [vmem:[#allocation17 + $0x70] sm:$0xff]
        %v1385 = vld [vmem:[#allocation17 + $0x78] sm:$0xff]
        %v1386 = vld [vmem:[#allocation17 + $0x80] sm:$0xff]
        %v1387 = vld [vmem:[#allocation17 + $0x88] sm:$0xff]
        %v1388 = vld [vmem:[#allocation17 + $0x90] sm:$0xff]
        %v1389 = vld [vmem:[#allocation17 + $0x98] sm:$0xff]
        %v1390 = vld [vmem:[#allocation17 + $0xa0] sm:$0xff]
        %v1391 = vld [vmem:[#allocation17 + $0xa8] sm:$0xff]
        %v1392 = vld [vmem:[#allocation17 + $0xb0] sm:$0xff]
        %v1393 = vld [vmem:[#allocation17 + $0xb8] sm:$0xff]
        %v1394 = vld [vmem:[#allocation17 + $0xc0] sm:$0xff]
        %v1395 = vld [vmem:[#allocation17 + $0xc8] sm:$0xff]
        %v1396 = vld [vmem:[#allocation17 + $0xd0] sm:$0xff]
        %v1397 = vld [vmem:[#allocation17 + $0xd8] sm:$0xff]
        %v1398 = vld [vmem:[#allocation17 + $0xe0] sm:$0xff]
        %v1399 = vld [vmem:[#allocation17 + $0xe8] sm:$0xff]
        %v1400 = vld [vmem:[#allocation17 + $0xf0] sm:$0xff]
        %v1401 = vld [vmem:[#allocation17 + $0xf8] sm:$0xff]
        %v1402 = vld [vmem:[%s25] sm:$0xf]
        %v1403 = vld [vmem:[#allocation18] sm:$0xf]
        %v1404 = vld [vmem:[#allocation18 + $0x4] sm:$0xf]
        %v1405 = vld [vmem:[#allocation18 + $0x8] sm:$0xf]
        %v1406 = vld [vmem:[#allocation18 + $0xc] sm:$0xf]
        %v1407 = vld [vmem:[#allocation18 + $0x10] sm:$0xf]
        %v1408 = vld [vmem:[#allocation18 + $0x14] sm:$0xf]
        %v1409 = vld [vmem:[#allocation18 + $0x18] sm:$0xf]
        %v1410 = vld [vmem:[#allocation18 + $0x1c] sm:$0xf]
        %v1411 = vld [vmem:[#allocation18 + $0x20] sm:$0xf]
        %v1412 = vld [vmem:[#allocation18 + $0x24] sm:$0xf]
        %v1413 = vld [vmem:[#allocation18 + $0x28] sm:$0xf]
        %v1414 = vld [vmem:[#allocation18 + $0x2c] sm:$0xf]
        %v1415 = vld [vmem:[#allocation18 + $0x30] sm:$0xf]
        %v1416 = vld [vmem:[#allocation18 + $0x34] sm:$0xf]
        %v1417 = vld [vmem:[#allocation18 + $0x38] sm:$0xf]
        %v1418 = vld [vmem:[#allocation18 + $0x3c] sm:$0xf]
        %v1419 = vld [vmem:[#allocation18 + $0x40] sm:$0xf]
        %v1420 = vld [vmem:[#allocation18 + $0x44] sm:$0xf]
        %v1421 = vld [vmem:[#allocation18 + $0x48] sm:$0xf]
        %v1422 = vld [vmem:[#allocation18 + $0x4c] sm:$0xf]
        %v1423 = vld [vmem:[#allocation18 + $0x50] sm:$0xf]
        %v1424 = vld [vmem:[#allocation18 + $0x54] sm:$0xf]
        %v1425 = vld [vmem:[#allocation18 + $0x58] sm:$0xf]
        %v1426 = vld [vmem:[#allocation18 + $0x5c] sm:$0xf]
        %v1427 = vld [vmem:[#allocation18 + $0x60] sm:$0xf]
        %v1428 = vld [vmem:[#allocation18 + $0x64] sm:$0xf]
        %v1429 = vld [vmem:[#allocation18 + $0x68] sm:$0xf]
        %v1430 = vld [vmem:[#allocation18 + $0x6c] sm:$0xf]
        %v1431 = vld [vmem:[#allocation18 + $0x70] sm:$0xf]
        %v1432 = vld [vmem:[#allocation18 + $0x74] sm:$0xf]
        %v1433 = vld [vmem:[#allocation18 + $0x78] sm:$0xf]
        %v1434 = vld [vmem:[#allocation18 + $0x7c] sm:$0xf]
        %v1435 = vld [vmem:[#allocation18 + $0x80] sm:$0xf]
        %v1436 = vld [vmem:[#allocation18 + $0x84] sm:$0xf]
        %v1437 = vld [vmem:[#allocation18 + $0x88] sm:$0xf]
        %v1438 = vld [vmem:[#allocation18 + $0x8c] sm:$0xf]
        %v1439 = vld [vmem:[#allocation18 + $0x90] sm:$0xf]
        %v1440 = vld [vmem:[#allocation18 + $0x94] sm:$0xf]
        %v1441 = vld [vmem:[#allocation18 + $0x98] sm:$0xf]
        %v1442 = vld [vmem:[#allocation18 + $0x9c] sm:$0xf]
        %v1443 = vld [vmem:[#allocation18 + $0xa0] sm:$0xf]
        %v1444 = vld [vmem:[#allocation18 + $0xa4] sm:$0xf]
        %v1445 = vld [vmem:[#allocation18 + $0xa8] sm:$0xf]
        %v1446 = vld [vmem:[#allocation18 + $0xac] sm:$0xf]
        %v1447 = vld [vmem:[#allocation18 + $0xb0] sm:$0xf]
        %v1448 = vld [vmem:[#allocation18 + $0xb4] sm:$0xf]
        %v1449 = vld [vmem:[#allocation18 + $0xb8] sm:$0xf]
        %v1450 = vld [vmem:[#allocation18 + $0xbc] sm:$0xf]
        %v1451 = vld [vmem:[#allocation18 + $0xc0] sm:$0xf]
        %v1452 = vld [vmem:[#allocation18 + $0xc4] sm:$0xf]
        %v1453 = vld [vmem:[#allocation18 + $0xc8] sm:$0xf]
        %v1454 = vld [vmem:[#allocation18 + $0xcc] sm:$0xf]
        %v1455 = vld [vmem:[#allocation18 + $0xd0] sm:$0xf]
        %v1456 = vld [vmem:[#allocation18 + $0xd4] sm:$0xf]
        %v1457 = vld [vmem:[#allocation18 + $0xd8] sm:$0xf]
        %v1458 = vld [vmem:[#allocation18 + $0xdc] sm:$0xf]
        %v1459 = vld [vmem:[#allocation18 + $0xe0] sm:$0xf]
        %v1460 = vld [vmem:[#allocation18 + $0xe4] sm:$0xf]
        %v1461 = vld [vmem:[#allocation18 + $0xe8] sm:$0xf]
        %v1462 = vld [vmem:[#allocation18 + $0xec] sm:$0xf]
        %v1463 = vld [vmem:[#allocation18 + $0xf0] sm:$0xf]
        %v1464 = vld [vmem:[#allocation18 + $0xf4] sm:$0xf]
        %v1465 = vld [vmem:[#allocation18 + $0xf8] sm:$0xf]
        %v1466 = vld [vmem:[#allocation18 + $0xfc] sm:$0xf]
        %v1467 = vld [vmem:[#allocation20] sm:$0x1]
        %v1468 = vld [vmem:[#allocation21] sm:$0x1]
        %v1469 = vld [vmem:[#allocation23] sm:$0x1]
        %v1470 = vld [vmem:[#allocation24] sm:$0xff]
        %v1471 = vld [vmem:[#allocation24 + $0x8] sm:$0xf]
        %v1472 = vld [vmem:[#allocation24 + $0xc] sm:$0xff]
        %v1473 = vld [vmem:[#allocation24 + $0x14] sm:$0xf]
        %v1474 = vld [vmem:[#allocation24 + $0x18] sm:$0xff]
        %v1475 = vld [vmem:[#allocation24 + $0x20] sm:$0xf]
        %v1476 = vld [vmem:[#allocation24 + $0x24] sm:$0xff]
        %v1477 = vld [vmem:[#allocation24 + $0x2c] sm:$0xf]
        %v1478 = vld [vmem:[#allocation24 + $0x30] sm:$0xff]
        %v1479 = vld [vmem:[#allocation24 + $0x38] sm:$0xf]
        %v1480 = vld [vmem:[#allocation24 + $0x3c] sm:$0xff]
        %v1481 = vld [vmem:[#allocation24 + $0x44] sm:$0xf]
        %v1482 = vld [vmem:[#allocation24 + $0x48] sm:$0xff]
        %v1483 = vld [vmem:[#allocation24 + $0x50] sm:$0xf]
        %v1484 = vld [vmem:[#allocation24 + $0x54] sm:$0xff]
        %v1485 = vld [vmem:[#allocation24 + $0x5c] sm:$0xf]
        %v1486 = vld [vmem:[#allocation24 + $0x60] sm:$0xff]
        %v1487 = vld [vmem:[#allocation24 + $0x68] sm:$0xf]
        %v1488 = vld [vmem:[#allocation24 + $0x6c] sm:$0xff]
        %v1489 = vld [vmem:[#allocation24 + $0x74] sm:$0xf]
        %v1490 = vld [vmem:[#allocation24 + $0x78] sm:$0xff]
        %v1491 = vld [vmem:[#allocation24 + $0x80] sm:$0xf]
        %v1492 = vld [vmem:[#allocation24 + $0x84] sm:$0xff]
        %v1493 = vld [vmem:[#allocation24 + $0x8c] sm:$0xf]
        %v1494 = vld [vmem:[#allocation24 + $0x90] sm:$0xff]
        %v1495 = vld [vmem:[#allocation24 + $0x98] sm:$0xf]
        %v1496 = vld [vmem:[#allocation24 + $0x9c] sm:$0xff]
        %v1497 = vld [vmem:[#allocation24 + $0xa4] sm:$0xf]
        %v1498 = vld [vmem:[#allocation24 + $0xa8] sm:$0xff]
        %v1499 = vld [vmem:[#allocation24 + $0xb0] sm:$0xf]
        %v1500 = vld [vmem:[#allocation24 + $0xb4] sm:$0xff]
        %v1501 = vld [vmem:[#allocation24 + $0xbc] sm:$0xf]
        %v1502 = vld [vmem:[#allocation26] sm:$0x7]
        %v1503 = vld [vmem:[#allocation27] sm:$0xf]
        %v1504 = vld [vmem:[#allocation27 + $0x4] sm:$0xf]
        %v1505 = vld [vmem:[#allocation27 + $0x8] sm:$0xf]
        %v1506 = vld [vmem:[#allocation27 + $0xc] sm:$0xf]
        %v1507 = vld [vmem:[#allocation27 + $0x10] sm:$0xf]
        %v1508 = vld [vmem:[#allocation27 + $0x14] sm:$0xf]
        %v1509 = vld [vmem:[#allocation27 + $0x18] sm:$0xf]
        %v1510 = vld [vmem:[#allocation27 + $0x1c] sm:$0xf]
        %v1511 = vld [vmem:[#allocation27 + $0x20] sm:$0xf]
        %v1512 = vld [vmem:[#allocation27 + $0x24] sm:$0xf]
        %v1513 = vld [vmem:[#allocation27 + $0x28] sm:$0xf]
        %v1514 = vld [vmem:[#allocation27 + $0x2c] sm:$0xf]
        %v1515 = vld [vmem:[#allocation27 + $0x30] sm:$0xf]
        %v1516 = vld [vmem:[#allocation27 + $0x34] sm:$0xf]
        %v1517 = vld [vmem:[#allocation27 + $0x38] sm:$0xf]
        %v1518 = vld [vmem:[#allocation27 + $0x3c] sm:$0xf]
        %v1519 = vld [vmem:[#allocation29] sm:$0x1]
        %v1520 = vld [vmem:[#allocation30] sm:$0x1]
        %v1521 = vld [vmem:[#allocation32] sm:$0x1]
        %v1522 = vld [vmem:[#allocation33] sm:$0xff]
        %v1523 = vld [vmem:[#allocation33 + $0x8] sm:$0xff]
        %v1524 = vld [vmem:[#allocation33 + $0x10] sm:$0xff]
        %v1525 = vld [vmem:[#allocation33 + $0x18] sm:$0xff]
        %v1526 = vld [vmem:[#allocation33 + $0x20] sm:$0xff]
        %v1527 = vld [vmem:[#allocation33 + $0x28] sm:$0xff]
        %v1528 = vld [vmem:[#allocation33 + $0x30] sm:$0xff]
        %v1529 = vld [vmem:[#allocation33 + $0x38] sm:$0xff]
        %v1530 = vld [vmem:[#allocation33 + $0x40] sm:$0xff]
        %v1531 = vld [vmem:[#allocation33 + $0x48] sm:$0xff]
        %v1532 = vld [vmem:[#allocation33 + $0x50] sm:$0xff]
        %v1533 = vld [vmem:[#allocation33 + $0x58] sm:$0xff]
        %v1534 = vld [vmem:[#allocation33 + $0x60] sm:$0xff]
        %v1535 = vld [vmem:[#allocation33 + $0x68] sm:$0xff]
        %v1536 = vld [vmem:[#allocation33 + $0x70] sm:$0xff]
        %v1537 = vld [vmem:[#allocation33 + $0x78] sm:$0xff]
        %v1538 = vld [vmem:[#allocation33 + $0x80] sm:$0xff]
        %v1539 = vld [vmem:[#allocation33 + $0x88] sm:$0xff]
        %v1540 = vld [vmem:[#allocation33 + $0x90] sm:$0xff]
        %v1541 = vld [vmem:[#allocation33 + $0x98] sm:$0xff]
        %v1542 = vld [vmem:[#allocation33 + $0xa0] sm:$0xff]
        %v1543 = vld [vmem:[#allocation33 + $0xa8] sm:$0xff]
        %v1544 = vld [vmem:[#allocation33 + $0xb0] sm:$0xff]
        %v1545 = vld [vmem:[#allocation33 + $0xb8] sm:$0xff]
        %v1546 = vld [vmem:[#allocation33 + $0xc0] sm:$0xff]
        %v1547 = vld [vmem:[#allocation33 + $0xc8] sm:$0xff]
        %v1548 = vld [vmem:[#allocation33 + $0xd0] sm:$0xff]
        %v1549 = vld [vmem:[#allocation33 + $0xd8] sm:$0xff]
        %v1550 = vld [vmem:[#allocation33 + $0xe0] sm:$0xff]
        %v1551 = vld [vmem:[#allocation33 + $0xe8] sm:$0xff]
        %v1552 = vld [vmem:[#allocation33 + $0xf0] sm:$0xff]
        %v1553 = vld [vmem:[#allocation33 + $0xf8] sm:$0xff]
        %v1554 = vld [vmem:[#allocation35] sm:$0xf]
        %v1555 = vld [vmem:[#allocation36] sm:$0xf]
        %v1556 = vld [vmem:[#allocation36 + $0x4] sm:$0xf]
        %v1557 = vld [vmem:[#allocation36 + $0x8] sm:$0xf]
        %v1558 = vld [vmem:[#allocation36 + $0xc] sm:$0xf]
        %v1559 = vld [vmem:[#allocation36 + $0x10] sm:$0xf]
        %v1560 = vld [vmem:[#allocation36 + $0x14] sm:$0xf]
        %v1561 = vld [vmem:[#allocation36 + $0x18] sm:$0xf]
        %v1562 = vld [vmem:[#allocation36 + $0x1c] sm:$0xf]
        %v1563 = vld [vmem:[#allocation36 + $0x20] sm:$0xf]
        %v1564 = vld [vmem:[#allocation36 + $0x24] sm:$0xf]
        %v1565 = vld [vmem:[#allocation36 + $0x28] sm:$0xf]
        %v1566 = vld [vmem:[#allocation36 + $0x2c] sm:$0xf]
        %v1567 = vld [vmem:[#allocation36 + $0x30] sm:$0xf]
        %v1568 = vld [vmem:[#allocation36 + $0x34] sm:$0xf]
        %v1569 = vld [vmem:[#allocation36 + $0x38] sm:$0xf]
        %v1570 = vld [vmem:[#allocation36 + $0x3c] sm:$0xf]
        %v1571 = vld [vmem:[#allocation36 + $0x40] sm:$0xf]
        %v1572 = vld [vmem:[#allocation36 + $0x44] sm:$0xf]
        %v1573 = vld [vmem:[#allocation36 + $0x48] sm:$0xf]
        %v1574 = vld [vmem:[#allocation36 + $0x4c] sm:$0xf]
        %v1575 = vld [vmem:[#allocation36 + $0x50] sm:$0xf]
        %v1576 = vld [vmem:[#allocation36 + $0x54] sm:$0xf]
        %v1577 = vld [vmem:[#allocation36 + $0x58] sm:$0xf]
        %v1578 = vld [vmem:[#allocation36 + $0x5c] sm:$0xf]
        %v1579 = vld [vmem:[#allocation36 + $0x60] sm:$0xf]
        %v1580 = vld [vmem:[#allocation36 + $0x64] sm:$0xf]
        %v1581 = vld [vmem:[#allocation36 + $0x68] sm:$0xf]
        %v1582 = vld [vmem:[#allocation36 + $0x6c] sm:$0xf]
        %v1583 = vld [vmem:[#allocation36 + $0x70] sm:$0xf]
        %v1584 = vld [vmem:[#allocation36 + $0x74] sm:$0xf]
        %v1585 = vld [vmem:[#allocation36 + $0x78] sm:$0xf]
        %v1586 = vld [vmem:[#allocation36 + $0x7c] sm:$0xf]
        %v1587 = vld [vmem:[#allocation36 + $0x80] sm:$0xf]
        %v1588 = vld [vmem:[#allocation36 + $0x84] sm:$0xf]
        %v1589 = vld [vmem:[#allocation36 + $0x88] sm:$0xf]
        %v1590 = vld [vmem:[#allocation36 + $0x8c] sm:$0xf]
        %v1591 = vld [vmem:[#allocation36 + $0x90] sm:$0xf]
        %v1592 = vld [vmem:[#allocation36 + $0x94] sm:$0xf]
        %v1593 = vld [vmem:[#allocation36 + $0x98] sm:$0xf]
        %v1594 = vld [vmem:[#allocation36 + $0x9c] sm:$0xf]
        %v1595 = vld [vmem:[#allocation36 + $0xa0] sm:$0xf]
        %v1596 = vld [vmem:[#allocation36 + $0xa4] sm:$0xf]
        %v1597 = vld [vmem:[#allocation36 + $0xa8] sm:$0xf]
        %v1598 = vld [vmem:[#allocation36 + $0xac] sm:$0xf]
        %v1599 = vld [vmem:[#allocation36 + $0xb0] sm:$0xf]
        %v1600 = vld [vmem:[#allocation36 + $0xb4] sm:$0xf]
        %v1601 = vld [vmem:[#allocation36 + $0xb8] sm:$0xf]
        %v1602 = vld [vmem:[#allocation36 + $0xbc] sm:$0xf]
        %v1603 = vld [vmem:[#allocation36 + $0xc0] sm:$0xf]
        %v1604 = vld [vmem:[#allocation36 + $0xc4] sm:$0xf]
        %v1605 = vld [vmem:[#allocation36 + $0xc8] sm:$0xf]
        %v1606 = vld [vmem:[#allocation36 + $0xcc] sm:$0xf]
        %v1607 = vld [vmem:[#allocation36 + $0xd0] sm:$0xf]
        %v1608 = vld [vmem:[#allocation36 + $0xd4] sm:$0xf]
        %v1609 = vld [vmem:[#allocation36 + $0xd8] sm:$0xf]
        %v1610 = vld [vmem:[#allocation36 + $0xdc] sm:$0xf]
        %v1611 = vld [vmem:[#allocation36 + $0xe0] sm:$0xf]
        %v1612 = vld [vmem:[#allocation36 + $0xe4] sm:$0xf]
        %v1613 = vld [vmem:[#allocation36 + $0xe8] sm:$0xf]
        %v1614 = vld [vmem:[#allocation36 + $0xec] sm:$0xf]
        %v1615 = vld [vmem:[#allocation36 + $0xf0] sm:$0xf]
        %v1616 = vld [vmem:[#allocation36 + $0xf4] sm:$0xf]
        %v1617 = vld [vmem:[#allocation36 + $0xf8] sm:$0xf]
        %v1618 = vld [vmem:[#allocation36 + $0xfc] sm:$0xf]
        %v1619 = vld [vmem:[#allocation38] sm:$0x1]
        %v1620 = vld [vmem:[#allocation39] sm:$0x1]
        %v1621 = vld [vmem:[#allocation41] sm:$0x1]
        %v1622 = vld [vmem:[#allocation42] sm:$0xf]
        %v1623 = vld [vmem:[#allocation42 + $0x4] sm:$0xf]
        %v1624 = vld [vmem:[#allocation42 + $0x8] sm:$0xf]
        %v1625 = vld [vmem:[#allocation42 + $0xc] sm:$0xf]
        %v1626 = vld [vmem:[#allocation42 + $0x10] sm:$0xf]
        %v1627 = vld [vmem:[#allocation42 + $0x14] sm:$0xf]
        %v1628 = vld [vmem:[#allocation42 + $0x18] sm:$0xf]
        %v1629 = vld [vmem:[#allocation42 + $0x1c] sm:$0xf]
        %v1630 = vld [vmem:[#allocation42 + $0x20] sm:$0xf]
        %v1631 = vld [vmem:[#allocation42 + $0x24] sm:$0xf]
        %v1632 = vld [vmem:[#allocation42 + $0x28] sm:$0xf]
        %v1633 = vld [vmem:[#allocation42 + $0x2c] sm:$0xf]
        %v1634 = vld [vmem:[#allocation42 + $0x30] sm:$0xf]
        %v1635 = vld [vmem:[#allocation42 + $0x34] sm:$0xf]
        %v1636 = vld [vmem:[#allocation42 + $0x38] sm:$0xf]
        %v1637 = vld [vmem:[#allocation42 + $0x3c] sm:$0xf]
        %v1638 = vld [vmem:[#allocation44] sm:$0x1]
        %v1639 = vlaneseq
        %v1640 = vshrl.u32 %v1639, 7
        %v1641 = vlaneseq
        %v1642 = vand.u32 %v1641, 127
        %vm1643 = vcmp.gt.s32.totalorder %v1642, %v1640
        %vm1644 = vcmask 1044480
        %v1645 = vsel %vm1644, %v1315, 0.0
        %1646 = vadd.xlane.f32.xlu0 %v1645
        %v1647 = vpop.xlane.xlu0 %1646
        %v1648 = vrcp.pop 128.0
        %v1649 = vmul.f32 %v1647, %v1648
        %v1650 = vsub.f32 %v1315, %v1649
        %v1651 = vmul.f32 %v1650, %v1650
        %v1652 = vsel %vm1644, %v1651, 0.0
        %1653 = vadd.xlane.f32.xlu0 %v1652
        %v1654 = vpop.xlane.xlu0 %1653
        %v1655 = vmul.f32 %v1654, %v1648
        %v1656 = vadd.f32 %v1655, 1e-05
        %v1657 = vrsqrt.pop %v1656
        %v1658 = vmul.f32 %v1650, %v1657
        %v1660 = vlaneseq
        %v1661 = vshrl.u32 %v1660, 7
        %v1662 = vsub.s32 0, %v1661
        %v1663 = vrot.slane %v1316, %v1662
        %v1665 = vmul.f32 %v1658, %v1663
        %v1667 = vlaneseq
        %v1668 = vshrl.u32 %v1667, 7
        %v1669 = vsub.s32 0, %v1668
        %v1670 = vrot.slane %v1317, %v1669
        %v1672 = vadd.f32 %v1665, %v1670
        %v1673 = vpack.c.bf16 %v1672, %v1672
        %v1675 = vlaneseq
        %v1676 = vshrl.u32 %v1675, 7
        %v1677 = vsub.s32 0, %v1676
        %v1678 = vrot.slane %v1350, %v1677
        %v1679 = vlaneseq
        %v1680 = vshrl.u32 %v1679, 7
        %v1681 = vsub.s32 1, %v1680
        %v1682 = vrot.slane %v1350, %v1681
        %v1683 = vlaneseq
        %v1684 = vshrl.u32 %v1683, 7
        %v1685 = vsub.s32 2, %v1684
        %v1686 = vrot.slane %v1350, %v1685
        %v1722 = vunpack.c.l.b16 %v1318
        %v1723 = vunpack.c.h.b16 %v1318
        %v1724 = vunpack.c.l.b16 %v1319
        %v1725 = vunpack.c.l.b16 %v1320
        %v1726 = vunpack.c.h.b16 %v1320
        %v1727 = vunpack.c.l.b16 %v1321
        %v1728 = vunpack.c.l.b16 %v1322
        %v1729 = vunpack.c.h.b16 %v1322
        %v1730 = vunpack.c.l.b16 %v1323
        %v1731 = vunpack.c.l.b16 %v1324
        %v1732 = vunpack.c.h.b16 %v1324
        %v1733 = vunpack.c.l.b16 %v1325
        %v1734 = vunpack.c.l.b16 %v1326
        %v1735 = vunpack.c.h.b16 %v1326
        %v1736 = vunpack.c.l.b16 %v1327
        %v1737 = vunpack.c.l.b16 %v1328
        %v1738 = vunpack.c.h.b16 %v1328
        %v1739 = vunpack.c.l.b16 %v1329
        %v1740 = vunpack.c.l.b16 %v1330
        %v1741 = vunpack.c.h.b16 %v1330
        %v1742 = vunpack.c.l.b16 %v1331
        %v1743 = vunpack.c.l.b16 %v1332
        %v1744 = vunpack.c.h.b16 %v1332
        %v1745 = vunpack.c.l.b16 %v1333
        %v1746 = vunpack.c.l.b16 %v1334
        %v1747 = vunpack.c.h.b16 %v1334
        %v1748 = vunpack.c.l.b16 %v1335
        %v1749 = vunpack.c.l.b16 %v1336
        %v1750 = vunpack.c.h.b16 %v1336
        %v1751 = vunpack.c.l.b16 %v1337
        %v1752 = vunpack.c.l.b16 %v1338
        %v1753 = vunpack.c.h.b16 %v1338
        %v1754 = vunpack.c.l.b16 %v1339
        %v1755 = vunpack.c.l.b16 %v1340
        %v1756 = vunpack.c.h.b16 %v1340
        %v1757 = vunpack.c.l.b16 %v1341
        %v1758 = vunpack.c.l.b16 %v1342
        %v1759 = vunpack.c.h.b16 %v1342
        %v1760 = vunpack.c.l.b16 %v1343
        %v1761 = vunpack.c.l.b16 %v1344
        %v1762 = vunpack.c.h.b16 %v1344
        %v1763 = vunpack.c.l.b16 %v1345
        %v1764 = vunpack.c.l.b16 %v1346
        %v1765 = vunpack.c.h.b16 %v1346
        %v1766 = vunpack.c.l.b16 %v1347
        %v1767 = vunpack.c.l.b16 %v1348
        %v1768 = vunpack.c.h.b16 %v1348
        %v1769 = vunpack.c.l.b16 %v1349
        %v1770 = vpack.c.b16 %v1725, %v1722
        %v1771 = vpack.c.b16 %v1726, %v1723
        %v1772 = vpack.c.b16 %v1727, %v1724
        %v1773 = vpack.c.b16 %v1731, %v1728
        %v1774 = vpack.c.b16 %v1732, %v1729
        %v1775 = vpack.c.b16 %v1733, %v1730
        %v1776 = vpack.c.b16 %v1737, %v1734
        %v1777 = vpack.c.b16 %v1738, %v1735
        %v1778 = vpack.c.b16 %v1739, %v1736
        %v1779 = vpack.c.b16 %v1743, %v1740
        %v1780 = vpack.c.b16 %v1744, %v1741
        %v1781 = vpack.c.b16 %v1745, %v1742
        %v1782 = vpack.c.b16 %v1749, %v1746
        %v1783 = vpack.c.b16 %v1750, %v1747
        %v1784 = vpack.c.b16 %v1751, %v1748
        %v1785 = vpack.c.b16 %v1755, %v1752
        %v1786 = vpack.c.b16 %v1756, %v1753
        %v1787 = vpack.c.b16 %v1757, %v1754
        %v1788 = vpack.c.b16 %v1761, %v1758
        %v1789 = vpack.c.b16 %v1762, %v1759
        %v1790 = vpack.c.b16 %v1763, %v1760
        %v1791 = vpack.c.b16 %v1767, %v1764
        %v1792 = vpack.c.b16 %v1768, %v1765
        %v1793 = vpack.c.b16 %v1769, %v1766
        %1818 = vmatprep.subr.bf16.mxu0 %v1771
        %1819 = vmatpush1.bf16.msra.mxu0 %v1770
        %1820 = vmatprep.subr.bf16.mxu0 %v1774
        %1821 = vmatpush1.bf16.msra.mxu0 %v1773
        %1822 = vmatprep.subr.bf16.mxu0 %v1777
        %1823 = vmatpush1.bf16.msra.mxu0 %v1776
        %1824 = vmatprep.subr.bf16.mxu0 %v1780
        %1825 = vmatpush1.bf16.msra.mxu0 %v1779
        %1826 = vmatprep.subr.bf16.mxu0 %v1783
        %1827 = vmatpush1.bf16.msra.mxu0 %v1782
        %1828 = vmatprep.subr.bf16.mxu0 %v1786
        %1829 = vmatpush1.bf16.msra.mxu0 %v1785
        %1830 = vmatprep.subr.bf16.mxu0 %v1789
        %1831 = vmatpush1.bf16.msra.mxu0 %v1788
        %1832 = vmatprep.subr.bf16.mxu0 %v1792
        %1833 = vmatpush1.bf16.msra.mxu0 %v1791
        %1834 = vmatprep.subr.bf16.mxu0 0
        %1835 = vmatpush1.bf16.msra.mxu0 0
        %1836 = vmatprep.subr.bf16.mxu0 0
        %1837 = vmatpush1.bf16.msra.mxu0 0
        %1838 = vmatprep.subr.bf16.mxu0 0
        %1839 = vmatpush1.bf16.msra.mxu0 0
        %1840 = vmatprep.subr.bf16.mxu0 0
        %1841 = vmatpush1.bf16.msra.mxu0 0
        %1842 = vmatprep.subr.bf16.mxu0 0
        %1843 = vmatpush1.bf16.msra.mxu0 0
        %1844 = vmatprep.subr.bf16.mxu0 0
        %1845 = vmatpush1.bf16.msra.mxu0 0
        %1846 = vmatprep.subr.bf16.mxu0 0
        %1847 = vmatpush1.bf16.msra.mxu0 0
        %1848 = vmatprep.subr.bf16.mxu0 0
        %1849 = vmatpush1.bf16.msra.mxu0 0
        %1850 = vmatprep.mubr.bf16.mxu0 0
        %1851 = vmatmul.mubr.bf16.gmra.mrb[0].mxu0 %v1673
        %v1852 = vpop.f32.mrb[0].mxu0
        %v1853 = vadd.f32 %v1678, %v1852
        %v1854 = vpop.f32.mrb[0].mxu0
        %v1855 = vadd.f32 %v1682, %v1854
        %v1856 = vpop.f32.mrb[0].mxu0
        %v1857 = vpop.f32.mrb[0].mxu0
        %1858 = vdwg.mxu0
        %1859 = vmatprep.subr.bf16.mxu0 0
        %1860 = vmatpush1.bf16.msra.mxu0 %v1772
        %1861 = vmatprep.subr.bf16.mxu0 0
        %1862 = vmatpush1.bf16.msra.mxu0 %v1775
        %1863 = vmatprep.subr.bf16.mxu0 0
        %1864 = vmatpush1.bf16.msra.mxu0 %v1778
        %1865 = vmatprep.subr.bf16.mxu0 0
        %1866 = vmatpush1.bf16.msra.mxu0 %v1781
        %1867 = vmatprep.subr.bf16.mxu0 0
        %1868 = vmatpush1.bf16.msra.mxu0 %v1784
        %1869 = vmatprep.subr.bf16.mxu0 0
        %1870 = vmatpush1.bf16.msra.mxu0 %v1787
        %1871 = vmatprep.subr.bf16.mxu0 0
        %1872 = vmatpush1.bf16.msra.mxu0 %v1790
        %1873 = vmatprep.subr.bf16.mxu0 0
        %1874 = vmatpush1.bf16.msra.mxu0 %v1793
        %1875 = vmatprep.subr.bf16.mxu0 0
        %1876 = vmatpush1.bf16.msra.mxu0 0
        %1877 = vmatprep.subr.bf16.mxu0 0
        %1878 = vmatpush1.bf16.msra.mxu0 0
        %1879 = vmatprep.subr.bf16.mxu0 0
        %1880 = vmatpush1.bf16.msra.mxu0 0
        %1881 = vmatprep.subr.bf16.mxu0 0
        %1882 = vmatpush1.bf16.msra.mxu0 0
        %1883 = vmatprep.subr.bf16.mxu0 0
        %1884 = vmatpush1.bf16.msra.mxu0 0
        %1885 = vmatprep.subr.bf16.mxu0 0
        %1886 = vmatpush1.bf16.msra.mxu0 0
        %1887 = vmatprep.subr.bf16.mxu0 0
        %1888 = vmatpush1.bf16.msra.mxu0 0
        %1889 = vmatprep.subr.bf16.mxu0 0
        %1890 = vmatpush1.bf16.msra.mxu0 0
        %1891 = vmatprep.mubr.bf16.mxu0 0
        %1892 = vmatmul.mubr.bf16.gmra.mrb[0].mxu0 %v1673
        %v1893 = vpop.f32.mrb[0].mxu0
        %v1894 = vadd.f32 %v1686, %v1893
        %v1895 = vpop.f32.mrb[0].mxu0
        %v1896 = vpop.f32.mrb[0].mxu0
        %v1897 = vpop.f32.mrb[0].mxu0
        %1898 = vdwg.mxu0
        %1900 = vrot.lane.b32.xlu0 %v1853, 96
        %v1901 = vpop.permute.xlu0 %1900
        %1903 = vrot.lane.b32.xlu0 %v1853, 64
        %v1904 = vpop.permute.xlu0 %1903
        %1906 = vrot.lane.b32.xlu0 %v1853, 32
        %v1907 = vpop.permute.xlu0 %1906
        %v1909 = vpack.c.bf16 %v1853, %v1853
        %v1910 = vpack.c.bf16 %v1901, %v1901
        %v1911 = vpack.c.bf16 %v1904, %v1904
        %v1912 = vpack.c.bf16 %v1907, %v1907
        %1914 = vrot.lane.b32.xlu0 %v1855, 96
        %v1915 = vpop.permute.xlu0 %1914
        %1917 = vrot.lane.b32.xlu0 %v1855, 64
        %v1918 = vpop.permute.xlu0 %1917
        %1920 = vrot.lane.b32.xlu0 %v1855, 32
        %v1921 = vpop.permute.xlu0 %1920
        %v1923 = vpack.c.bf16 %v1855, %v1855
        %v1924 = vpack.c.bf16 %v1915, %v1915
        %v1925 = vpack.c.bf16 %v1918, %v1918
        %v1926 = vpack.c.bf16 %v1921, %v1921
        %1928 = vrot.lane.b32.xlu0 %v1894, 96
        %v1929 = vpop.permute.xlu0 %1928
        %1931 = vrot.lane.b32.xlu0 %v1894, 64
        %v1932 = vpop.permute.xlu0 %1931
        %1934 = vrot.lane.b32.xlu0 %v1894, 32
        %v1935 = vpop.permute.xlu0 %1934
        %v1937 = vpack.c.bf16 %v1894, %v1894
        %v1938 = vpack.c.bf16 %v1929, %v1929
        %v1939 = vpack.c.bf16 %v1932, %v1932
        %v1940 = vpack.c.bf16 %v1935, %v1935
        %vm1941 = vcmask 261120
        %v1943 = vsel %vm1941, %v1909, 0
        %v1946 = vsel %vm1941, %v1923, 0
        %1948 = vmatprep.subr.bf16.mxu0 0
        %1949 = vmatpush1.bf16.xpose.msra.mxu0 %v1946
        %1950 = vmatprep.subr.bf16.mxu0 0
        %1951 = vmatpush1.bf16.xpose.msra.mxu0 0
        %1952 = vmatprep.subr.bf16.mxu0 0
        %1953 = vmatpush1.bf16.xpose.msra.mxu0 0
        %1954 = vmatprep.subr.bf16.mxu0 0
        %1955 = vmatpush1.bf16.xpose.msra.mxu0 0
        %1956 = vmatprep.subr.bf16.mxu0 0
        %1957 = vmatpush1.bf16.xpose.msra.mxu0 0
        %1958 = vmatprep.subr.bf16.mxu0 0
        %1959 = vmatpush1.bf16.xpose.msra.mxu0 0
        %1960 = vmatprep.subr.bf16.mxu0 0
        %1961 = vmatpush1.bf16.xpose.msra.mxu0 0
        %1962 = vmatprep.subr.bf16.mxu0 0
        %1963 = vmatpush1.bf16.xpose.msra.mxu0 0
        %1964 = vmatprep.subr.bf16.mxu0 0
        %1965 = vmatpush1.bf16.xpose.msra.mxu0 0
        %1966 = vmatprep.subr.bf16.mxu0 0
        %1967 = vmatpush1.bf16.xpose.msra.mxu0 0
        %1968 = vmatprep.subr.bf16.mxu0 0
        %1969 = vmatpush1.bf16.xpose.msra.mxu0 0
        %1970 = vmatprep.subr.bf16.mxu0 0
        %1971 = vmatpush1.bf16.xpose.msra.mxu0 0
        %1972 = vmatprep.subr.bf16.mxu0 0
        %1973 = vmatpush1.bf16.xpose.msra.mxu0 0
        %1974 = vmatprep.subr.bf16.mxu0 0
        %1975 = vmatpush1.bf16.xpose.msra.mxu0 0
        %1976 = vmatprep.subr.bf16.mxu0 0
        %1977 = vmatpush1.bf16.xpose.msra.mxu0 0
        %1978 = vmatprep.subr.bf16.mxu0 0
        %1979 = vmatpush1.bf16.xpose.msra.mxu0 0
        %1980 = vmatprep.mubr.bf16.mxu0 0
        %1981 = vmatmul.mubr.bf16.gmra.mrb[0].mxu0 %v1943
        %v1982 = vpop.f32.mrb[0].mxu0
        %v1983 = vadd.f32 0.0, %v1982
        %v1984 = vpop.f32.mrb[0].mxu0
        %v1985 = vpop.f32.mrb[0].mxu0
        %v1986 = vpop.f32.mrb[0].mxu0
        %1987 = vdwg.mxu0
        %v1989 = vsel %vm1941, %v1910, 0
        %v1992 = vsel %vm1941, %v1924, 0
        %1994 = vmatprep.subr.bf16.mxu0 0
        %1995 = vmatpush1.bf16.xpose.msra.mxu0 %v1992
        %1996 = vmatprep.subr.bf16.mxu0 0
        %1997 = vmatpush1.bf16.xpose.msra.mxu0 0
        %1998 = vmatprep.subr.bf16.mxu0 0
        %1999 = vmatpush1.bf16.xpose.msra.mxu0 0
        %2000 = vmatprep.subr.bf16.mxu0 0
        %2001 = vmatpush1.bf16.xpose.msra.mxu0 0
        %2002 = vmatprep.subr.bf16.mxu0 0
        %2003 = vmatpush1.bf16.xpose.msra.mxu0 0
        %2004 = vmatprep.subr.bf16.mxu0 0
        %2005 = vmatpush1.bf16.xpose.msra.mxu0 0
        %2006 = vmatprep.subr.bf16.mxu0 0
        %2007 = vmatpush1.bf16.xpose.msra.mxu0 0
        %2008 = vmatprep.subr.bf16.mxu0 0
        %2009 = vmatpush1.bf16.xpose.msra.mxu0 0
        %2010 = vmatprep.subr.bf16.mxu0 0
        %2011 = vmatpush1.bf16.xpose.msra.mxu0 0
        %2012 = vmatprep.subr.bf16.mxu0 0
        %2013 = vmatpush1.bf16.xpose.msra.mxu0 0
        %2014 = vmatprep.subr.bf16.mxu0 0
        %2015 = vmatpush1.bf16.xpose.msra.mxu0 0
        %2016 = vmatprep.subr.bf16.mxu0 0
        %2017 = vmatpush1.bf16.xpose.msra.mxu0 0
        %2018 = vmatprep.subr.bf16.mxu0 0
        %2019 = vmatpush1.bf16.xpose.msra.mxu0 0
        %2020 = vmatprep.subr.bf16.mxu0 0
        %2021 = vmatpush1.bf16.xpose.msra.mxu0 0
        %2022 = vmatprep.subr.bf16.mxu0 0
        %2023 = vmatpush1.bf16.xpose.msra.mxu0 0
        %2024 = vmatprep.subr.bf16.mxu0 0
        %2025 = vmatpush1.bf16.xpose.msra.mxu0 0
        %2026 = vmatprep.mubr.bf16.mxu0 0
        %2027 = vmatmul.mubr.bf16.gmra.mrb[0].mxu0 %v1989
        %v2028 = vpop.f32.mrb[0].mxu0
        %v2029 = vadd.f32 0.0, %v2028
        %v2030 = vpop.f32.mrb[0].mxu0
        %v2031 = vpop.f32.mrb[0].mxu0
        %v2032 = vpop.f32.mrb[0].mxu0
        %2033 = vdwg.mxu0
        %v2035 = vsel %vm1941, %v1911, 0
        %v2038 = vsel %vm1941, %v1925, 0
        %2040 = vmatprep.subr.bf16.mxu0 0
        %2041 = vmatpush1.bf16.xpose.msra.mxu0 %v2038
        %2042 = vmatprep.subr.bf16.mxu0 0
        %2043 = vmatpush1.bf16.xpose.msra.mxu0 0
        %2044 = vmatprep.subr.bf16.mxu0 0
        %2045 = vmatpush1.bf16.xpose.msra.mxu0 0
        %2046 = vmatprep.subr.bf16.mxu0 0
        %2047 = vmatpush1.bf16.xpose.msra.mxu0 0
        %2048 = vmatprep.subr.bf16.mxu0 0
        %2049 = vmatpush1.bf16.xpose.msra.mxu0 0
        %2050 = vmatprep.subr.bf16.mxu0 0
        %2051 = vmatpush1.bf16.xpose.msra.mxu0 0
        %2052 = vmatprep.subr.bf16.mxu0 0
        %2053 = vmatpush1.bf16.xpose.msra.mxu0 0
        %2054 = vmatprep.subr.bf16.mxu0 0
        %2055 = vmatpush1.bf16.xpose.msra.mxu0 0
        %2056 = vmatprep.subr.bf16.mxu0 0
        %2057 = vmatpush1.bf16.xpose.msra.mxu0 0
        %2058 = vmatprep.subr.bf16.mxu0 0
        %2059 = vmatpush1.bf16.xpose.msra.mxu0 0
        %2060 = vmatprep.subr.bf16.mxu0 0
        %2061 = vmatpush1.bf16.xpose.msra.mxu0 0
        %2062 = vmatprep.subr.bf16.mxu0 0
        %2063 = vmatpush1.bf16.xpose.msra.mxu0 0
        %2064 = vmatprep.subr.bf16.mxu0 0
        %2065 = vmatpush1.bf16.xpose.msra.mxu0 0
        %2066 = vmatprep.subr.bf16.mxu0 0
        %2067 = vmatpush1.bf16.xpose.msra.mxu0 0
        %2068 = vmatprep.subr.bf16.mxu0 0
        %2069 = vmatpush1.bf16.xpose.msra.mxu0 0
        %2070 = vmatprep.subr.bf16.mxu0 0
        %2071 = vmatpush1.bf16.xpose.msra.mxu0 0
        %2072 = vmatprep.mubr.bf16.mxu0 0
        %2073 = vmatmul.mubr.bf16.gmra.mrb[0].mxu0 %v2035
        %v2074 = vpop.f32.mrb[0].mxu0
        %v2075 = vadd.f32 0.0, %v2074
        %v2076 = vpop.f32.mrb[0].mxu0
        %v2077 = vpop.f32.mrb[0].mxu0
        %v2078 = vpop.f32.mrb[0].mxu0
        %2079 = vdwg.mxu0
        %v2081 = vsel %vm1941, %v1912, 0
        %v2084 = vsel %vm1941, %v1926, 0
        %2086 = vmatprep.subr.bf16.mxu0 0
        %2087 = vmatpush1.bf16.xpose.msra.mxu0 %v2084
        %2088 = vmatprep.subr.bf16.mxu0 0
        %2089 = vmatpush1.bf16.xpose.msra.mxu0 0
        %2090 = vmatprep.subr.bf16.mxu0 0
        %2091 = vmatpush1.bf16.xpose.msra.mxu0 0
        %2092 = vmatprep.subr.bf16.mxu0 0
        %2093 = vmatpush1.bf16.xpose.msra.mxu0 0
        %2094 = vmatprep.subr.bf16.mxu0 0
        %2095 = vmatpush1.bf16.xpose.msra.mxu0 0
        %2096 = vmatprep.subr.bf16.mxu0 0
        %2097 = vmatpush1.bf16.xpose.msra.mxu0 0
        %2098 = vmatprep.subr.bf16.mxu0 0
        %2099 = vmatpush1.bf16.xpose.msra.mxu0 0
        %2100 = vmatprep.subr.bf16.mxu0 0
        %2101 = vmatpush1.bf16.xpose.msra.mxu0 0
        %2102 = vmatprep.subr.bf16.mxu0 0
        %2103 = vmatpush1.bf16.xpose.msra.mxu0 0
        %2104 = vmatprep.subr.bf16.mxu0 0
        %2105 = vmatpush1.bf16.xpose.msra.mxu0 0
        %2106 = vmatprep.subr.bf16.mxu0 0
        %2107 = vmatpush1.bf16.xpose.msra.mxu0 0
        %2108 = vmatprep.subr.bf16.mxu0 0
        %2109 = vmatpush1.bf16.xpose.msra.mxu0 0
        %2110 = vmatprep.subr.bf16.mxu0 0
        %2111 = vmatpush1.bf16.xpose.msra.mxu0 0
        %2112 = vmatprep.subr.bf16.mxu0 0
        %2113 = vmatpush1.bf16.xpose.msra.mxu0 0
        %2114 = vmatprep.subr.bf16.mxu0 0
        %2115 = vmatpush1.bf16.xpose.msra.mxu0 0
        %2116 = vmatprep.subr.bf16.mxu0 0
        %2117 = vmatpush1.bf16.xpose.msra.mxu0 0
        %2118 = vmatprep.mubr.bf16.mxu0 0
        %2119 = vmatmul.mubr.bf16.gmra.mrb[0].mxu0 %v2081
        %v2120 = vpop.f32.mrb[0].mxu0
        %v2121 = vadd.f32 0.0, %v2120
        %v2122 = vpop.f32.mrb[0].mxu0
        %v2123 = vpop.f32.mrb[0].mxu0
        %v2124 = vpop.f32.mrb[0].mxu0
        %2125 = vdwg.mxu0
        %v2126 = vmul.f32 %v1983, 0.17677669
        %v2127 = vmul.f32 %v2029, 0.17677669
        %v2128 = vmul.f32 %v2075, 0.17677669
        %v2129 = vmul.f32 %v2121, 0.17677669
        %v2130 = vsel %vm1643, 1, 0
        %vm2131 = vcmp.eq.s32.totalorder %v2130, 1
        %v2132 = vsel %vm2131, -1e+30, %v2126
        %v2133 = vsel %vm2131, -1e+30, %v2127
        %v2134 = vsel %vm2131, -1e+30, %v2128
        %v2135 = vsel %vm2131, -1e+30, %v2129
        %vm2136 = vcmask 36864
        %v2137 = vsel %vm2136, %v2132, -inf
        %2138 = vmax.xlane.f32.xlu0 %v2137
        %v2139 = vpop.xlane.xlu0 %2138
        %v2140 = vsel %vm2136, %v2133, -inf
        %2141 = vmax.xlane.f32.xlu0 %v2140
        %v2142 = vpop.xlane.xlu0 %2141
        %v2143 = vsel %vm2136, %v2134, -inf
        %2144 = vmax.xlane.f32.xlu0 %v2143
        %v2145 = vpop.xlane.xlu0 %2144
        %v2146 = vsel %vm2136, %v2135, -inf
        %2147 = vmax.xlane.f32.xlu0 %v2146
        %v2148 = vpop.xlane.xlu0 %2147
        %v2149 = vsub.f32 %v2132, %v2139
        %v2150 = vsub.f32 %v2133, %v2142
        %v2151 = vsub.f32 %v2134, %v2145
        %v2152 = vsub.f32 %v2135, %v2148
        %v2153 = vmul.f32 %v2149, 1.442695
        %v2154 = vpow.pop %v2153
        %v2155 = vmul.f32 %v2150, 1.442695
        %v2156 = vpow.pop %v2155
        %v2157 = vmul.f32 %v2151, 1.442695
        %v2158 = vpow.pop %v2157
        %v2159 = vmul.f32 %v2152, 1.442695
        %v2160 = vpow.pop %v2159
        %v2161 = vsel %vm2136, %v2154, 0.0
        %2162 = vadd.xlane.f32.xlu0 %v2161
        %v2163 = vpop.xlane.xlu0 %2162
        %v2164 = vsel %vm2136, %v2156, 0.0
        %2165 = vadd.xlane.f32.xlu0 %v2164
        %v2166 = vpop.xlane.xlu0 %2165
        %v2167 = vsel %vm2136, %v2158, 0.0
        %2168 = vadd.xlane.f32.xlu0 %v2167
        %v2169 = vpop.xlane.xlu0 %2168
        %v2170 = vsel %vm2136, %v2160, 0.0
        %2171 = vadd.xlane.f32.xlu0 %v2170
        %v2172 = vpop.xlane.xlu0 %2171
        %v2173 = vrcp.pop %v2163
        %v2174 = vrcp.pop %v2166
        %v2175 = vrcp.pop %v2169
        %v2176 = vrcp.pop %v2172
        %v2177 = vmul.f32 %v2154, %v2173
        %v2178 = vmul.f32 %v2156, %v2174
        %v2179 = vmul.f32 %v2158, %v2175
        %v2180 = vmul.f32 %v2160, %v2176
        %v2181 = vpack.c.bf16 %v2177, %v2177
        %v2182 = vpack.c.bf16 %v2178, %v2178
        %v2183 = vpack.c.bf16 %v2179, %v2179
        %v2184 = vpack.c.bf16 %v2180, %v2180
        %vm2185 = vcmask 39936
        %v2187 = vsel %vm2185, %v2181, 0
        %v2189 = vsel %vm1308, 4294967295, 65535
        %v2190 = vsel %vm1310, %v2189, 0
        %v2192 = vand.u32 %v1937, %v2190
        %2194 = vmatprep.subr.bf16.mxu0 0
        %2195 = vmatpush1.bf16.msra.mxu0 %v2192
        %2196 = vmatprep.subr.bf16.mxu0 0
        %2197 = vmatpush1.bf16.msra.mxu0 0
        %2198 = vmatprep.subr.bf16.mxu0 0
        %2199 = vmatpush1.bf16.msra.mxu0 0
        %2200 = vmatprep.subr.bf16.mxu0 0
        %2201 = vmatpush1.bf16.msra.mxu0 0
        %2202 = vmatprep.subr.bf16.mxu0 0
        %2203 = vmatpush1.bf16.msra.mxu0 0
        %2204 = vmatprep.subr.bf16.mxu0 0
        %2205 = vmatpush1.bf16.msra.mxu0 0
        %2206 = vmatprep.subr.bf16.mxu0 0
        %2207 = vmatpush1.bf16.msra.mxu0 0
        %2208 = vmatprep.subr.bf16.mxu0 0
        %2209 = vmatpush1.bf16.msra.mxu0 0
        %2210 = vmatprep.subr.bf16.mxu0 0
        %2211 = vmatpush1.bf16.msra.mxu0 0
        %2212 = vmatprep.subr.bf16.mxu0 0
        %2213 = vmatpush1.bf16.msra.mxu0 0
        %2214 = vmatprep.subr.bf16.mxu0 0
        %2215 = vmatpush1.bf16.msra.mxu0 0
        %2216 = vmatprep.subr.bf16.mxu0 0
        %2217 = vmatpush1.bf16.msra.mxu0 0
        %2218 = vmatprep.subr.bf16.mxu0 0
        %2219 = vmatpush1.bf16.msra.mxu0 0
        %2220 = vmatprep.subr.bf16.mxu0 0
        %2221 = vmatpush1.bf16.msra.mxu0 0
        %2222 = vmatprep.subr.bf16.mxu0 0
        %2223 = vmatpush1.bf16.msra.mxu0 0
        %2224 = vmatprep.subr.bf16.mxu0 0
        %2225 = vmatpush1.bf16.msra.mxu0 0
        %2226 = vmatprep.mubr.bf16.mxu0 0
        %2227 = vmatmul.mubr.bf16.gmra.mrb[0].mxu0 %v2187
        %v2228 = vpop.f32.mrb[0].mxu0
        %v2229 = vadd.f32 0.0, %v2228
        %v2230 = vpop.f32.mrb[0].mxu0
        %v2231 = vpop.f32.mrb[0].mxu0
        %v2232 = vpop.f32.mrb[0].mxu0
        %2233 = vdwg.mxu0
        %v2235 = vsel %vm2185, %v2182, 0
        %v2238 = vand.u32 %v1938, %v2190
        %2240 = vmatprep.subr.bf16.mxu0 0
        %2241 = vmatpush1.bf16.msra.mxu0 %v2238
        %2242 = vmatprep.subr.bf16.mxu0 0
        %2243 = vmatpush1.bf16.msra.mxu0 0
        %2244 = vmatprep.subr.bf16.mxu0 0
        %2245 = vmatpush1.bf16.msra.mxu0 0
        %2246 = vmatprep.subr.bf16.mxu0 0
        %2247 = vmatpush1.bf16.msra.mxu0 0
        %2248 = vmatprep.subr.bf16.mxu0 0
        %2249 = vmatpush1.bf16.msra.mxu0 0
        %2250 = vmatprep.subr.bf16.mxu0 0
        %2251 = vmatpush1.bf16.msra.mxu0 0
        %2252 = vmatprep.subr.bf16.mxu0 0
        %2253 = vmatpush1.bf16.msra.mxu0 0
        %2254 = vmatprep.subr.bf16.mxu0 0
        %2255 = vmatpush1.bf16.msra.mxu0 0
        %2256 = vmatprep.subr.bf16.mxu0 0
        %2257 = vmatpush1.bf16.msra.mxu0 0
        %2258 = vmatprep.subr.bf16.mxu0 0
        %2259 = vmatpush1.bf16.msra.mxu0 0
        %2260 = vmatprep.subr.bf16.mxu0 0
        %2261 = vmatpush1.bf16.msra.mxu0 0
        %2262 = vmatprep.subr.bf16.mxu0 0
        %2263 = vmatpush1.bf16.msra.mxu0 0
        %2264 = vmatprep.subr.bf16.mxu0 0
        %2265 = vmatpush1.bf16.msra.mxu0 0
        %2266 = vmatprep.subr.bf16.mxu0 0
        %2267 = vmatpush1.bf16.msra.mxu0 0
        %2268 = vmatprep.subr.bf16.mxu0 0
        %2269 = vmatpush1.bf16.msra.mxu0 0
        %2270 = vmatprep.subr.bf16.mxu0 0
        %2271 = vmatpush1.bf16.msra.mxu0 0
        %2272 = vmatprep.mubr.bf16.mxu0 0
        %2273 = vmatmul.mubr.bf16.gmra.mrb[0].mxu0 %v2235
        %v2274 = vpop.f32.mrb[0].mxu0
        %v2275 = vadd.f32 0.0, %v2274
        %v2276 = vpop.f32.mrb[0].mxu0
        %v2277 = vpop.f32.mrb[0].mxu0
        %v2278 = vpop.f32.mrb[0].mxu0
        %2279 = vdwg.mxu0
        %v2281 = vsel %vm2185, %v2183, 0
        %v2284 = vand.u32 %v1939, %v2190
        %2286 = vmatprep.subr.bf16.mxu0 0
        %2287 = vmatpush1.bf16.msra.mxu0 %v2284
        %2288 = vmatprep.subr.bf16.mxu0 0
        %2289 = vmatpush1.bf16.msra.mxu0 0
        %2290 = vmatprep.subr.bf16.mxu0 0
        %2291 = vmatpush1.bf16.msra.mxu0 0
        %2292 = vmatprep.subr.bf16.mxu0 0
        %2293 = vmatpush1.bf16.msra.mxu0 0
        %2294 = vmatprep.subr.bf16.mxu0 0
        %2295 = vmatpush1.bf16.msra.mxu0 0
        %2296 = vmatprep.subr.bf16.mxu0 0
        %2297 = vmatpush1.bf16.msra.mxu0 0
        %2298 = vmatprep.subr.bf16.mxu0 0
        %2299 = vmatpush1.bf16.msra.mxu0 0
        %2300 = vmatprep.subr.bf16.mxu0 0
        %2301 = vmatpush1.bf16.msra.mxu0 0
        %2302 = vmatprep.subr.bf16.mxu0 0
        %2303 = vmatpush1.bf16.msra.mxu0 0
        %2304 = vmatprep.subr.bf16.mxu0 0
        %2305 = vmatpush1.bf16.msra.mxu0 0
        %2306 = vmatprep.subr.bf16.mxu0 0
        %2307 = vmatpush1.bf16.msra.mxu0 0
        %2308 = vmatprep.subr.bf16.mxu0 0
        %2309 = vmatpush1.bf16.msra.mxu0 0
        %2310 = vmatprep.subr.bf16.mxu0 0
        %2311 = vmatpush1.bf16.msra.mxu0 0
        %2312 = vmatprep.subr.bf16.mxu0 0
        %2313 = vmatpush1.bf16.msra.mxu0 0
        %2314 = vmatprep.subr.bf16.mxu0 0
        %2315 = vmatpush1.bf16.msra.mxu0 0
        %2316 = vmatprep.subr.bf16.mxu0 0
        %2317 = vmatpush1.bf16.msra.mxu0 0
        %2318 = vmatprep.mubr.bf16.mxu0 0
        %2319 = vmatmul.mubr.bf16.gmra.mrb[0].mxu0 %v2281
        %v2320 = vpop.f32.mrb[0].mxu0
        %v2321 = vadd.f32 0.0, %v2320
        %v2322 = vpop.f32.mrb[0].mxu0
        %v2323 = vpop.f32.mrb[0].mxu0
        %v2324 = vpop.f32.mrb[0].mxu0
        %2325 = vdwg.mxu0
        %v2327 = vsel %vm2185, %v2184, 0
        %v2330 = vand.u32 %v1940, %v2190
        %2332 = vmatprep.subr.bf16.mxu0 0
        %2333 = vmatpush1.bf16.msra.mxu0 %v2330
        %2334 = vmatprep.subr.bf16.mxu0 0
        %2335 = vmatpush1.bf16.msra.mxu0 0
        %2336 = vmatprep.subr.bf16.mxu0 0
        %2337 = vmatpush1.bf16.msra.mxu0 0
        %2338 = vmatprep.subr.bf16.mxu0 0
        %2339 = vmatpush1.bf16.msra.mxu0 0
        %2340 = vmatprep.subr.bf16.mxu0 0
        %2341 = vmatpush1.bf16.msra.mxu0 0
        %2342 = vmatprep.subr.bf16.mxu0 0
        %2343 = vmatpush1.bf16.msra.mxu0 0
        %2344 = vmatprep.subr.bf16.mxu0 0
        %2345 = vmatpush1.bf16.msra.mxu0 0
        %2346 = vmatprep.subr.bf16.mxu0 0
        %2347 = vmatpush1.bf16.msra.mxu0 0
        %2348 = vmatprep.subr.bf16.mxu0 0
        %2349 = vmatpush1.bf16.msra.mxu0 0
        %2350 = vmatprep.subr.bf16.mxu0 0
        %2351 = vmatpush1.bf16.msra.mxu0 0
        %2352 = vmatprep.subr.bf16.mxu0 0
        %2353 = vmatpush1.bf16.msra.mxu0 0
        %2354 = vmatprep.subr.bf16.mxu0 0
        %2355 = vmatpush1.bf16.msra.mxu0 0
        %2356 = vmatprep.subr.bf16.mxu0 0
        %2357 = vmatpush1.bf16.msra.mxu0 0
        %2358 = vmatprep.subr.bf16.mxu0 0
        %2359 = vmatpush1.bf16.msra.mxu0 0
        %2360 = vmatprep.subr.bf16.mxu0 0
        %2361 = vmatpush1.bf16.msra.mxu0 0
        %2362 = vmatprep.subr.bf16.mxu0 0
        %2363 = vmatpush1.bf16.msra.mxu0 0
        %2364 = vmatprep.mubr.bf16.mxu0 0
        %2365 = vmatmul.mubr.bf16.gmra.mrb[0].mxu0 %v2327
        %v2366 = vpop.f32.mrb[0].mxu0
        %v2367 = vadd.f32 0.0, %v2366
        %v2368 = vpop.f32.mrb[0].mxu0
        %v2369 = vpop.f32.mrb[0].mxu0
        %v2370 = vpop.f32.mrb[0].mxu0
        %2371 = vdwg.mxu0
        %2373 = vrot.lane.b32.xlu0 %v2275, 32
        %v2374 = vpop.permute.xlu0 %2373
        %2377 = vrot.lane.b32.xlu0 %v2321, 64
        %v2378 = vpop.permute.xlu0 %2377
        %2381 = vrot.lane.b32.xlu0 %v2367, 96
        %v2382 = vpop.permute.xlu0 %2381
        %v2384 = vsel %vm1941, %v2229, %v2374
        %vm2385 = vcmask 523264
        %v2386 = vsel %vm2385, %v2384, %v2378
        %vm2387 = vcmask 785408
        %v2388 = vsel %vm2387, %v2386, %v2382
        %v2389 = vpack.c.bf16 %v2388, %v2388
        %v2391 = vlaneseq
        %v2392 = vshrl.u32 %v2391, 7
        %v2393 = vsub.s32 0, %v2392
        %v2394 = vrot.slane %v1367, %v2393
        %v2412 = vunpack.c.l.b16 %v1351
        %v2413 = vunpack.c.l.b16 %v1352
        %v2414 = vunpack.c.l.b16 %v1353
        %v2415 = vunpack.c.l.b16 %v1354
        %v2416 = vunpack.c.l.b16 %v1355
        %v2417 = vunpack.c.l.b16 %v1356
        %v2418 = vunpack.c.l.b16 %v1357
        %v2419 = vunpack.c.l.b16 %v1358
        %v2420 = vunpack.c.l.b16 %v1359
        %v2421 = vunpack.c.l.b16 %v1360
        %v2422 = vunpack.c.l.b16 %v1361
        %v2423 = vunpack.c.l.b16 %v1362
        %v2424 = vunpack.c.l.b16 %v1363
        %v2425 = vunpack.c.l.b16 %v1364
        %v2426 = vunpack.c.l.b16 %v1365
        %v2427 = vunpack.c.l.b16 %v1366
        %v2428 = vpack.c.b16 %v2413, %v2412
        %v2429 = vpack.c.b16 %v2415, %v2414
        %v2430 = vpack.c.b16 %v2417, %v2416
        %v2431 = vpack.c.b16 %v2419, %v2418
        %v2432 = vpack.c.b16 %v2421, %v2420
        %v2433 = vpack.c.b16 %v2423, %v2422
        %v2434 = vpack.c.b16 %v2425, %v2424
        %v2435 = vpack.c.b16 %v2427, %v2426
        %2444 = vmatprep.subr.bf16.mxu0 0
        %2445 = vmatpush1.bf16.msra.mxu0 %v2428
        %2446 = vmatprep.subr.bf16.mxu0 0
        %2447 = vmatpush1.bf16.msra.mxu0 %v2429
        %2448 = vmatprep.subr.bf16.mxu0 0
        %2449 = vmatpush1.bf16.msra.mxu0 %v2430
        %2450 = vmatprep.subr.bf16.mxu0 0
        %2451 = vmatpush1.bf16.msra.mxu0 %v2431
        %2452 = vmatprep.subr.bf16.mxu0 0
        %2453 = vmatpush1.bf16.msra.mxu0 %v2432
        %2454 = vmatprep.subr.bf16.mxu0 0
        %2455 = vmatpush1.bf16.msra.mxu0 %v2433
        %2456 = vmatprep.subr.bf16.mxu0 0
        %2457 = vmatpush1.bf16.msra.mxu0 %v2434
        %2458 = vmatprep.subr.bf16.mxu0 0
        %2459 = vmatpush1.bf16.msra.mxu0 %v2435
        %2460 = vmatprep.subr.bf16.mxu0 0
        %2461 = vmatpush1.bf16.msra.mxu0 0
        %2462 = vmatprep.subr.bf16.mxu0 0
        %2463 = vmatpush1.bf16.msra.mxu0 0
        %2464 = vmatprep.subr.bf16.mxu0 0
        %2465 = vmatpush1.bf16.msra.mxu0 0
        %2466 = vmatprep.subr.bf16.mxu0 0
        %2467 = vmatpush1.bf16.msra.mxu0 0
        %2468 = vmatprep.subr.bf16.mxu0 0
        %2469 = vmatpush1.bf16.msra.mxu0 0
        %2470 = vmatprep.subr.bf16.mxu0 0
        %2471 = vmatpush1.bf16.msra.mxu0 0
        %2472 = vmatprep.subr.bf16.mxu0 0
        %2473 = vmatpush1.bf16.msra.mxu0 0
        %2474 = vmatprep.subr.bf16.mxu0 0
        %2475 = vmatpush1.bf16.msra.mxu0 0
        %2476 = vmatprep.mubr.bf16.mxu0 0
        %2477 = vmatmul.mubr.bf16.gmra.mrb[0].mxu0 %v2389
        %v2478 = vpop.f32.mrb[0].mxu0
        %v2479 = vadd.f32 %v2394, %v2478
        %v2480 = vpop.f32.mrb[0].mxu0
        %v2481 = vpop.f32.mrb[0].mxu0
        %v2482 = vpop.f32.mrb[0].mxu0
        %2483 = vdwg.mxu0
        %v2484 = vadd.f32 %v1315, %v2479
        %v2485 = vsel %vm1644, %v2484, 0.0
        %2486 = vadd.xlane.f32.xlu0 %v2485
        %v2487 = vpop.xlane.xlu0 %2486
        %v2488 = vmul.f32 %v2487, %v1648
        %v2489 = vsub.f32 %v2484, %v2488
        %v2490 = vmul.f32 %v2489, %v2489
        %v2491 = vsel %vm1644, %v2490, 0.0
        %2492 = vadd.xlane.f32.xlu0 %v2491
        %v2493 = vpop.xlane.xlu0 %2492
        %v2494 = vmul.f32 %v2493, %v1648
        %v2495 = vadd.f32 %v2494, 1e-05
        %v2496 = vrsqrt.pop %v2495
        %v2497 = vmul.f32 %v2489, %v2496
        %v2499 = vlaneseq
        %v2500 = vshrl.u32 %v2499, 7
        %v2501 = vsub.s32 0, %v2500
        %v2502 = vrot.slane %v1368, %v2501
        %v2504 = vmul.f32 %v2497, %v2502
        %v2506 = vlaneseq
        %v2507 = vshrl.u32 %v2506, 7
        %v2508 = vsub.s32 0, %v2507
        %v2509 = vrot.slane %v1369, %v2508
        %v2511 = vadd.f32 %v2504, %v2509
        %v2512 = vpack.c.bf16 %v2511, %v2511
        %v2514 = vlaneseq
        %v2515 = vshrl.u32 %v2514, 7
        %v2516 = vsub.s32 0, %v2515
        %v2517 = vrot.slane %v1402, %v2516
        %v2518 = vlaneseq
        %v2519 = vshrl.u32 %v2518, 7
        %v2520 = vsub.s32 1, %v2519
        %v2521 = vrot.slane %v1402, %v2520
        %v2522 = vlaneseq
        %v2523 = vshrl.u32 %v2522, 7
        %v2524 = vsub.s32 2, %v2523
        %v2525 = vrot.slane %v1402, %v2524
        %v2526 = vlaneseq
        %v2527 = vshrl.u32 %v2526, 7
        %v2528 = vsub.s32 3, %v2527
        %v2529 = vrot.slane %v1402, %v2528
        %v2566 = vunpack.c.l.b16 %v1370
        %v2567 = vunpack.c.h.b16 %v1370
        %v2568 = vunpack.c.l.b16 %v1371
        %v2569 = vunpack.c.h.b16 %v1371
        %v2570 = vunpack.c.l.b16 %v1372
        %v2571 = vunpack.c.h.b16 %v1372
        %v2572 = vunpack.c.l.b16 %v1373
        %v2573 = vunpack.c.h.b16 %v1373
        %v2574 = vunpack.c.l.b16 %v1374
        %v2575 = vunpack.c.h.b16 %v1374
        %v2576 = vunpack.c.l.b16 %v1375
        %v2577 = vunpack.c.h.b16 %v1375
        %v2578 = vunpack.c.l.b16 %v1376
        %v2579 = vunpack.c.h.b16 %v1376
        %v2580 = vunpack.c.l.b16 %v1377
        %v2581 = vunpack.c.h.b16 %v1377
        %v2582 = vunpack.c.l.b16 %v1378
        %v2583 = vunpack.c.h.b16 %v1378
        %v2584 = vunpack.c.l.b16 %v1379
        %v2585 = vunpack.c.h.b16 %v1379
        %v2586 = vunpack.c.l.b16 %v1380
        %v2587 = vunpack.c.h.b16 %v1380
        %v2588 = vunpack.c.l.b16 %v1381
        %v2589 = vunpack.c.h.b16 %v1381
        %v2590 = vunpack.c.l.b16 %v1382
        %v2591 = vunpack.c.h.b16 %v1382
        %v2592 = vunpack.c.l.b16 %v1383
        %v2593 = vunpack.c.h.b16 %v1383
        %v2594 = vunpack.c.l.b16 %v1384
        %v2595 = vunpack.c.h.b16 %v1384
        %v2596 = vunpack.c.l.b16 %v1385
        %v2597 = vunpack.c.h.b16 %v1385
        %v2598 = vunpack.c.l.b16 %v1386
        %v2599 = vunpack.c.h.b16 %v1386
        %v2600 = vunpack.c.l.b16 %v1387
        %v2601 = vunpack.c.h.b16 %v1387
        %v2602 = vunpack.c.l.b16 %v1388
        %v2603 = vunpack.c.h.b16 %v1388
        %v2604 = vunpack.c.l.b16 %v1389
        %v2605 = vunpack.c.h.b16 %v1389
        %v2606 = vunpack.c.l.b16 %v1390
        %v2607 = vunpack.c.h.b16 %v1390
        %v2608 = vunpack.c.l.b16 %v1391
        %v2609 = vunpack.c.h.b16 %v1391
        %v2610 = vunpack.c.l.b16 %v1392
        %v2611 = vunpack.c.h.b16 %v1392
        %v2612 = vunpack.c.l.b16 %v1393
        %v2613 = vunpack.c.h.b16 %v1393
        %v2614 = vunpack.c.l.b16 %v1394
        %v2615 = vunpack.c.h.b16 %v1394
        %v2616 = vunpack.c.l.b16 %v1395
        %v2617 = vunpack.c.h.b16 %v1395
        %v2618 = vunpack.c.l.b16 %v1396
        %v2619 = vunpack.c.h.b16 %v1396
        %v2620 = vunpack.c.l.b16 %v1397
        %v2621 = vunpack.c.h.b16 %v1397
        %v2622 = vunpack.c.l.b16 %v1398
        %v2623 = vunpack.c.h.b16 %v1398
        %v2624 = vunpack.c.l.b16 %v1399
        %v2625 = vunpack.c.h.b16 %v1399
        %v2626 = vunpack.c.l.b16 %v1400
        %v2627 = vunpack.c.h.b16 %v1400
        %v2628 = vunpack.c.l.b16 %v1401
        %v2629 = vunpack.c.h.b16 %v1401
        %v2630 = vpack.c.b16 %v2570, %v2566
        %v2631 = vpack.c.b16 %v2571, %v2567
        %v2632 = vpack.c.b16 %v2572, %v2568
        %v2633 = vpack.c.b16 %v2573, %v2569
        %v2634 = vpack.c.b16 %v2578, %v2574
        %v2635 = vpack.c.b16 %v2579, %v2575
        %v2636 = vpack.c.b16 %v2580, %v2576
        %v2637 = vpack.c.b16 %v2581, %v2577
        %v2638 = vpack.c.b16 %v2586, %v2582
        %v2639 = vpack.c.b16 %v2587, %v2583
        %v2640 = vpack.c.b16 %v2588, %v2584
        %v2641 = vpack.c.b16 %v2589, %v2585
        %v2642 = vpack.c.b16 %v2594, %v2590
        %v2643 = vpack.c.b16 %v2595, %v2591
        %v2644 = vpack.c.b16 %v2596, %v2592
        %v2645 = vpack.c.b16 %v2597, %v2593
        %v2646 = vpack.c.b16 %v2602, %v2598
        %v2647 = vpack.c.b16 %v2603, %v2599
        %v2648 = vpack.c.b16 %v2604, %v2600
        %v2649 = vpack.c.b16 %v2605, %v2601
        %v2650 = vpack.c.b16 %v2610, %v2606
        %v2651 = vpack.c.b16 %v2611, %v2607
        %v2652 = vpack.c.b16 %v2612, %v2608
        %v2653 = vpack.c.b16 %v2613, %v2609
        %v2654 = vpack.c.b16 %v2618, %v2614
        %v2655 = vpack.c.b16 %v2619, %v2615
        %v2656 = vpack.c.b16 %v2620, %v2616
        %v2657 = vpack.c.b16 %v2621, %v2617
        %v2658 = vpack.c.b16 %v2626, %v2622
        %v2659 = vpack.c.b16 %v2627, %v2623
        %v2660 = vpack.c.b16 %v2628, %v2624
        %v2661 = vpack.c.b16 %v2629, %v2625
        %2694 = vmatprep.subr.bf16.mxu0 %v2631
        %2695 = vmatpush1.bf16.msra.mxu0 %v2630
        %2696 = vmatprep.subr.bf16.mxu0 %v2635
        %2697 = vmatpush1.bf16.msra.mxu0 %v2634
        %2698 = vmatprep.subr.bf16.mxu0 %v2639
        %2699 = vmatpush1.bf16.msra.mxu0 %v2638
        %2700 = vmatprep.subr.bf16.mxu0 %v2643
        %2701 = vmatpush1.bf16.msra.mxu0 %v2642
        %2702 = vmatprep.subr.bf16.mxu0 %v2647
        %2703 = vmatpush1.bf16.msra.mxu0 %v2646
        %2704 = vmatprep.subr.bf16.mxu0 %v2651
        %2705 = vmatpush1.bf16.msra.mxu0 %v2650
        %2706 = vmatprep.subr.bf16.mxu0 %v2655
        %2707 = vmatpush1.bf16.msra.mxu0 %v2654
        %2708 = vmatprep.subr.bf16.mxu0 %v2659
        %2709 = vmatpush1.bf16.msra.mxu0 %v2658
        %2710 = vmatprep.subr.bf16.mxu0 0
        %2711 = vmatpush1.bf16.msra.mxu0 0
        %2712 = vmatprep.subr.bf16.mxu0 0
        %2713 = vmatpush1.bf16.msra.mxu0 0
        %2714 = vmatprep.subr.bf16.mxu0 0
        %2715 = vmatpush1.bf16.msra.mxu0 0
        %2716 = vmatprep.subr.bf16.mxu0 0
        %2717 = vmatpush1.bf16.msra.mxu0 0
        %2718 = vmatprep.subr.bf16.mxu0 0
        %2719 = vmatpush1.bf16.msra.mxu0 0
        %2720 = vmatprep.subr.bf16.mxu0 0
        %2721 = vmatpush1.bf16.msra.mxu0 0
        %2722 = vmatprep.subr.bf16.mxu0 0
        %2723 = vmatpush1.bf16.msra.mxu0 0
        %2724 = vmatprep.subr.bf16.mxu0 0
        %2725 = vmatpush1.bf16.msra.mxu0 0
        %2726 = vmatprep.mubr.bf16.mxu0 0
        %2727 = vmatmul.mubr.bf16.gmra.mrb[0].mxu0 %v2512
        %v2728 = vpop.f32.mrb[0].mxu0
        %v2729 = vadd.f32 %v2517, %v2728
        %v2730 = vpop.f32.mrb[0].mxu0
        %v2731 = vadd.f32 %v2521, %v2730
        %v2732 = vpop.f32.mrb[0].mxu0
        %v2733 = vpop.f32.mrb[0].mxu0
        %2734 = vdwg.mxu0
        %2735 = vmatprep.subr.bf16.mxu0 %v2633
        %2736 = vmatpush1.bf16.msra.mxu0 %v2632
        %2737 = vmatprep.subr.bf16.mxu0 %v2637
        %2738 = vmatpush1.bf16.msra.mxu0 %v2636
        %2739 = vmatprep.subr.bf16.mxu0 %v2641
        %2740 = vmatpush1.bf16.msra.mxu0 %v2640
        %2741 = vmatprep.subr.bf16.mxu0 %v2645
        %2742 = vmatpush1.bf16.msra.mxu0 %v2644
        %2743 = vmatprep.subr.bf16.mxu0 %v2649
        %2744 = vmatpush1.bf16.msra.mxu0 %v2648
        %2745 = vmatprep.subr.bf16.mxu0 %v2653
        %2746 = vmatpush1.bf16.msra.mxu0 %v2652
        %2747 = vmatprep.subr.bf16.mxu0 %v2657
        %2748 = vmatpush1.bf16.msra.mxu0 %v2656
        %2749 = vmatprep.subr.bf16.mxu0 %v2661
        %2750 = vmatpush1.bf16.msra.mxu0 %v2660
        %2751 = vmatprep.subr.bf16.mxu0 0
        %2752 = vmatpush1.bf16.msra.mxu0 0
        %2753 = vmatprep.subr.bf16.mxu0 0
        %2754 = vmatpush1.bf16.msra.mxu0 0
        %2755 = vmatprep.subr.bf16.mxu0 0
        %2756 = vmatpush1.bf16.msra.mxu0 0
        %2757 = vmatprep.subr.bf16.mxu0 0
        %2758 = vmatpush1.bf16.msra.mxu0 0
        %2759 = vmatprep.subr.bf16.mxu0 0
        %2760 = vmatpush1.bf16.msra.mxu0 0
        %2761 = vmatprep.subr.bf16.mxu0 0
        %2762 = vmatpush1.bf16.msra.mxu0 0
        %2763 = vmatprep.subr.bf16.mxu0 0
        %2764 = vmatpush1.bf16.msra.mxu0 0
        %2765 = vmatprep.subr.bf16.mxu0 0
        %2766 = vmatpush1.bf16.msra.mxu0 0
        %2767 = vmatprep.mubr.bf16.mxu0 0
        %2768 = vmatmul.mubr.bf16.gmra.mrb[0].mxu0 %v2512
        %v2769 = vpop.f32.mrb[0].mxu0
        %v2770 = vadd.f32 %v2525, %v2769
        %v2771 = vpop.f32.mrb[0].mxu0
        %v2772 = vadd.f32 %v2529, %v2771
        %v2773 = vpop.f32.mrb[0].mxu0
        %v2774 = vpop.f32.mrb[0].mxu0
        %2775 = vdwg.mxu0
        %v2776 = vmul.f32 %v2729, 0.5
        %v2777 = vmul.f32 %v2731, 0.5
        %v2778 = vmul.f32 %v2770, 0.5
        %v2779 = vmul.f32 %v2772, 0.5
        %v2780 = vmul.f32 %v2729, 0.044715
        %v2781 = vmul.f32 %v2731, 0.044715
        %v2782 = vmul.f32 %v2770, 0.044715
        %v2783 = vmul.f32 %v2772, 0.044715
        %v2784 = vmul.f32 %v2780, %v2729
        %v2785 = vmul.f32 %v2781, %v2731
        %v2786 = vmul.f32 %v2782, %v2770
        %v2787 = vmul.f32 %v2783, %v2772
        %v2788 = vmul.f32 %v2784, %v2729
        %v2789 = vmul.f32 %v2785, %v2731
        %v2790 = vmul.f32 %v2786, %v2770
        %v2791 = vmul.f32 %v2787, %v2772
        %v2792 = vadd.f32 %v2729, %v2788
        %v2793 = vadd.f32 %v2731, %v2789
        %v2794 = vadd.f32 %v2770, %v2790
        %v2795 = vadd.f32 %v2772, %v2791
        %v2796 = vmul.f32 %v2792, 0.7978846
        %v2797 = vmul.f32 %v2793, 0.7978846
        %v2798 = vmul.f32 %v2794, 0.7978846
        %v2799 = vmul.f32 %v2795, 0.7978846
        %v2800 = vtanh.pop %v2796
        %v2801 = vtanh.pop %v2797
        %v2802 = vtanh.pop %v2798
        %v2803 = vtanh.pop %v2799
        %v2804 = vadd.f32 %v2800, 1.0
        %v2805 = vadd.f32 %v2801, 1.0
        %v2806 = vadd.f32 %v2802, 1.0
        %v2807 = vadd.f32 %v2803, 1.0
        %v2808 = vmul.f32 %v2776, %v2804
        %v2809 = vmul.f32 %v2777, %v2805
        %v2810 = vmul.f32 %v2778, %v2806
        %v2811 = vmul.f32 %v2779, %v2807
        %v2812 = vpack.c.bf16 %v2808, %v2808
        %v2813 = vpack.c.bf16 %v2809, %v2809
        %v2814 = vpack.c.bf16 %v2810, %v2810
        %v2815 = vpack.c.bf16 %v2811, %v2811
        %v2817 = vlaneseq
        %v2818 = vshrl.u32 %v2817, 7
        %v2819 = vsub.s32 0, %v2818
        %v2820 = vrot.slane %v1467, %v2819
        %v2886 = vunpack.c.l.b16 %v1403
        %v2887 = vunpack.c.l.b16 %v1404
        %v2888 = vunpack.c.l.b16 %v1405
        %v2889 = vunpack.c.l.b16 %v1406
        %v2890 = vunpack.c.l.b16 %v1407
        %v2891 = vunpack.c.l.b16 %v1408
        %v2892 = vunpack.c.l.b16 %v1409
        %v2893 = vunpack.c.l.b16 %v1410
        %v2894 = vunpack.c.l.b16 %v1411
        %v2895 = vunpack.c.l.b16 %v1412
        %v2896 = vunpack.c.l.b16 %v1413
        %v2897 = vunpack.c.l.b16 %v1414
        %v2898 = vunpack.c.l.b16 %v1415
        %v2899 = vunpack.c.l.b16 %v1416
        %v2900 = vunpack.c.l.b16 %v1417
        %v2901 = vunpack.c.l.b16 %v1418
        %v2902 = vunpack.c.l.b16 %v1419
        %v2903 = vunpack.c.l.b16 %v1420
        %v2904 = vunpack.c.l.b16 %v1421
        %v2905 = vunpack.c.l.b16 %v1422
        %v2906 = vunpack.c.l.b16 %v1423
        %v2907 = vunpack.c.l.b16 %v1424
        %v2908 = vunpack.c.l.b16 %v1425
        %v2909 = vunpack.c.l.b16 %v1426
        %v2910 = vunpack.c.l.b16 %v1427
        %v2911 = vunpack.c.l.b16 %v1428
        %v2912 = vunpack.c.l.b16 %v1429
        %v2913 = vunpack.c.l.b16 %v1430
        %v2914 = vunpack.c.l.b16 %v1431
        %v2915 = vunpack.c.l.b16 %v1432
        %v2916 = vunpack.c.l.b16 %v1433
        %v2917 = vunpack.c.l.b16 %v1434
        %v2918 = vunpack.c.l.b16 %v1435
        %v2919 = vunpack.c.l.b16 %v1436
        %v2920 = vunpack.c.l.b16 %v1437
        %v2921 = vunpack.c.l.b16 %v1438
        %v2922 = vunpack.c.l.b16 %v1439
        %v2923 = vunpack.c.l.b16 %v1440
        %v2924 = vunpack.c.l.b16 %v1441
        %v2925 = vunpack.c.l.b16 %v1442
        %v2926 = vunpack.c.l.b16 %v1443
        %v2927 = vunpack.c.l.b16 %v1444
        %v2928 = vunpack.c.l.b16 %v1445
        %v2929 = vunpack.c.l.b16 %v1446
        %v2930 = vunpack.c.l.b16 %v1447
        %v2931 = vunpack.c.l.b16 %v1448
        %v2932 = vunpack.c.l.b16 %v1449
        %v2933 = vunpack.c.l.b16 %v1450
        %v2934 = vunpack.c.l.b16 %v1451
        %v2935 = vunpack.c.l.b16 %v1452
        %v2936 = vunpack.c.l.b16 %v1453
        %v2937 = vunpack.c.l.b16 %v1454
        %v2938 = vunpack.c.l.b16 %v1455
        %v2939 = vunpack.c.l.b16 %v1456
        %v2940 = vunpack.c.l.b16 %v1457
        %v2941 = vunpack.c.l.b16 %v1458
        %v2942 = vunpack.c.l.b16 %v1459
        %v2943 = vunpack.c.l.b16 %v1460
        %v2944 = vunpack.c.l.b16 %v1461
        %v2945 = vunpack.c.l.b16 %v1462
        %v2946 = vunpack.c.l.b16 %v1463
        %v2947 = vunpack.c.l.b16 %v1464
        %v2948 = vunpack.c.l.b16 %v1465
        %v2949 = vunpack.c.l.b16 %v1466
        %v2950 = vpack.c.b16 %v2887, %v2886
        %v2951 = vpack.c.b16 %v2889, %v2888
        %v2952 = vpack.c.b16 %v2891, %v2890
        %v2953 = vpack.c.b16 %v2893, %v2892
        %v2954 = vpack.c.b16 %v2895, %v2894
        %v2955 = vpack.c.b16 %v2897, %v2896
        %v2956 = vpack.c.b16 %v2899, %v2898
        %v2957 = vpack.c.b16 %v2901, %v2900
        %v2958 = vpack.c.b16 %v2903, %v2902
        %v2959 = vpack.c.b16 %v2905, %v2904
        %v2960 = vpack.c.b16 %v2907, %v2906
        %v2961 = vpack.c.b16 %v2909, %v2908
        %v2962 = vpack.c.b16 %v2911, %v2910
        %v2963 = vpack.c.b16 %v2913, %v2912
        %v2964 = vpack.c.b16 %v2915, %v2914
        %v2965 = vpack.c.b16 %v2917, %v2916
        %v2966 = vpack.c.b16 %v2919, %v2918
        %v2967 = vpack.c.b16 %v2921, %v2920
        %v2968 = vpack.c.b16 %v2923, %v2922
        %v2969 = vpack.c.b16 %v2925, %v2924
        %v2970 = vpack.c.b16 %v2927, %v2926
        %v2971 = vpack.c.b16 %v2929, %v2928
        %v2972 = vpack.c.b16 %v2931, %v2930
        %v2973 = vpack.c.b16 %v2933, %v2932
        %v2974 = vpack.c.b16 %v2935, %v2934
        %v2975 = vpack.c.b16 %v2937, %v2936
        %v2976 = vpack.c.b16 %v2939, %v2938
        %v2977 = vpack.c.b16 %v2941, %v2940
        %v2978 = vpack.c.b16 %v2943, %v2942
        %v2979 = vpack.c.b16 %v2945, %v2944
        %v2980 = vpack.c.b16 %v2947, %v2946
        %v2981 = vpack.c.b16 %v2949, %v2948
        %3014 = vmatprep.subr.bf16.mxu0 0
        %3015 = vmatpush1.bf16.msra.mxu0 %v2950
        %3016 = vmatprep.subr.bf16.mxu0 0
        %3017 = vmatpush1.bf16.msra.mxu0 %v2951
        %3018 = vmatprep.subr.bf16.mxu0 0
        %3019 = vmatpush1.bf16.msra.mxu0 %v2952
        %3020 = vmatprep.subr.bf16.mxu0 0
        %3021 = vmatpush1.bf16.msra.mxu0 %v2953
        %3022 = vmatprep.subr.bf16.mxu0 0
        %3023 = vmatpush1.bf16.msra.mxu0 %v2954
        %3024 = vmatprep.subr.bf16.mxu0 0
        %3025 = vmatpush1.bf16.msra.mxu0 %v2955
        %3026 = vmatprep.subr.bf16.mxu0 0
        %3027 = vmatpush1.bf16.msra.mxu0 %v2956
        %3028 = vmatprep.subr.bf16.mxu0 0
        %3029 = vmatpush1.bf16.msra.mxu0 %v2957
        %3030 = vmatprep.subr.bf16.mxu0 0
        %3031 = vmatpush1.bf16.msra.mxu0 %v2958
        %3032 = vmatprep.subr.bf16.mxu0 0
        %3033 = vmatpush1.bf16.msra.mxu0 %v2959
        %3034 = vmatprep.subr.bf16.mxu0 0
        %3035 = vmatpush1.bf16.msra.mxu0 %v2960
        %3036 = vmatprep.subr.bf16.mxu0 0
        %3037 = vmatpush1.bf16.msra.mxu0 %v2961
        %3038 = vmatprep.subr.bf16.mxu0 0
        %3039 = vmatpush1.bf16.msra.mxu0 %v2962
        %3040 = vmatprep.subr.bf16.mxu0 0
        %3041 = vmatpush1.bf16.msra.mxu0 %v2963
        %3042 = vmatprep.subr.bf16.mxu0 0
        %3043 = vmatpush1.bf16.msra.mxu0 %v2964
        %3044 = vmatprep.subr.bf16.mxu0 0
        %3045 = vmatpush1.bf16.msra.mxu0 %v2965
        %3046 = vmatprep.mubr.bf16.mxu0 %v2813
        %3047 = vmatmul.mubr.bf16.gmra.mrb[0].mxu0 %v2812
        %v3048 = vpop.f32.mrb[0].mxu0
        %v3049 = vadd.f32 %v2820, %v3048
        %v3050 = vpop.f32.mrb[0].mxu0
        %v3051 = vpop.f32.mrb[0].mxu0
        %v3052 = vpop.f32.mrb[0].mxu0
        %3053 = vdwg.mxu0
        %3054 = vmatprep.subr.bf16.mxu0 0
        %3055 = vmatpush1.bf16.msra.mxu0 %v2966
        %3056 = vmatprep.subr.bf16.mxu0 0
        %3057 = vmatpush1.bf16.msra.mxu0 %v2967
        %3058 = vmatprep.subr.bf16.mxu0 0
        %3059 = vmatpush1.bf16.msra.mxu0 %v2968
        %3060 = vmatprep.subr.bf16.mxu0 0
        %3061 = vmatpush1.bf16.msra.mxu0 %v2969
        %3062 = vmatprep.subr.bf16.mxu0 0
        %3063 = vmatpush1.bf16.msra.mxu0 %v2970
        %3064 = vmatprep.subr.bf16.mxu0 0
        %3065 = vmatpush1.bf16.msra.mxu0 %v2971
        %3066 = vmatprep.subr.bf16.mxu0 0
        %3067 = vmatpush1.bf16.msra.mxu0 %v2972
        %3068 = vmatprep.subr.bf16.mxu0 0
        %3069 = vmatpush1.bf16.msra.mxu0 %v2973
        %3070 = vmatprep.subr.bf16.mxu0 0
        %3071 = vmatpush1.bf16.msra.mxu0 %v2974
        %3072 = vmatprep.subr.bf16.mxu0 0
        %3073 = vmatpush1.bf16.msra.mxu0 %v2975
        %3074 = vmatprep.subr.bf16.mxu0 0
        %3075 = vmatpush1.bf16.msra.mxu0 %v2976
        %3076 = vmatprep.subr.bf16.mxu0 0
        %3077 = vmatpush1.bf16.msra.mxu0 %v2977
        %3078 = vmatprep.subr.bf16.mxu0 0
        %3079 = vmatpush1.bf16.msra.mxu0 %v2978
        %3080 = vmatprep.subr.bf16.mxu0 0
        %3081 = vmatpush1.bf16.msra.mxu0 %v2979
        %3082 = vmatprep.subr.bf16.mxu0 0
        %3083 = vmatpush1.bf16.msra.mxu0 %v2980
        %3084 = vmatprep.subr.bf16.mxu0 0
        %3085 = vmatpush1.bf16.msra.mxu0 %v2981
        %3086 = vmatprep.mubr.bf16.mxu0 %v2815
        %3087 = vmatmul.mubr.bf16.gmra.mrb[0].mxu0 %v2814
        %v3088 = vpop.f32.mrb[0].mxu0
        %v3089 = vadd.f32 %v3049, %v3088
        %v3090 = vpop.f32.mrb[0].mxu0
        %v3091 = vpop.f32.mrb[0].mxu0
        %v3092 = vpop.f32.mrb[0].mxu0
        %3093 = vdwg.mxu0
        %v3094 = vadd.f32 %v2484, %v3089
        %v3095 = vsel %vm1644, %v3094, 0.0
        %3096 = vadd.xlane.f32.xlu0 %v3095
        %v3097 = vpop.xlane.xlu0 %3096
        %v3098 = vmul.f32 %v3097, %v1648
        %v3099 = vsub.f32 %v3094, %v3098
        %v3100 = vmul.f32 %v3099, %v3099
        %v3101 = vsel %vm1644, %v3100, 0.0
        %3102 = vadd.xlane.f32.xlu0 %v3101
        %v3103 = vpop.xlane.xlu0 %3102
        %v3104 = vmul.f32 %v3103, %v1648
        %v3105 = vadd.f32 %v3104, 1e-05
        %v3106 = vrsqrt.pop %v3105
        %v3107 = vmul.f32 %v3099, %v3106
        %v3109 = vlaneseq
        %v3110 = vshrl.u32 %v3109, 7
        %v3111 = vsub.s32 0, %v3110
        %v3112 = vrot.slane %v1468, %v3111
        %v3114 = vmul.f32 %v3107, %v3112
        %v3116 = vlaneseq
        %v3117 = vshrl.u32 %v3116, 7
        %v3118 = vsub.s32 0, %v3117
        %v3119 = vrot.slane %v1469, %v3118
        %v3121 = vadd.f32 %v3114, %v3119
        %v3122 = vpack.c.bf16 %v3121, %v3121
        %v3124 = vlaneseq
        %v3125 = vshrl.u32 %v3124, 7
        %v3126 = vsub.s32 0, %v3125
        %v3127 = vrot.slane %v1502, %v3126
        %v3128 = vlaneseq
        %v3129 = vshrl.u32 %v3128, 7
        %v3130 = vsub.s32 1, %v3129
        %v3131 = vrot.slane %v1502, %v3130
        %v3132 = vlaneseq
        %v3133 = vshrl.u32 %v3132, 7
        %v3134 = vsub.s32 2, %v3133
        %v3135 = vrot.slane %v1502, %v3134
        %v3171 = vunpack.c.l.b16 %v1470
        %v3172 = vunpack.c.h.b16 %v1470
        %v3173 = vunpack.c.l.b16 %v1471
        %v3174 = vunpack.c.l.b16 %v1472
        %v3175 = vunpack.c.h.b16 %v1472
        %v3176 = vunpack.c.l.b16 %v1473
        %v3177 = vunpack.c.l.b16 %v1474
        %v3178 = vunpack.c.h.b16 %v1474
        %v3179 = vunpack.c.l.b16 %v1475
        %v3180 = vunpack.c.l.b16 %v1476
        %v3181 = vunpack.c.h.b16 %v1476
        %v3182 = vunpack.c.l.b16 %v1477
        %v3183 = vunpack.c.l.b16 %v1478
        %v3184 = vunpack.c.h.b16 %v1478
        %v3185 = vunpack.c.l.b16 %v1479
        %v3186 = vunpack.c.l.b16 %v1480
        %v3187 = vunpack.c.h.b16 %v1480
        %v3188 = vunpack.c.l.b16 %v1481
        %v3189 = vunpack.c.l.b16 %v1482
        %v3190 = vunpack.c.h.b16 %v1482
        %v3191 = vunpack.c.l.b16 %v1483
        %v3192 = vunpack.c.l.b16 %v1484
        %v3193 = vunpack.c.h.b16 %v1484
        %v3194 = vunpack.c.l.b16 %v1485
        %v3195 = vunpack.c.l.b16 %v1486
        %v3196 = vunpack.c.h.b16 %v1486
        %v3197 = vunpack.c.l.b16 %v1487
        %v3198 = vunpack.c.l.b16 %v1488
        %v3199 = vunpack.c.h.b16 %v1488
        %v3200 = vunpack.c.l.b16 %v1489
        %v3201 = vunpack.c.l.b16 %v1490
        %v3202 = vunpack.c.h.b16 %v1490
        %v3203 = vunpack.c.l.b16 %v1491
        %v3204 = vunpack.c.l.b16 %v1492
        %v3205 = vunpack.c.h.b16 %v1492
        %v3206 = vunpack.c.l.b16 %v1493
        %v3207 = vunpack.c.l.b16 %v1494
        %v3208 = vunpack.c.h.b16 %v1494
        %v3209 = vunpack.c.l.b16 %v1495
        %v3210 = vunpack.c.l.b16 %v1496
        %v3211 = vunpack.c.h.b16 %v1496
        %v3212 = vunpack.c.l.b16 %v1497
        %v3213 = vunpack.c.l.b16 %v1498
        %v3214 = vunpack.c.h.b16 %v1498
        %v3215 = vunpack.c.l.b16 %v1499
        %v3216 = vunpack.c.l.b16 %v1500
        %v3217 = vunpack.c.h.b16 %v1500
        %v3218 = vunpack.c.l.b16 %v1501
        %v3219 = vpack.c.b16 %v3174, %v3171
        %v3220 = vpack.c.b16 %v3175, %v3172
        %v3221 = vpack.c.b16 %v3176, %v3173
        %v3222 = vpack.c.b16 %v3180, %v3177
        %v3223 = vpack.c.b16 %v3181, %v3178
        %v3224 = vpack.c.b16 %v3182, %v3179
        %v3225 = vpack.c.b16 %v3186, %v3183
        %v3226 = vpack.c.b16 %v3187, %v3184
        %v3227 = vpack.c.b16 %v3188, %v3185
        %v3228 = vpack.c.b16 %v3192, %v3189
        %v3229 = vpack.c.b16 %v3193, %v3190
        %v3230 = vpack.c.b16 %v3194, %v3191
        %v3231 = vpack.c.b16 %v3198, %v3195
        %v3232 = vpack.c.b16 %v3199, %v3196
        %v3233 = vpack.c.b16 %v3200, %v3197
        %v3234 = vpack.c.b16 %v3204, %v3201
        %v3235 = vpack.c.b16 %v3205, %v3202
        %v3236 = vpack.c.b16 %v3206, %v3203
        %v3237 = vpack.c.b16 %v3210, %v3207
        %v3238 = vpack.c.b16 %v3211, %v3208
        %v3239 = vpack.c.b16 %v3212, %v3209
        %v3240 = vpack.c.b16 %v3216, %v3213
        %v3241 = vpack.c.b16 %v3217, %v3214
        %v3242 = vpack.c.b16 %v3218, %v3215
        %3267 = vmatprep.subr.bf16.mxu0 %v3220
        %3268 = vmatpush1.bf16.msra.mxu0 %v3219
        %3269 = vmatprep.subr.bf16.mxu0 %v3223
        %3270 = vmatpush1.bf16.msra.mxu0 %v3222
        %3271 = vmatprep.subr.bf16.mxu0 %v3226
        %3272 = vmatpush1.bf16.msra.mxu0 %v3225
        %3273 = vmatprep.subr.bf16.mxu0 %v3229
        %3274 = vmatpush1.bf16.msra.mxu0 %v3228
        %3275 = vmatprep.subr.bf16.mxu0 %v3232
        %3276 = vmatpush1.bf16.msra.mxu0 %v3231
        %3277 = vmatprep.subr.bf16.mxu0 %v3235
        %3278 = vmatpush1.bf16.msra.mxu0 %v3234
        %3279 = vmatprep.subr.bf16.mxu0 %v3238
        %3280 = vmatpush1.bf16.msra.mxu0 %v3237
        %3281 = vmatprep.subr.bf16.mxu0 %v3241
        %3282 = vmatpush1.bf16.msra.mxu0 %v3240
        %3283 = vmatprep.subr.bf16.mxu0 0
        %3284 = vmatpush1.bf16.msra.mxu0 0
        %3285 = vmatprep.subr.bf16.mxu0 0
        %3286 = vmatpush1.bf16.msra.mxu0 0
        %3287 = vmatprep.subr.bf16.mxu0 0
        %3288 = vmatpush1.bf16.msra.mxu0 0
        %3289 = vmatprep.subr.bf16.mxu0 0
        %3290 = vmatpush1.bf16.msra.mxu0 0
        %3291 = vmatprep.subr.bf16.mxu0 0
        %3292 = vmatpush1.bf16.msra.mxu0 0
        %3293 = vmatprep.subr.bf16.mxu0 0
        %3294 = vmatpush1.bf16.msra.mxu0 0
        %3295 = vmatprep.subr.bf16.mxu0 0
        %3296 = vmatpush1.bf16.msra.mxu0 0
        %3297 = vmatprep.subr.bf16.mxu0 0
        %3298 = vmatpush1.bf16.msra.mxu0 0
        %3299 = vmatprep.mubr.bf16.mxu0 0
        %3300 = vmatmul.mubr.bf16.gmra.mrb[0].mxu0 %v3122
        %v3301 = vpop.f32.mrb[0].mxu0
        %v3302 = vadd.f32 %v3127, %v3301
        %v3303 = vpop.f32.mrb[0].mxu0
        %v3304 = vadd.f32 %v3131, %v3303
        %v3305 = vpop.f32.mrb[0].mxu0
        %v3306 = vpop.f32.mrb[0].mxu0
        %3307 = vdwg.mxu0
        %3308 = vmatprep.subr.bf16.mxu0 0
        %3309 = vmatpush1.bf16.msra.mxu0 %v3221
        %3310 = vmatprep.subr.bf16.mxu0 0
        %3311 = vmatpush1.bf16.msra.mxu0 %v3224
        %3312 = vmatprep.subr.bf16.mxu0 0
        %3313 = vmatpush1.bf16.msra.mxu0 %v3227
        %3314 = vmatprep.subr.bf16.mxu0 0
        %3315 = vmatpush1.bf16.msra.mxu0 %v3230
        %3316 = vmatprep.subr.bf16.mxu0 0
        %3317 = vmatpush1.bf16.msra.mxu0 %v3233
        %3318 = vmatprep.subr.bf16.mxu0 0
        %3319 = vmatpush1.bf16.msra.mxu0 %v3236
        %3320 = vmatprep.subr.bf16.mxu0 0
        %3321 = vmatpush1.bf16.msra.mxu0 %v3239
        %3322 = vmatprep.subr.bf16.mxu0 0
        %3323 = vmatpush1.bf16.msra.mxu0 %v3242
        %3324 = vmatprep.subr.bf16.mxu0 0
        %3325 = vmatpush1.bf16.msra.mxu0 0
        %3326 = vmatprep.subr.bf16.mxu0 0
        %3327 = vmatpush1.bf16.msra.mxu0 0
        %3328 = vmatprep.subr.bf16.mxu0 0
        %3329 = vmatpush1.bf16.msra.mxu0 0
        %3330 = vmatprep.subr.bf16.mxu0 0
        %3331 = vmatpush1.bf16.msra.mxu0 0
        %3332 = vmatprep.subr.bf16.mxu0 0
        %3333 = vmatpush1.bf16.msra.mxu0 0
        %3334 = vmatprep.subr.bf16.mxu0 0
        %3335 = vmatpush1.bf16.msra.mxu0 0
        %3336 = vmatprep.subr.bf16.mxu0 0
        %3337 = vmatpush1.bf16.msra.mxu0 0
        %3338 = vmatprep.subr.bf16.mxu0 0
        %3339 = vmatpush1.bf16.msra.mxu0 0
        %3340 = vmatprep.mubr.bf16.mxu0 0
        %3341 = vmatmul.mubr.bf16.gmra.mrb[0].mxu0 %v3122
        %v3342 = vpop.f32.mrb[0].mxu0
        %v3343 = vadd.f32 %v3135, %v3342
        %v3344 = vpop.f32.mrb[0].mxu0
        %v3345 = vpop.f32.mrb[0].mxu0
        %v3346 = vpop.f32.mrb[0].mxu0
        %3347 = vdwg.mxu0
        %3349 = vrot.lane.b32.xlu0 %v3302, 96
        %v3350 = vpop.permute.xlu0 %3349
        %3352 = vrot.lane.b32.xlu0 %v3302, 64
        %v3353 = vpop.permute.xlu0 %3352
        %3355 = vrot.lane.b32.xlu0 %v3302, 32
        %v3356 = vpop.permute.xlu0 %3355
        %v3358 = vpack.c.bf16 %v3302, %v3302
        %v3359 = vpack.c.bf16 %v3350, %v3350
        %v3360 = vpack.c.bf16 %v3353, %v3353
        %v3361 = vpack.c.bf16 %v3356, %v3356
        %3363 = vrot.lane.b32.xlu0 %v3304, 96
        %v3364 = vpop.permute.xlu0 %3363
        %3366 = vrot.lane.b32.xlu0 %v3304, 64
        %v3367 = vpop.permute.xlu0 %3366
        %3369 = vrot.lane.b32.xlu0 %v3304, 32
        %v3370 = vpop.permute.xlu0 %3369
        %v3372 = vpack.c.bf16 %v3304, %v3304
        %v3373 = vpack.c.bf16 %v3364, %v3364
        %v3374 = vpack.c.bf16 %v3367, %v3367
        %v3375 = vpack.c.bf16 %v3370, %v3370
        %3377 = vrot.lane.b32.xlu0 %v3343, 96
        %v3378 = vpop.permute.xlu0 %3377
        %3380 = vrot.lane.b32.xlu0 %v3343, 64
        %v3381 = vpop.permute.xlu0 %3380
        %3383 = vrot.lane.b32.xlu0 %v3343, 32
        %v3384 = vpop.permute.xlu0 %3383
        %v3386 = vpack.c.bf16 %v3343, %v3343
        %v3387 = vpack.c.bf16 %v3378, %v3378
        %v3388 = vpack.c.bf16 %v3381, %v3381
        %v3389 = vpack.c.bf16 %v3384, %v3384
        %v3391 = vsel %vm1941, %v3358, 0
        %v3394 = vsel %vm1941, %v3372, 0
        %3396 = vmatprep.subr.bf16.mxu0 0
        %3397 = vmatpush1.bf16.xpose.msra.mxu0 %v3394
        %3398 = vmatprep.subr.bf16.mxu0 0
        %3399 = vmatpush1.bf16.xpose.msra.mxu0 0
        %3400 = vmatprep.subr.bf16.mxu0 0
        %3401 = vmatpush1.bf16.xpose.msra.mxu0 0
        %3402 = vmatprep.subr.bf16.mxu0 0
        %3403 = vmatpush1.bf16.xpose.msra.mxu0 0
        %3404 = vmatprep.subr.bf16.mxu0 0
        %3405 = vmatpush1.bf16.xpose.msra.mxu0 0
        %3406 = vmatprep.subr.bf16.mxu0 0
        %3407 = vmatpush1.bf16.xpose.msra.mxu0 0
        %3408 = vmatprep.subr.bf16.mxu0 0
        %3409 = vmatpush1.bf16.xpose.msra.mxu0 0
        %3410 = vmatprep.subr.bf16.mxu0 0
        %3411 = vmatpush1.bf16.xpose.msra.mxu0 0
        %3412 = vmatprep.subr.bf16.mxu0 0
        %3413 = vmatpush1.bf16.xpose.msra.mxu0 0
        %3414 = vmatprep.subr.bf16.mxu0 0
        %3415 = vmatpush1.bf16.xpose.msra.mxu0 0
        %3416 = vmatprep.subr.bf16.mxu0 0
        %3417 = vmatpush1.bf16.xpose.msra.mxu0 0
        %3418 = vmatprep.subr.bf16.mxu0 0
        %3419 = vmatpush1.bf16.xpose.msra.mxu0 0
        %3420 = vmatprep.subr.bf16.mxu0 0
        %3421 = vmatpush1.bf16.xpose.msra.mxu0 0
        %3422 = vmatprep.subr.bf16.mxu0 0
        %3423 = vmatpush1.bf16.xpose.msra.mxu0 0
        %3424 = vmatprep.subr.bf16.mxu0 0
        %3425 = vmatpush1.bf16.xpose.msra.mxu0 0
        %3426 = vmatprep.subr.bf16.mxu0 0
        %3427 = vmatpush1.bf16.xpose.msra.mxu0 0
        %3428 = vmatprep.mubr.bf16.mxu0 0
        %3429 = vmatmul.mubr.bf16.gmra.mrb[0].mxu0 %v3391
        %v3430 = vpop.f32.mrb[0].mxu0
        %v3431 = vadd.f32 0.0, %v3430
        %v3432 = vpop.f32.mrb[0].mxu0
        %v3433 = vpop.f32.mrb[0].mxu0
        %v3434 = vpop.f32.mrb[0].mxu0
        %3435 = vdwg.mxu0
        %v3437 = vsel %vm1941, %v3359, 0
        %v3440 = vsel %vm1941, %v3373, 0
        %3442 = vmatprep.subr.bf16.mxu0 0
        %3443 = vmatpush1.bf16.xpose.msra.mxu0 %v3440
        %3444 = vmatprep.subr.bf16.mxu0 0
        %3445 = vmatpush1.bf16.xpose.msra.mxu0 0
        %3446 = vmatprep.subr.bf16.mxu0 0
        %3447 = vmatpush1.bf16.xpose.msra.mxu0 0
        %3448 = vmatprep.subr.bf16.mxu0 0
        %3449 = vmatpush1.bf16.xpose.msra.mxu0 0
        %3450 = vmatprep.subr.bf16.mxu0 0
        %3451 = vmatpush1.bf16.xpose.msra.mxu0 0
        %3452 = vmatprep.subr.bf16.mxu0 0
        %3453 = vmatpush1.bf16.xpose.msra.mxu0 0
        %3454 = vmatprep.subr.bf16.mxu0 0
        %3455 = vmatpush1.bf16.xpose.msra.mxu0 0
        %3456 = vmatprep.subr.bf16.mxu0 0
        %3457 = vmatpush1.bf16.xpose.msra.mxu0 0
        %3458 = vmatprep.subr.bf16.mxu0 0
        %3459 = vmatpush1.bf16.xpose.msra.mxu0 0
        %3460 = vmatprep.subr.bf16.mxu0 0
        %3461 = vmatpush1.bf16.xpose.msra.mxu0 0
        %3462 = vmatprep.subr.bf16.mxu0 0
        %3463 = vmatpush1.bf16.xpose.msra.mxu0 0
        %3464 = vmatprep.subr.bf16.mxu0 0
        %3465 = vmatpush1.bf16.xpose.msra.mxu0 0
        %3466 = vmatprep.subr.bf16.mxu0 0
        %3467 = vmatpush1.bf16.xpose.msra.mxu0 0
        %3468 = vmatprep.subr.bf16.mxu0 0
        %3469 = vmatpush1.bf16.xpose.msra.mxu0 0
        %3470 = vmatprep.subr.bf16.mxu0 0
        %3471 = vmatpush1.bf16.xpose.msra.mxu0 0
        %3472 = vmatprep.subr.bf16.mxu0 0
        %3473 = vmatpush1.bf16.xpose.msra.mxu0 0
        %3474 = vmatprep.mubr.bf16.mxu0 0
        %3475 = vmatmul.mubr.bf16.gmra.mrb[0].mxu0 %v3437
        %v3476 = vpop.f32.mrb[0].mxu0
        %v3477 = vadd.f32 0.0, %v3476
        %v3478 = vpop.f32.mrb[0].mxu0
        %v3479 = vpop.f32.mrb[0].mxu0
        %v3480 = vpop.f32.mrb[0].mxu0
        %3481 = vdwg.mxu0
        %v3483 = vsel %vm1941, %v3360, 0
        %v3486 = vsel %vm1941, %v3374, 0
        %3488 = vmatprep.subr.bf16.mxu0 0
        %3489 = vmatpush1.bf16.xpose.msra.mxu0 %v3486
        %3490 = vmatprep.subr.bf16.mxu0 0
        %3491 = vmatpush1.bf16.xpose.msra.mxu0 0
        %3492 = vmatprep.subr.bf16.mxu0 0
        %3493 = vmatpush1.bf16.xpose.msra.mxu0 0
        %3494 = vmatprep.subr.bf16.mxu0 0
        %3495 = vmatpush1.bf16.xpose.msra.mxu0 0
        %3496 = vmatprep.subr.bf16.mxu0 0
        %3497 = vmatpush1.bf16.xpose.msra.mxu0 0
        %3498 = vmatprep.subr.bf16.mxu0 0
        %3499 = vmatpush1.bf16.xpose.msra.mxu0 0
        %3500 = vmatprep.subr.bf16.mxu0 0
        %3501 = vmatpush1.bf16.xpose.msra.mxu0 0
        %3502 = vmatprep.subr.bf16.mxu0 0
        %3503 = vmatpush1.bf16.xpose.msra.mxu0 0
        %3504 = vmatprep.subr.bf16.mxu0 0
        %3505 = vmatpush1.bf16.xpose.msra.mxu0 0
        %3506 = vmatprep.subr.bf16.mxu0 0
        %3507 = vmatpush1.bf16.xpose.msra.mxu0 0
        %3508 = vmatprep.subr.bf16.mxu0 0
        %3509 = vmatpush1.bf16.xpose.msra.mxu0 0
        %3510 = vmatprep.subr.bf16.mxu0 0
        %3511 = vmatpush1.bf16.xpose.msra.mxu0 0
        %3512 = vmatprep.subr.bf16.mxu0 0
        %3513 = vmatpush1.bf16.xpose.msra.mxu0 0
        %3514 = vmatprep.subr.bf16.mxu0 0
        %3515 = vmatpush1.bf16.xpose.msra.mxu0 0
        %3516 = vmatprep.subr.bf16.mxu0 0
        %3517 = vmatpush1.bf16.xpose.msra.mxu0 0
        %3518 = vmatprep.subr.bf16.mxu0 0
        %3519 = vmatpush1.bf16.xpose.msra.mxu0 0
        %3520 = vmatprep.mubr.bf16.mxu0 0
        %3521 = vmatmul.mubr.bf16.gmra.mrb[0].mxu0 %v3483
        %v3522 = vpop.f32.mrb[0].mxu0
        %v3523 = vadd.f32 0.0, %v3522
        %v3524 = vpop.f32.mrb[0].mxu0
        %v3525 = vpop.f32.mrb[0].mxu0
        %v3526 = vpop.f32.mrb[0].mxu0
        %3527 = vdwg.mxu0
        %v3529 = vsel %vm1941, %v3361, 0
        %v3532 = vsel %vm1941, %v3375, 0
        %3534 = vmatprep.subr.bf16.mxu0 0
        %3535 = vmatpush1.bf16.xpose.msra.mxu0 %v3532
        %3536 = vmatprep.subr.bf16.mxu0 0
        %3537 = vmatpush1.bf16.xpose.msra.mxu0 0
        %3538 = vmatprep.subr.bf16.mxu0 0
        %3539 = vmatpush1.bf16.xpose.msra.mxu0 0
        %3540 = vmatprep.subr.bf16.mxu0 0
        %3541 = vmatpush1.bf16.xpose.msra.mxu0 0
        %3542 = vmatprep.subr.bf16.mxu0 0
        %3543 = vmatpush1.bf16.xpose.msra.mxu0 0
        %3544 = vmatprep.subr.bf16.mxu0 0
        %3545 = vmatpush1.bf16.xpose.msra.mxu0 0
        %3546 = vmatprep.subr.bf16.mxu0 0
        %3547 = vmatpush1.bf16.xpose.msra.mxu0 0
        %3548 = vmatprep.subr.bf16.mxu0 0
        %3549 = vmatpush1.bf16.xpose.msra.mxu0 0
        %3550 = vmatprep.subr.bf16.mxu0 0
        %3551 = vmatpush1.bf16.xpose.msra.mxu0 0
        %3552 = vmatprep.subr.bf16.mxu0 0
        %3553 = vmatpush1.bf16.xpose.msra.mxu0 0
        %3554 = vmatprep.subr.bf16.mxu0 0
        %3555 = vmatpush1.bf16.xpose.msra.mxu0 0
        %3556 = vmatprep.subr.bf16.mxu0 0
        %3557 = vmatpush1.bf16.xpose.msra.mxu0 0
        %3558 = vmatprep.subr.bf16.mxu0 0
        %3559 = vmatpush1.bf16.xpose.msra.mxu0 0
        %3560 = vmatprep.subr.bf16.mxu0 0
        %3561 = vmatpush1.bf16.xpose.msra.mxu0 0
        %3562 = vmatprep.subr.bf16.mxu0 0
        %3563 = vmatpush1.bf16.xpose.msra.mxu0 0
        %3564 = vmatprep.subr.bf16.mxu0 0
        %3565 = vmatpush1.bf16.xpose.msra.mxu0 0
        %3566 = vmatprep.mubr.bf16.mxu0 0
        %3567 = vmatmul.mubr.bf16.gmra.mrb[0].mxu0 %v3529
        %v3568 = vpop.f32.mrb[0].mxu0
        %v3569 = vadd.f32 0.0, %v3568
        %v3570 = vpop.f32.mrb[0].mxu0
        %v3571 = vpop.f32.mrb[0].mxu0
        %v3572 = vpop.f32.mrb[0].mxu0
        %3573 = vdwg.mxu0
        %v3574 = vmul.f32 %v3431, 0.17677669
        %v3575 = vmul.f32 %v3477, 0.17677669
        %v3576 = vmul.f32 %v3523, 0.17677669
        %v3577 = vmul.f32 %v3569, 0.17677669
        %v3578 = vsel %vm2131, -1e+30, %v3574
        %v3579 = vsel %vm2131, -1e+30, %v3575
        %v3580 = vsel %vm2131, -1e+30, %v3576
        %v3581 = vsel %vm2131, -1e+30, %v3577
        %v3582 = vsel %vm2136, %v3578, -inf
        %3583 = vmax.xlane.f32.xlu0 %v3582
        %v3584 = vpop.xlane.xlu0 %3583
        %v3585 = vsel %vm2136, %v3579, -inf
        %3586 = vmax.xlane.f32.xlu0 %v3585
        %v3587 = vpop.xlane.xlu0 %3586
        %v3588 = vsel %vm2136, %v3580, -inf
        %3589 = vmax.xlane.f32.xlu0 %v3588
        %v3590 = vpop.xlane.xlu0 %3589
        %v3591 = vsel %vm2136, %v3581, -inf
        %3592 = vmax.xlane.f32.xlu0 %v3591
        %v3593 = vpop.xlane.xlu0 %3592
        %v3594 = vsub.f32 %v3578, %v3584
        %v3595 = vsub.f32 %v3579, %v3587
        %v3596 = vsub.f32 %v3580, %v3590
        %v3597 = vsub.f32 %v3581, %v3593
        %v3598 = vmul.f32 %v3594, 1.442695
        %v3599 = vpow.pop %v3598
        %v3600 = vmul.f32 %v3595, 1.442695
        %v3601 = vpow.pop %v3600
        %v3602 = vmul.f32 %v3596, 1.442695
        %v3603 = vpow.pop %v3602
        %v3604 = vmul.f32 %v3597, 1.442695
        %v3605 = vpow.pop %v3604
        %v3606 = vsel %vm2136, %v3599, 0.0
        %3607 = vadd.xlane.f32.xlu0 %v3606
        %v3608 = vpop.xlane.xlu0 %3607
        %v3609 = vsel %vm2136, %v3601, 0.0
        %3610 = vadd.xlane.f32.xlu0 %v3609
        %v3611 = vpop.xlane.xlu0 %3610
        %v3612 = vsel %vm2136, %v3603, 0.0
        %3613 = vadd.xlane.f32.xlu0 %v3612
        %v3614 = vpop.xlane.xlu0 %3613
        %v3615 = vsel %vm2136, %v3605, 0.0
        %3616 = vadd.xlane.f32.xlu0 %v3615
        %v3617 = vpop.xlane.xlu0 %3616
        %v3618 = vrcp.pop %v3608
        %v3619 = vrcp.pop %v3611
        %v3620 = vrcp.pop %v3614
        %v3621 = vrcp.pop %v3617
        %v3622 = vmul.f32 %v3599, %v3618
        %v3623 = vmul.f32 %v3601, %v3619
        %v3624 = vmul.f32 %v3603, %v3620
        %v3625 = vmul.f32 %v3605, %v3621
        %v3626 = vpack.c.bf16 %v3622, %v3622
        %v3627 = vpack.c.bf16 %v3623, %v3623
        %v3628 = vpack.c.bf16 %v3624, %v3624
        %v3629 = vpack.c.bf16 %v3625, %v3625
        %v3631 = vsel %vm2185, %v3626, 0
        %v3634 = vand.u32 %v3386, %v2190
        %3636 = vmatprep.subr.bf16.mxu0 0
        %3637 = vmatpush1.bf16.msra.mxu0 %v3634
        %3638 = vmatprep.subr.bf16.mxu0 0
        %3639 = vmatpush1.bf16.msra.mxu0 0
        %3640 = vmatprep.subr.bf16.mxu0 0
        %3641 = vmatpush1.bf16.msra.mxu0 0
        %3642 = vmatprep.subr.bf16.mxu0 0
        %3643 = vmatpush1.bf16.msra.mxu0 0
        %3644 = vmatprep.subr.bf16.mxu0 0
        %3645 = vmatpush1.bf16.msra.mxu0 0
        %3646 = vmatprep.subr.bf16.mxu0 0
        %3647 = vmatpush1.bf16.msra.mxu0 0
        %3648 = vmatprep.subr.bf16.mxu0 0
        %3649 = vmatpush1.bf16.msra.mxu0 0
        %3650 = vmatprep.subr.bf16.mxu0 0
        %3651 = vmatpush1.bf16.msra.mxu0 0
        %3652 = vmatprep.subr.bf16.mxu0 0
        %3653 = vmatpush1.bf16.msra.mxu0 0
        %3654 = vmatprep.subr.bf16.mxu0 0
        %3655 = vmatpush1.bf16.msra.mxu0 0
        %3656 = vmatprep.subr.bf16.mxu0 0
        %3657 = vmatpush1.bf16.msra.mxu0 0
        %3658 = vmatprep.subr.bf16.mxu0 0
        %3659 = vmatpush1.bf16.msra.mxu0 0
        %3660 = vmatprep.subr.bf16.mxu0 0
        %3661 = vmatpush1.bf16.msra.mxu0 0
        %3662 = vmatprep.subr.bf16.mxu0 0
        %3663 = vmatpush1.bf16.msra.mxu0 0
        %3664 = vmatprep.subr.bf16.mxu0 0
        %3665 = vmatpush1.bf16.msra.mxu0 0
        %3666 = vmatprep.subr.bf16.mxu0 0
        %3667 = vmatpush1.bf16.msra.mxu0 0
        %3668 = vmatprep.mubr.bf16.mxu0 0
        %3669 = vmatmul.mubr.bf16.gmra.mrb[0].mxu0 %v3631
        %v3670 = vpop.f32.mrb[0].mxu0
        %v3671 = vadd.f32 0.0, %v3670
        %v3672 = vpop.f32.mrb[0].mxu0
        %v3673 = vpop.f32.mrb[0].mxu0
        %v3674 = vpop.f32.mrb[0].mxu0
        %3675 = vdwg.mxu0
        %v3677 = vsel %vm2185, %v3627, 0
        %v3680 = vand.u32 %v3387, %v2190
        %3682 = vmatprep.subr.bf16.mxu0 0
        %3683 = vmatpush1.bf16.msra.mxu0 %v3680
        %3684 = vmatprep.subr.bf16.mxu0 0
        %3685 = vmatpush1.bf16.msra.mxu0 0
        %3686 = vmatprep.subr.bf16.mxu0 0
        %3687 = vmatpush1.bf16.msra.mxu0 0
        %3688 = vmatprep.subr.bf16.mxu0 0
        %3689 = vmatpush1.bf16.msra.mxu0 0
        %3690 = vmatprep.subr.bf16.mxu0 0
        %3691 = vmatpush1.bf16.msra.mxu0 0
        %3692 = vmatprep.subr.bf16.mxu0 0
        %3693 = vmatpush1.bf16.msra.mxu0 0
        %3694 = vmatprep.subr.bf16.mxu0 0
        %3695 = vmatpush1.bf16.msra.mxu0 0
        %3696 = vmatprep.subr.bf16.mxu0 0
        %3697 = vmatpush1.bf16.msra.mxu0 0
        %3698 = vmatprep.subr.bf16.mxu0 0
        %3699 = vmatpush1.bf16.msra.mxu0 0
        %3700 = vmatprep.subr.bf16.mxu0 0
        %3701 = vmatpush1.bf16.msra.mxu0 0
        %3702 = vmatprep.subr.bf16.mxu0 0
        %3703 = vmatpush1.bf16.msra.mxu0 0
        %3704 = vmatprep.subr.bf16.mxu0 0
        %3705 = vmatpush1.bf16.msra.mxu0 0
        %3706 = vmatprep.subr.bf16.mxu0 0
        %3707 = vmatpush1.bf16.msra.mxu0 0
        %3708 = vmatprep.subr.bf16.mxu0 0
        %3709 = vmatpush1.bf16.msra.mxu0 0
        %3710 = vmatprep.subr.bf16.mxu0 0
        %3711 = vmatpush1.bf16.msra.mxu0 0
        %3712 = vmatprep.subr.bf16.mxu0 0
        %3713 = vmatpush1.bf16.msra.mxu0 0
        %3714 = vmatprep.mubr.bf16.mxu0 0
        %3715 = vmatmul.mubr.bf16.gmra.mrb[0].mxu0 %v3677
        %v3716 = vpop.f32.mrb[0].mxu0
        %v3717 = vadd.f32 0.0, %v3716
        %v3718 = vpop.f32.mrb[0].mxu0
        %v3719 = vpop.f32.mrb[0].mxu0
        %v3720 = vpop.f32.mrb[0].mxu0
        %3721 = vdwg.mxu0
        %v3723 = vsel %vm2185, %v3628, 0
        %v3726 = vand.u32 %v3388, %v2190
        %3728 = vmatprep.subr.bf16.mxu0 0
        %3729 = vmatpush1.bf16.msra.mxu0 %v3726
        %3730 = vmatprep.subr.bf16.mxu0 0
        %3731 = vmatpush1.bf16.msra.mxu0 0
        %3732 = vmatprep.subr.bf16.mxu0 0
        %3733 = vmatpush1.bf16.msra.mxu0 0
        %3734 = vmatprep.subr.bf16.mxu0 0
        %3735 = vmatpush1.bf16.msra.mxu0 0
        %3736 = vmatprep.subr.bf16.mxu0 0
        %3737 = vmatpush1.bf16.msra.mxu0 0
        %3738 = vmatprep.subr.bf16.mxu0 0
        %3739 = vmatpush1.bf16.msra.mxu0 0
        %3740 = vmatprep.subr.bf16.mxu0 0
        %3741 = vmatpush1.bf16.msra.mxu0 0
        %3742 = vmatprep.subr.bf16.mxu0 0
        %3743 = vmatpush1.bf16.msra.mxu0 0
        %3744 = vmatprep.subr.bf16.mxu0 0
        %3745 = vmatpush1.bf16.msra.mxu0 0
        %3746 = vmatprep.subr.bf16.mxu0 0
        %3747 = vmatpush1.bf16.msra.mxu0 0
        %3748 = vmatprep.subr.bf16.mxu0 0
        %3749 = vmatpush1.bf16.msra.mxu0 0
        %3750 = vmatprep.subr.bf16.mxu0 0
        %3751 = vmatpush1.bf16.msra.mxu0 0
        %3752 = vmatprep.subr.bf16.mxu0 0
        %3753 = vmatpush1.bf16.msra.mxu0 0
        %3754 = vmatprep.subr.bf16.mxu0 0
        %3755 = vmatpush1.bf16.msra.mxu0 0
        %3756 = vmatprep.subr.bf16.mxu0 0
        %3757 = vmatpush1.bf16.msra.mxu0 0
        %3758 = vmatprep.subr.bf16.mxu0 0
        %3759 = vmatpush1.bf16.msra.mxu0 0
        %3760 = vmatprep.mubr.bf16.mxu0 0
        %3761 = vmatmul.mubr.bf16.gmra.mrb[0].mxu0 %v3723
        %v3762 = vpop.f32.mrb[0].mxu0
        %v3763 = vadd.f32 0.0, %v3762
        %v3764 = vpop.f32.mrb[0].mxu0
        %v3765 = vpop.f32.mrb[0].mxu0
        %v3766 = vpop.f32.mrb[0].mxu0
        %3767 = vdwg.mxu0
        %v3769 = vsel %vm2185, %v3629, 0
        %v3772 = vand.u32 %v3389, %v2190
        %3774 = vmatprep.subr.bf16.mxu0 0
        %3775 = vmatpush1.bf16.msra.mxu0 %v3772
        %3776 = vmatprep.subr.bf16.mxu0 0
        %3777 = vmatpush1.bf16.msra.mxu0 0
        %3778 = vmatprep.subr.bf16.mxu0 0
        %3779 = vmatpush1.bf16.msra.mxu0 0
        %3780 = vmatprep.subr.bf16.mxu0 0
        %3781 = vmatpush1.bf16.msra.mxu0 0
        %3782 = vmatprep.subr.bf16.mxu0 0
        %3783 = vmatpush1.bf16.msra.mxu0 0
        %3784 = vmatprep.subr.bf16.mxu0 0
        %3785 = vmatpush1.bf16.msra.mxu0 0
        %3786 = vmatprep.subr.bf16.mxu0 0
        %3787 = vmatpush1.bf16.msra.mxu0 0
        %3788 = vmatprep.subr.bf16.mxu0 0
        %3789 = vmatpush1.bf16.msra.mxu0 0
        %3790 = vmatprep.subr.bf16.mxu0 0
        %3791 = vmatpush1.bf16.msra.mxu0 0
        %3792 = vmatprep.subr.bf16.mxu0 0
        %3793 = vmatpush1.bf16.msra.mxu0 0
        %3794 = vmatprep.subr.bf16.mxu0 0
        %3795 = vmatpush1.bf16.msra.mxu0 0
        %3796 = vmatprep.subr.bf16.mxu0 0
        %3797 = vmatpush1.bf16.msra.mxu0 0
        %3798 = vmatprep.subr.bf16.mxu0 0
        %3799 = vmatpush1.bf16.msra.mxu0 0
        %3800 = vmatprep.subr.bf16.mxu0 0
        %3801 = vmatpush1.bf16.msra.mxu0 0
        %3802 = vmatprep.subr.bf16.mxu0 0
        %3803 = vmatpush1.bf16.msra.mxu0 0
        %3804 = vmatprep.subr.bf16.mxu0 0
        %3805 = vmatpush1.bf16.msra.mxu0 0
        %3806 = vmatprep.mubr.bf16.mxu0 0
        %3807 = vmatmul.mubr.bf16.gmra.mrb[0].mxu0 %v3769
        %v3808 = vpop.f32.mrb[0].mxu0
        %v3809 = vadd.f32 0.0, %v3808
        %v3810 = vpop.f32.mrb[0].mxu0
        %v3811 = vpop.f32.mrb[0].mxu0
        %v3812 = vpop.f32.mrb[0].mxu0
        %3813 = vdwg.mxu0
        %3815 = vrot.lane.b32.xlu0 %v3717, 32
        %v3816 = vpop.permute.xlu0 %3815
        %3819 = vrot.lane.b32.xlu0 %v3763, 64
        %v3820 = vpop.permute.xlu0 %3819
        %3823 = vrot.lane.b32.xlu0 %v3809, 96
        %v3824 = vpop.permute.xlu0 %3823
        %v3826 = vsel %vm1941, %v3671, %v3816
        %v3827 = vsel %vm2385, %v3826, %v3820
        %v3828 = vsel %vm2387, %v3827, %v3824
        %v3829 = vpack.c.bf16 %v3828, %v3828
        %v3831 = vlaneseq
        %v3832 = vshrl.u32 %v3831, 7
        %v3833 = vsub.s32 0, %v3832
        %v3834 = vrot.slane %v1519, %v3833
        %v3852 = vunpack.c.l.b16 %v1503
        %v3853 = vunpack.c.l.b16 %v1504
        %v3854 = vunpack.c.l.b16 %v1505
        %v3855 = vunpack.c.l.b16 %v1506
        %v3856 = vunpack.c.l.b16 %v1507
        %v3857 = vunpack.c.l.b16 %v1508
        %v3858 = vunpack.c.l.b16 %v1509
        %v3859 = vunpack.c.l.b16 %v1510
        %v3860 = vunpack.c.l.b16 %v1511
        %v3861 = vunpack.c.l.b16 %v1512
        %v3862 = vunpack.c.l.b16 %v1513
        %v3863 = vunpack.c.l.b16 %v1514
        %v3864 = vunpack.c.l.b16 %v1515
        %v3865 = vunpack.c.l.b16 %v1516
        %v3866 = vunpack.c.l.b16 %v1517
        %v3867 = vunpack.c.l.b16 %v1518
        %v3868 = vpack.c.b16 %v3853, %v3852
        %v3869 = vpack.c.b16 %v3855, %v3854
        %v3870 = vpack.c.b16 %v3857, %v3856
        %v3871 = vpack.c.b16 %v3859, %v3858
        %v3872 = vpack.c.b16 %v3861, %v3860
        %v3873 = vpack.c.b16 %v3863, %v3862
        %v3874 = vpack.c.b16 %v3865, %v3864
        %v3875 = vpack.c.b16 %v3867, %v3866
        %3884 = vmatprep.subr.bf16.mxu0 0
        %3885 = vmatpush1.bf16.msra.mxu0 %v3868
        %3886 = vmatprep.subr.bf16.mxu0 0
        %3887 = vmatpush1.bf16.msra.mxu0 %v3869
        %3888 = vmatprep.subr.bf16.mxu0 0
        %3889 = vmatpush1.bf16.msra.mxu0 %v3870
        %3890 = vmatprep.subr.bf16.mxu0 0
        %3891 = vmatpush1.bf16.msra.mxu0 %v3871
        %3892 = vmatprep.subr.bf16.mxu0 0
        %3893 = vmatpush1.bf16.msra.mxu0 %v3872
        %3894 = vmatprep.subr.bf16.mxu0 0
        %3895 = vmatpush1.bf16.msra.mxu0 %v3873
        %3896 = vmatprep.subr.bf16.mxu0 0
        %3897 = vmatpush1.bf16.msra.mxu0 %v3874
        %3898 = vmatprep.subr.bf16.mxu0 0
        %3899 = vmatpush1.bf16.msra.mxu0 %v3875
        %3900 = vmatprep.subr.bf16.mxu0 0
        %3901 = vmatpush1.bf16.msra.mxu0 0
        %3902 = vmatprep.subr.bf16.mxu0 0
        %3903 = vmatpush1.bf16.msra.mxu0 0
        %3904 = vmatprep.subr.bf16.mxu0 0
        %3905 = vmatpush1.bf16.msra.mxu0 0
        %3906 = vmatprep.subr.bf16.mxu0 0
        %3907 = vmatpush1.bf16.msra.mxu0 0
        %3908 = vmatprep.subr.bf16.mxu0 0
        %3909 = vmatpush1.bf16.msra.mxu0 0
        %3910 = vmatprep.subr.bf16.mxu0 0
        %3911 = vmatpush1.bf16.msra.mxu0 0
        %3912 = vmatprep.subr.bf16.mxu0 0
        %3913 = vmatpush1.bf16.msra.mxu0 0
        %3914 = vmatprep.subr.bf16.mxu0 0
        %3915 = vmatpush1.bf16.msra.mxu0 0
        %3916 = vmatprep.mubr.bf16.mxu0 0
        %3917 = vmatmul.mubr.bf16.gmra.mrb[0].mxu0 %v3829
        %v3918 = vpop.f32.mrb[0].mxu0
        %v3919 = vadd.f32 %v3834, %v3918
        %v3920 = vpop.f32.mrb[0].mxu0
        %v3921 = vpop.f32.mrb[0].mxu0
        %v3922 = vpop.f32.mrb[0].mxu0
        %3923 = vdwg.mxu0
        %v3924 = vadd.f32 %v3094, %v3919
        %v3925 = vsel %vm1644, %v3924, 0.0
        %3926 = vadd.xlane.f32.xlu0 %v3925
        %v3927 = vpop.xlane.xlu0 %3926
        %v3928 = vmul.f32 %v3927, %v1648
        %v3929 = vsub.f32 %v3924, %v3928
        %v3930 = vmul.f32 %v3929, %v3929
        %v3931 = vsel %vm1644, %v3930, 0.0
        %3932 = vadd.xlane.f32.xlu0 %v3931
        %v3933 = vpop.xlane.xlu0 %3932
        %v3934 = vmul.f32 %v3933, %v1648
        %v3935 = vadd.f32 %v3934, 1e-05
        %v3936 = vrsqrt.pop %v3935
        %v3937 = vmul.f32 %v3929, %v3936
        %v3939 = vlaneseq
        %v3940 = vshrl.u32 %v3939, 7
        %v3941 = vsub.s32 0, %v3940
        %v3942 = vrot.slane %v1520, %v3941
        %v3944 = vmul.f32 %v3937, %v3942
        %v3946 = vlaneseq
        %v3947 = vshrl.u32 %v3946, 7
        %v3948 = vsub.s32 0, %v3947
        %v3949 = vrot.slane %v1521, %v3948
        %v3951 = vadd.f32 %v3944, %v3949
        %v3952 = vpack.c.bf16 %v3951, %v3951
        %v3954 = vlaneseq
        %v3955 = vshrl.u32 %v3954, 7
        %v3956 = vsub.s32 0, %v3955
        %v3957 = vrot.slane %v1554, %v3956
        %v3958 = vlaneseq
        %v3959 = vshrl.u32 %v3958, 7
        %v3960 = vsub.s32 1, %v3959
        %v3961 = vrot.slane %v1554, %v3960
        %v3962 = vlaneseq
        %v3963 = vshrl.u32 %v3962, 7
        %v3964 = vsub.s32 2, %v3963
        %v3965 = vrot.slane %v1554, %v3964
        %v3966 = vlaneseq
        %v3967 = vshrl.u32 %v3966, 7
        %v3968 = vsub.s32 3, %v3967
        %v3969 = vrot.slane %v1554, %v3968
        %v4006 = vunpack.c.l.b16 %v1522
        %v4007 = vunpack.c.h.b16 %v1522
        %v4008 = vunpack.c.l.b16 %v1523
        %v4009 = vunpack.c.h.b16 %v1523
        %v4010 = vunpack.c.l.b16 %v1524
        %v4011 = vunpack.c.h.b16 %v1524
        %v4012 = vunpack.c.l.b16 %v1525
        %v4013 = vunpack.c.h.b16 %v1525
        %v4014 = vunpack.c.l.b16 %v1526
        %v4015 = vunpack.c.h.b16 %v1526
        %v4016 = vunpack.c.l.b16 %v1527
        %v4017 = vunpack.c.h.b16 %v1527
        %v4018 = vunpack.c.l.b16 %v1528
        %v4019 = vunpack.c.h.b16 %v1528
        %v4020 = vunpack.c.l.b16 %v1529
        %v4021 = vunpack.c.h.b16 %v1529
        %v4022 = vunpack.c.l.b16 %v1530
        %v4023 = vunpack.c.h.b16 %v1530
        %v4024 = vunpack.c.l.b16 %v1531
        %v4025 = vunpack.c.h.b16 %v1531
        %v4026 = vunpack.c.l.b16 %v1532
        %v4027 = vunpack.c.h.b16 %v1532
        %v4028 = vunpack.c.l.b16 %v1533
        %v4029 = vunpack.c.h.b16 %v1533
        %v4030 = vunpack.c.l.b16 %v1534
        %v4031 = vunpack.c.h.b16 %v1534
        %v4032 = vunpack.c.l.b16 %v1535
        %v4033 = vunpack.c.h.b16 %v1535
        %v4034 = vunpack.c.l.b16 %v1536
        %v4035 = vunpack.c.h.b16 %v1536
        %v4036 = vunpack.c.l.b16 %v1537
        %v4037 = vunpack.c.h.b16 %v1537
        %v4038 = vunpack.c.l.b16 %v1538
        %v4039 = vunpack.c.h.b16 %v1538
        %v4040 = vunpack.c.l.b16 %v1539
        %v4041 = vunpack.c.h.b16 %v1539
        %v4042 = vunpack.c.l.b16 %v1540
        %v4043 = vunpack.c.h.b16 %v1540
        %v4044 = vunpack.c.l.b16 %v1541
        %v4045 = vunpack.c.h.b16 %v1541
        %v4046 = vunpack.c.l.b16 %v1542
        %v4047 = vunpack.c.h.b16 %v1542
        %v4048 = vunpack.c.l.b16 %v1543
        %v4049 = vunpack.c.h.b16 %v1543
        %v4050 = vunpack.c.l.b16 %v1544
        %v4051 = vunpack.c.h.b16 %v1544
        %v4052 = vunpack.c.l.b16 %v1545
        %v4053 = vunpack.c.h.b16 %v1545
        %v4054 = vunpack.c.l.b16 %v1546
        %v4055 = vunpack.c.h.b16 %v1546
        %v4056 = vunpack.c.l.b16 %v1547
        %v4057 = vunpack.c.h.b16 %v1547
        %v4058 = vunpack.c.l.b16 %v1548
        %v4059 = vunpack.c.h.b16 %v1548
        %v4060 = vunpack.c.l.b16 %v1549
        %v4061 = vunpack.c.h.b16 %v1549
        %v4062 = vunpack.c.l.b16 %v1550
        %v4063 = vunpack.c.h.b16 %v1550
        %v4064 = vunpack.c.l.b16 %v1551
        %v4065 = vunpack.c.h.b16 %v1551
        %v4066 = vunpack.c.l.b16 %v1552
        %v4067 = vunpack.c.h.b16 %v1552
        %v4068 = vunpack.c.l.b16 %v1553
        %v4069 = vunpack.c.h.b16 %v1553
        %v4070 = vpack.c.b16 %v4010, %v4006
        %v4071 = vpack.c.b16 %v4011, %v4007
        %v4072 = vpack.c.b16 %v4012, %v4008
        %v4073 = vpack.c.b16 %v4013, %v4009
        %v4074 = vpack.c.b16 %v4018, %v4014
        %v4075 = vpack.c.b16 %v4019, %v4015
        %v4076 = vpack.c.b16 %v4020, %v4016
        %v4077 = vpack.c.b16 %v4021, %v4017
        %v4078 = vpack.c.b16 %v4026, %v4022
        %v4079 = vpack.c.b16 %v4027, %v4023
        %v4080 = vpack.c.b16 %v4028, %v4024
        %v4081 = vpack.c.b16 %v4029, %v4025
        %v4082 = vpack.c.b16 %v4034, %v4030
        %v4083 = vpack.c.b16 %v4035, %v4031
        %v4084 = vpack.c.b16 %v4036, %v4032
        %v4085 = vpack.c.b16 %v4037, %v4033
        %v4086 = vpack.c.b16 %v4042, %v4038
        %v4087 = vpack.c.b16 %v4043, %v4039
        %v4088 = vpack.c.b16 %v4044, %v4040
        %v4089 = vpack.c.b16 %v4045, %v4041
        %v4090 = vpack.c.b16 %v4050, %v4046
        %v4091 = vpack.c.b16 %v4051, %v4047
        %v4092 = vpack.c.b16 %v4052, %v4048
        %v4093 = vpack.c.b16 %v4053, %v4049
        %v4094 = vpack.c.b16 %v4058, %v4054
        %v4095 = vpack.c.b16 %v4059, %v4055
        %v4096 = vpack.c.b16 %v4060, %v4056
        %v4097 = vpack.c.b16 %v4061, %v4057
        %v4098 = vpack.c.b16 %v4066, %v4062
        %v4099 = vpack.c.b16 %v4067, %v4063
        %v4100 = vpack.c.b16 %v4068, %v4064
        %v4101 = vpack.c.b16 %v4069, %v4065
        %4134 = vmatprep.subr.bf16.mxu0 %v4071
        %4135 = vmatpush1.bf16.msra.mxu0 %v4070
        %4136 = vmatprep.subr.bf16.mxu0 %v4075
        %4137 = vmatpush1.bf16.msra.mxu0 %v4074
        %4138 = vmatprep.subr.bf16.mxu0 %v4079
        %4139 = vmatpush1.bf16.msra.mxu0 %v4078
        %4140 = vmatprep.subr.bf16.mxu0 %v4083
        %4141 = vmatpush1.bf16.msra.mxu0 %v4082
        %4142 = vmatprep.subr.bf16.mxu0 %v4087
        %4143 = vmatpush1.bf16.msra.mxu0 %v4086
        %4144 = vmatprep.subr.bf16.mxu0 %v4091
        %4145 = vmatpush1.bf16.msra.mxu0 %v4090
        %4146 = vmatprep.subr.bf16.mxu0 %v4095
        %4147 = vmatpush1.bf16.msra.mxu0 %v4094
        %4148 = vmatprep.subr.bf16.mxu0 %v4099
        %4149 = vmatpush1.bf16.msra.mxu0 %v4098
        %4150 = vmatprep.subr.bf16.mxu0 0
        %4151 = vmatpush1.bf16.msra.mxu0 0
        %4152 = vmatprep.subr.bf16.mxu0 0
        %4153 = vmatpush1.bf16.msra.mxu0 0
        %4154 = vmatprep.subr.bf16.mxu0 0
        %4155 = vmatpush1.bf16.msra.mxu0 0
        %4156 = vmatprep.subr.bf16.mxu0 0
        %4157 = vmatpush1.bf16.msra.mxu0 0
        %4158 = vmatprep.subr.bf16.mxu0 0
        %4159 = vmatpush1.bf16.msra.mxu0 0
        %4160 = vmatprep.subr.bf16.mxu0 0
        %4161 = vmatpush1.bf16.msra.mxu0 0
        %4162 = vmatprep.subr.bf16.mxu0 0
        %4163 = vmatpush1.bf16.msra.mxu0 0
        %4164 = vmatprep.subr.bf16.mxu0 0
        %4165 = vmatpush1.bf16.msra.mxu0 0
        %4166 = vmatprep.mubr.bf16.mxu0 0
        %4167 = vmatmul.mubr.bf16.gmra.mrb[0].mxu0 %v3952
        %v4168 = vpop.f32.mrb[0].mxu0
        %v4169 = vadd.f32 %v3957, %v4168
        %v4170 = vpop.f32.mrb[0].mxu0
        %v4171 = vadd.f32 %v3961, %v4170
        %v4172 = vpop.f32.mrb[0].mxu0
        %v4173 = vpop.f32.mrb[0].mxu0
        %4174 = vdwg.mxu0
        %4175 = vmatprep.subr.bf16.mxu0 %v4073
        %4176 = vmatpush1.bf16.msra.mxu0 %v4072
        %4177 = vmatprep.subr.bf16.mxu0 %v4077
        %4178 = vmatpush1.bf16.msra.mxu0 %v4076
        %4179 = vmatprep.subr.bf16.mxu0 %v4081
        %4180 = vmatpush1.bf16.msra.mxu0 %v4080
        %4181 = vmatprep.subr.bf16.mxu0 %v4085
        %4182 = vmatpush1.bf16.msra.mxu0 %v4084
        %4183 = vmatprep.subr.bf16.mxu0 %v4089
        %4184 = vmatpush1.bf16.msra.mxu0 %v4088
        %4185 = vmatprep.subr.bf16.mxu0 %v4093
        %4186 = vmatpush1.bf16.msra.mxu0 %v4092
        %4187 = vmatprep.subr.bf16.mxu0 %v4097
        %4188 = vmatpush1.bf16.msra.mxu0 %v4096
        %4189 = vmatprep.subr.bf16.mxu0 %v4101
        %4190 = vmatpush1.bf16.msra.mxu0 %v4100
        %4191 = vmatprep.subr.bf16.mxu0 0
        %4192 = vmatpush1.bf16.msra.mxu0 0
        %4193 = vmatprep.subr.bf16.mxu0 0
        %4194 = vmatpush1.bf16.msra.mxu0 0
        %4195 = vmatprep.subr.bf16.mxu0 0
        %4196 = vmatpush1.bf16.msra.mxu0 0
        %4197 = vmatprep.subr.bf16.mxu0 0
        %4198 = vmatpush1.bf16.msra.mxu0 0
        %4199 = vmatprep.subr.bf16.mxu0 0
        %4200 = vmatpush1.bf16.msra.mxu0 0
        %4201 = vmatprep.subr.bf16.mxu0 0
        %4202 = vmatpush1.bf16.msra.mxu0 0
        %4203 = vmatprep.subr.bf16.mxu0 0
        %4204 = vmatpush1.bf16.msra.mxu0 0
        %4205 = vmatprep.subr.bf16.mxu0 0
        %4206 = vmatpush1.bf16.msra.mxu0 0
        %4207 = vmatprep.mubr.bf16.mxu0 0
        %4208 = vmatmul.mubr.bf16.gmra.mrb[0].mxu0 %v3952
        %v4209 = vpop.f32.mrb[0].mxu0
        %v4210 = vadd.f32 %v3965, %v4209
        %v4211 = vpop.f32.mrb[0].mxu0
        %v4212 = vadd.f32 %v3969, %v4211
        %v4213 = vpop.f32.mrb[0].mxu0
        %v4214 = vpop.f32.mrb[0].mxu0
        %4215 = vdwg.mxu0
        %v4216 = vmul.f32 %v4169, 0.5
        %v4217 = vmul.f32 %v4171, 0.5
        %v4218 = vmul.f32 %v4210, 0.5
        %v4219 = vmul.f32 %v4212, 0.5
        %v4220 = vmul.f32 %v4169, 0.044715
        %v4221 = vmul.f32 %v4171, 0.044715
        %v4222 = vmul.f32 %v4210, 0.044715
        %v4223 = vmul.f32 %v4212, 0.044715
        %v4224 = vmul.f32 %v4220, %v4169
        %v4225 = vmul.f32 %v4221, %v4171
        %v4226 = vmul.f32 %v4222, %v4210
        %v4227 = vmul.f32 %v4223, %v4212
        %v4228 = vmul.f32 %v4224, %v4169
        %v4229 = vmul.f32 %v4225, %v4171
        %v4230 = vmul.f32 %v4226, %v4210
        %v4231 = vmul.f32 %v4227, %v4212
        %v4232 = vadd.f32 %v4169, %v4228
        %v4233 = vadd.f32 %v4171, %v4229
        %v4234 = vadd.f32 %v4210, %v4230
        %v4235 = vadd.f32 %v4212, %v4231
        %v4236 = vmul.f32 %v4232, 0.7978846
        %v4237 = vmul.f32 %v4233, 0.7978846
        %v4238 = vmul.f32 %v4234, 0.7978846
        %v4239 = vmul.f32 %v4235, 0.7978846
        %v4240 = vtanh.pop %v4236
        %v4241 = vtanh.pop %v4237
        %v4242 = vtanh.pop %v4238
        %v4243 = vtanh.pop %v4239
        %v4244 = vadd.f32 %v4240, 1.0
        %v4245 = vadd.f32 %v4241, 1.0
        %v4246 = vadd.f32 %v4242, 1.0
        %v4247 = vadd.f32 %v4243, 1.0
        %v4248 = vmul.f32 %v4216, %v4244
        %v4249 = vmul.f32 %v4217, %v4245
        %v4250 = vmul.f32 %v4218, %v4246
        %v4251 = vmul.f32 %v4219, %v4247
        %v4252 = vpack.c.bf16 %v4248, %v4248
        %v4253 = vpack.c.bf16 %v4249, %v4249
        %v4254 = vpack.c.bf16 %v4250, %v4250
        %v4255 = vpack.c.bf16 %v4251, %v4251
        %v4257 = vlaneseq
        %v4258 = vshrl.u32 %v4257, 7
        %v4259 = vsub.s32 0, %v4258
        %v4260 = vrot.slane %v1619, %v4259
        %v4326 = vunpack.c.l.b16 %v1555
        %v4327 = vunpack.c.l.b16 %v1556
        %v4328 = vunpack.c.l.b16 %v1557
        %v4329 = vunpack.c.l.b16 %v1558
        %v4330 = vunpack.c.l.b16 %v1559
        %v4331 = vunpack.c.l.b16 %v1560
        %v4332 = vunpack.c.l.b16 %v1561
        %v4333 = vunpack.c.l.b16 %v1562
        %v4334 = vunpack.c.l.b16 %v1563
        %v4335 = vunpack.c.l.b16 %v1564
        %v4336 = vunpack.c.l.b16 %v1565
        %v4337 = vunpack.c.l.b16 %v1566
        %v4338 = vunpack.c.l.b16 %v1567
        %v4339 = vunpack.c.l.b16 %v1568
        %v4340 = vunpack.c.l.b16 %v1569
        %v4341 = vunpack.c.l.b16 %v1570
        %v4342 = vunpack.c.l.b16 %v1571
        %v4343 = vunpack.c.l.b16 %v1572
        %v4344 = vunpack.c.l.b16 %v1573
        %v4345 = vunpack.c.l.b16 %v1574
        %v4346 = vunpack.c.l.b16 %v1575
        %v4347 = vunpack.c.l.b16 %v1576
        %v4348 = vunpack.c.l.b16 %v1577
        %v4349 = vunpack.c.l.b16 %v1578
        %v4350 = vunpack.c.l.b16 %v1579
        %v4351 = vunpack.c.l.b16 %v1580
        %v4352 = vunpack.c.l.b16 %v1581
        %v4353 = vunpack.c.l.b16 %v1582
        %v4354 = vunpack.c.l.b16 %v1583
        %v4355 = vunpack.c.l.b16 %v1584
        %v4356 = vunpack.c.l.b16 %v1585
        %v4357 = vunpack.c.l.b16 %v1586
        %v4358 = vunpack.c.l.b16 %v1587
        %v4359 = vunpack.c.l.b16 %v1588
        %v4360 = vunpack.c.l.b16 %v1589
        %v4361 = vunpack.c.l.b16 %v1590
        %v4362 = vunpack.c.l.b16 %v1591
        %v4363 = vunpack.c.l.b16 %v1592
        %v4364 = vunpack.c.l.b16 %v1593
        %v4365 = vunpack.c.l.b16 %v1594
        %v4366 = vunpack.c.l.b16 %v1595
        %v4367 = vunpack.c.l.b16 %v1596
        %v4368 = vunpack.c.l.b16 %v1597
        %v4369 = vunpack.c.l.b16 %v1598
        %v4370 = vunpack.c.l.b16 %v1599
        %v4371 = vunpack.c.l.b16 %v1600
        %v4372 = vunpack.c.l.b16 %v1601
        %v4373 = vunpack.c.l.b16 %v1602
        %v4374 = vunpack.c.l.b16 %v1603
        %v4375 = vunpack.c.l.b16 %v1604
        %v4376 = vunpack.c.l.b16 %v1605
        %v4377 = vunpack.c.l.b16 %v1606
        %v4378 = vunpack.c.l.b16 %v1607
        %v4379 = vunpack.c.l.b16 %v1608
        %v4380 = vunpack.c.l.b16 %v1609
        %v4381 = vunpack.c.l.b16 %v1610
        %v4382 = vunpack.c.l.b16 %v1611
        %v4383 = vunpack.c.l.b16 %v1612
        %v4384 = vunpack.c.l.b16 %v1613
        %v4385 = vunpack.c.l.b16 %v1614
        %v4386 = vunpack.c.l.b16 %v1615
        %v4387 = vunpack.c.l.b16 %v1616
        %v4388 = vunpack.c.l.b16 %v1617
        %v4389 = vunpack.c.l.b16 %v1618
        %v4390 = vpack.c.b16 %v4327, %v4326
        %v4391 = vpack.c.b16 %v4329, %v4328
        %v4392 = vpack.c.b16 %v4331, %v4330
        %v4393 = vpack.c.b16 %v4333, %v4332
        %v4394 = vpack.c.b16 %v4335, %v4334
        %v4395 = vpack.c.b16 %v4337, %v4336
        %v4396 = vpack.c.b16 %v4339, %v4338
        %v4397 = vpack.c.b16 %v4341, %v4340
        %v4398 = vpack.c.b16 %v4343, %v4342
        %v4399 = vpack.c.b16 %v4345, %v4344
        %v4400 = vpack.c.b16 %v4347, %v4346
        %v4401 = vpack.c.b16 %v4349, %v4348
        %v4402 = vpack.c.b16 %v4351, %v4350
        %v4403 = vpack.c.b16 %v4353, %v4352
        %v4404 = vpack.c.b16 %v4355, %v4354
        %v4405 = vpack.c.b16 %v4357, %v4356
        %v4406 = vpack.c.b16 %v4359, %v4358
        %v4407 = vpack.c.b16 %v4361, %v4360
        %v4408 = vpack.c.b16 %v4363, %v4362
        %v4409 = vpack.c.b16 %v4365, %v4364
        %v4410 = vpack.c.b16 %v4367, %v4366
        %v4411 = vpack.c.b16 %v4369, %v4368
        %v4412 = vpack.c.b16 %v4371, %v4370
        %v4413 = vpack.c.b16 %v4373, %v4372
        %v4414 = vpack.c.b16 %v4375, %v4374
        %v4415 = vpack.c.b16 %v4377, %v4376
        %v4416 = vpack.c.b16 %v4379, %v4378
        %v4417 = vpack.c.b16 %v4381, %v4380
        %v4418 = vpack.c.b16 %v4383, %v4382
        %v4419 = vpack.c.b16 %v4385, %v4384
        %v4420 = vpack.c.b16 %v4387, %v4386
        %v4421 = vpack.c.b16 %v4389, %v4388
        %4454 = vmatprep.subr.bf16.mxu0 0
        %4455 = vmatpush1.bf16.msra.mxu0 %v4390
        %4456 = vmatprep.subr.bf16.mxu0 0
        %4457 = vmatpush1.bf16.msra.mxu0 %v4391
        %4458 = vmatprep.subr.bf16.mxu0 0
        %4459 = vmatpush1.bf16.msra.mxu0 %v4392
        %4460 = vmatprep.subr.bf16.mxu0 0
        %4461 = vmatpush1.bf16.msra.mxu0 %v4393
        %4462 = vmatprep.subr.bf16.mxu0 0
        %4463 = vmatpush1.bf16.msra.mxu0 %v4394
        %4464 = vmatprep.subr.bf16.mxu0 0
        %4465 = vmatpush1.bf16.msra.mxu0 %v4395
        %4466 = vmatprep.subr.bf16.mxu0 0
        %4467 = vmatpush1.bf16.msra.mxu0 %v4396
        %4468 = vmatprep.subr.bf16.mxu0 0
        %4469 = vmatpush1.bf16.msra.mxu0 %v4397
        %4470 = vmatprep.subr.bf16.mxu0 0
        %4471 = vmatpush1.bf16.msra.mxu0 %v4398
        %4472 = vmatprep.subr.bf16.mxu0 0
        %4473 = vmatpush1.bf16.msra.mxu0 %v4399
        %4474 = vmatprep.subr.bf16.mxu0 0
        %4475 = vmatpush1.bf16.msra.mxu0 %v4400
        %4476 = vmatprep.subr.bf16.mxu0 0
        %4477 = vmatpush1.bf16.msra.mxu0 %v4401
        %4478 = vmatprep.subr.bf16.mxu0 0
        %4479 = vmatpush1.bf16.msra.mxu0 %v4402
        %4480 = vmatprep.subr.bf16.mxu0 0
        %4481 = vmatpush1.bf16.msra.mxu0 %v4403
        %4482 = vmatprep.subr.bf16.mxu0 0
        %4483 = vmatpush1.bf16.msra.mxu0 %v4404
        %4484 = vmatprep.subr.bf16.mxu0 0
        %4485 = vmatpush1.bf16.msra.mxu0 %v4405
        %4486 = vmatprep.mubr.bf16.mxu0 %v4253
        %4487 = vmatmul.mubr.bf16.gmra.mrb[0].mxu0 %v4252
        %v4488 = vpop.f32.mrb[0].mxu0
        %v4489 = vadd.f32 %v4260, %v4488
        %v4490 = vpop.f32.mrb[0].mxu0
        %v4491 = vpop.f32.mrb[0].mxu0
        %v4492 = vpop.f32.mrb[0].mxu0
        %4493 = vdwg.mxu0
        %4494 = vmatprep.subr.bf16.mxu0 0
        %4495 = vmatpush1.bf16.msra.mxu0 %v4406
        %4496 = vmatprep.subr.bf16.mxu0 0
        %4497 = vmatpush1.bf16.msra.mxu0 %v4407
        %4498 = vmatprep.subr.bf16.mxu0 0
        %4499 = vmatpush1.bf16.msra.mxu0 %v4408
        %4500 = vmatprep.subr.bf16.mxu0 0
        %4501 = vmatpush1.bf16.msra.mxu0 %v4409
        %4502 = vmatprep.subr.bf16.mxu0 0
        %4503 = vmatpush1.bf16.msra.mxu0 %v4410
        %4504 = vmatprep.subr.bf16.mxu0 0
        %4505 = vmatpush1.bf16.msra.mxu0 %v4411
        %4506 = vmatprep.subr.bf16.mxu0 0
        %4507 = vmatpush1.bf16.msra.mxu0 %v4412
        %4508 = vmatprep.subr.bf16.mxu0 0
        %4509 = vmatpush1.bf16.msra.mxu0 %v4413
        %4510 = vmatprep.subr.bf16.mxu0 0
        %4511 = vmatpush1.bf16.msra.mxu0 %v4414
        %4512 = vmatprep.subr.bf16.mxu0 0
        %4513 = vmatpush1.bf16.msra.mxu0 %v4415
        %4514 = vmatprep.subr.bf16.mxu0 0
        %4515 = vmatpush1.bf16.msra.mxu0 %v4416
        %4516 = vmatprep.subr.bf16.mxu0 0
        %4517 = vmatpush1.bf16.msra.mxu0 %v4417
        %4518 = vmatprep.subr.bf16.mxu0 0
        %4519 = vmatpush1.bf16.msra.mxu0 %v4418
        %4520 = vmatprep.subr.bf16.mxu0 0
        %4521 = vmatpush1.bf16.msra.mxu0 %v4419
        %4522 = vmatprep.subr.bf16.mxu0 0
        %4523 = vmatpush1.bf16.msra.mxu0 %v4420
        %4524 = vmatprep.subr.bf16.mxu0 0
        %4525 = vmatpush1.bf16.msra.mxu0 %v4421
        %4526 = vmatprep.mubr.bf16.mxu0 %v4255
        %4527 = vmatmul.mubr.bf16.gmra.mrb[0].mxu0 %v4254
        %v4528 = vpop.f32.mrb[0].mxu0
        %v4529 = vadd.f32 %v4489, %v4528
        %v4530 = vpop.f32.mrb[0].mxu0
        %v4531 = vpop.f32.mrb[0].mxu0
        %v4532 = vpop.f32.mrb[0].mxu0
        %4533 = vdwg.mxu0
        %v4534 = vadd.f32 %v3924, %v4529
        %v4535 = vsel %vm1644, %v4534, 0.0
        %4536 = vadd.xlane.f32.xlu0 %v4535
        %v4537 = vpop.xlane.xlu0 %4536
        %v4538 = vmul.f32 %v4537, %v1648
        %v4539 = vsub.f32 %v4534, %v4538
        %v4540 = vmul.f32 %v4539, %v4539
        %v4541 = vsel %vm1644, %v4540, 0.0
        %4542 = vadd.xlane.f32.xlu0 %v4541
        %v4543 = vpop.xlane.xlu0 %4542
        %v4544 = vmul.f32 %v4543, %v1648
        %v4545 = vadd.f32 %v4544, 1e-05
        %v4546 = vrsqrt.pop %v4545
        %v4547 = vmul.f32 %v4539, %v4546
        %v4549 = vlaneseq
        %v4550 = vshrl.u32 %v4549, 7
        %v4551 = vsub.s32 0, %v4550
        %v4552 = vrot.slane %v1620, %v4551
        %v4554 = vmul.f32 %v4547, %v4552
        %v4556 = vlaneseq
        %v4557 = vshrl.u32 %v4556, 7
        %v4558 = vsub.s32 0, %v4557
        %v4559 = vrot.slane %v1621, %v4558
        %v4561 = vadd.f32 %v4554, %v4559
        %v4562 = vpack.c.bf16 %v4561, %v4561
        %v4564 = vlaneseq
        %v4565 = vshrl.u32 %v4564, 7
        %v4566 = vsub.s32 0, %v4565
        %v4567 = vrot.slane %v1638, %v4566
        %v4585 = vunpack.c.l.b16 %v1622
        %v4586 = vunpack.c.l.b16 %v1623
        %v4587 = vunpack.c.l.b16 %v1624
        %v4588 = vunpack.c.l.b16 %v1625
        %v4589 = vunpack.c.l.b16 %v1626
        %v4590 = vunpack.c.l.b16 %v1627
        %v4591 = vunpack.c.l.b16 %v1628
        %v4592 = vunpack.c.l.b16 %v1629
        %v4593 = vunpack.c.l.b16 %v1630
        %v4594 = vunpack.c.l.b16 %v1631
        %v4595 = vunpack.c.l.b16 %v1632
        %v4596 = vunpack.c.l.b16 %v1633
        %v4597 = vunpack.c.l.b16 %v1634
        %v4598 = vunpack.c.l.b16 %v1635
        %v4599 = vunpack.c.l.b16 %v1636
        %v4600 = vunpack.c.l.b16 %v1637
        %v4601 = vpack.c.b16 %v4586, %v4585
        %v4602 = vpack.c.b16 %v4588, %v4587
        %v4603 = vpack.c.b16 %v4590, %v4589
        %v4604 = vpack.c.b16 %v4592, %v4591
        %v4605 = vpack.c.b16 %v4594, %v4593
        %v4606 = vpack.c.b16 %v4596, %v4595
        %v4607 = vpack.c.b16 %v4598, %v4597
        %v4608 = vpack.c.b16 %v4600, %v4599
        %4617 = vmatprep.subr.bf16.mxu0 0
        %4618 = vmatpush1.bf16.msra.mxu0 %v4601
        %4619 = vmatprep.subr.bf16.mxu0 0
        %4620 = vmatpush1.bf16.msra.mxu0 %v4602
        %4621 = vmatprep.subr.bf16.mxu0 0
        %4622 = vmatpush1.bf16.msra.mxu0 %v4603
        %4623 = vmatprep.subr.bf16.mxu0 0
        %4624 = vmatpush1.bf16.msra.mxu0 %v4604
        %4625 = vmatprep.subr.bf16.mxu0 0
        %4626 = vmatpush1.bf16.msra.mxu0 %v4605
        %4627 = vmatprep.subr.bf16.mxu0 0
        %4628 = vmatpush1.bf16.msra.mxu0 %v4606
        %4629 = vmatprep.subr.bf16.mxu0 0
        %4630 = vmatpush1.bf16.msra.mxu0 %v4607
        %4631 = vmatprep.subr.bf16.mxu0 0
        %4632 = vmatpush1.bf16.msra.mxu0 %v4608
        %4633 = vmatprep.subr.bf16.mxu0 0
        %4634 = vmatpush1.bf16.msra.mxu0 0
        %4635 = vmatprep.subr.bf16.mxu0 0
        %4636 = vmatpush1.bf16.msra.mxu0 0
        %4637 = vmatprep.subr.bf16.mxu0 0
        %4638 = vmatpush1.bf16.msra.mxu0 0
        %4639 = vmatprep.subr.bf16.mxu0 0
        %4640 = vmatpush1.bf16.msra.mxu0 0
        %4641 = vmatprep.subr.bf16.mxu0 0
        %4642 = vmatpush1.bf16.msra.mxu0 0
        %4643 = vmatprep.subr.bf16.mxu0 0
        %4644 = vmatpush1.bf16.msra.mxu0 0
        %4645 = vmatprep.subr.bf16.mxu0 0
        %4646 = vmatpush1.bf16.msra.mxu0 0
        %4647 = vmatprep.subr.bf16.mxu0 0
        %4648 = vmatpush1.bf16.msra.mxu0 0
        %4649 = vmatprep.mubr.bf16.mxu0 0
        %4650 = vmatmul.mubr.bf16.gmra.mrb[0].mxu0 %v4562
        %v4651 = vpop.f32.mrb[0].mxu0
        %v4652 = vadd.f32 %v4567, %v4651
        %v4653 = vpop.f32.mrb[0].mxu0
        %v4654 = vpop.f32.mrb[0].mxu0
        %v4655 = vpop.f32.mrb[0].mxu0
        %4656 = vdwg.mxu0
        %4657 = vst [vmem:[%s1272] sm:$0x1f] %v4652
        %p4658 = scmp.lt.s32.totalorder %s94, 1
        %s4659 = scalar_select %p4658, %s94, 1
        %s4660 = smul.addr %s4659, 8
        %s4661 = scalar_lea.vmem %s63, %s4660
        // Predicated region
        $region249: #{transformer_forward.1} parent=139 // pred_check
          %p4662 = pneg %p742
        $region250: #{transformer_forward.1} parent=139 // pred_check_branch
          %4664 = sbr.rel (%p4662) target = $region252
        $region251: #{transformer_forward.1} parent=139 // pred_region
          _
        $region252: #{transformer_forward.1} parent=139 // pred_fallthru
          _
      $region140: #{transformer_forward.1} parent=5 // pred_fallthru
        _
      %p4665 = scmp.le.s32.totalorder 2, %s89
      // Predicated region
      $region253: #{transformer_forward.1} parent=5 // pred_check
        %p4666 = pneg %p4665
      $region254: #{transformer_forward.1} parent=5 // pred_check_branch
        %4668 = sbr.rel (%p4666) target = $region256
      $region255: #{transformer_forward.1} parent=5 // pred_region
        %s4669 = ssub.s32 %s89, 2
        // Predicated region
        $region257: #{transformer_forward.1} parent=255 // pred_check
          %p4670 = pneg %p748
        $region258: #{transformer_forward.1} parent=255 // pred_check_branch
          %4672 = sbr.rel (%p4670) target = $region260
        $region259: #{transformer_forward.1} parent=255 // pred_region
          %p4673 = scmp.lt.s32.totalorder %s95, 1
          %s4674 = scalar_select %p4673, %s95, 1
          %s4675 = smul.addr %s4674, 8
          %s4676 = scalar_lea.vmem %s63, %s4675
        $region260: #{transformer_forward.1} parent=255 // pred_fallthru
          _
      $region256: #{transformer_forward.1} parent=5 // pred_fallthru
        _
    $region6: #{transformer_forward.1} parent=1 // loop_footer
      %s93 = sadd.s32 1, %s89
    $region7: #{transformer_forward.1} parent=1 // loop_footer_branch
      %88 = sbr.rel target = $region3
    $region8: #{transformer_forward.1} parent=1 // loop_exit
      _
    %4677 = vsyncpa [#allocation5], 1
    %s4678 = scalar_lea.sflag [#allocation5], 1
    %4679 = vsyncpa %s4678, 1
    %4680 = vsyncpa [#allocation7], 1
    %4681 = vsyncpa [#allocation10], 1
    %4682 = vsyncpa [#allocation13], 1
    %4683 = vsyncpa [#allocation16], 1
    %4684 = vsyncpa [#allocation19], 1
    %4685 = vsyncpa [#allocation22], 1
    %4686 = vsyncpa [#allocation25], 1
    %4687 = vsyncpa [#allocation28], 1
    %4688 = vsyncpa [#allocation31], 1
    %4689 = vsyncpa [#allocation34], 1
    %4690 = vsyncpa [#allocation37], 1
    %4691 = vsyncpa [#allocation40], 1
    %4692 = vsyncpa [#allocation43], 1

</llo_original>
